<compile_context>
chip_gen: v5e
topology: v5e:2x2
jax: 0.10.0
libtpu: 0.0.40
codegen_flags: <defaults>
</compile_context>

<pallas_src>
import functools

import jax
import jax.numpy as jnp
from jax.experimental import pallas as pl
from jax.experimental.pallas import tpu as pltpu


def _round_up(x, m):
    return (x + m - 1) // m * m


# ------------------------------ encoder kernel --------------------------------

def encoder_kernel(x_ref, wih_ref, whh_ref, b_ref, h_ref, c_ref):
    """One grid step == one source time step; h/c carried in the resident outputs."""
    t = pl.program_id(0)
    Bp, Hp = h_ref.shape

    @pl.when(t == 0)
    def _():
        h_ref[...] = jnp.zeros_like(h_ref)
        c_ref[...] = jnp.zeros_like(c_ref)

    x = x_ref[0]                                   # (Bp, Ep) bf16
    h = h_ref[...]
    c = c_ref[...]
    gates = (jnp.dot(x, wih_ref[...], preferred_element_type=jnp.float32)
             + jnp.dot(h.astype(jnp.bfloat16), whh_ref[...],
                       preferred_element_type=jnp.float32)
             + b_ref[...])
    i = jax.nn.sigmoid(gates[:, 0 * Hp:1 * Hp])
    f = jax.nn.sigmoid(gates[:, 1 * Hp:2 * Hp])
    g = jnp.tanh(gates[:, 2 * Hp:3 * Hp])
    o = jax.nn.sigmoid(gates[:, 3 * Hp:4 * Hp])
    c_new = f * c + i * g
    c_ref[...] = c_new
    h_ref[...] = o * jnp.tanh(c_new)


def run_encoder(src_emb, wih, whh, b):
    S, Bp, Ep = src_emb.shape
    Hp = whh.shape[0]
    return pl.pallas_call(
        encoder_kernel,
        out_shape=(jax.ShapeDtypeStruct((Bp, Hp), jnp.float32),
                   jax.ShapeDtypeStruct((Bp, Hp), jnp.float32)),
        grid=(S,),
        in_specs=[
            pl.BlockSpec((1, Bp, Ep), lambda t: (t, 0, 0)),      # x_t streamed
            pl.BlockSpec((Ep, 4 * Hp), lambda t: (0, 0)),        # Wih resident
            pl.BlockSpec((Hp, 4 * Hp), lambda t: (0, 0)),        # Whh resident
            pl.BlockSpec((1, 4 * Hp), lambda t: (0, 0)),         # bias resident
        ],
        out_specs=(pl.BlockSpec((Bp, Hp), lambda t: (0, 0)),     # h (accumulator)
                   pl.BlockSpec((Bp, Hp), lambda t: (0, 0))),    # c (accumulator)
        compiler_params=pltpu.CompilerParams(
            dimension_semantics=("arbitrary",),                  # recurrence
            vmem_limit_bytes=32 * 1024 * 1024),
    )(src_emb, wih, whh, b)


# ------------------------------ decoder kernel --------------------------------

def decoder_kernel(tf_ref, xtf_ref, h0_ref, c0_ref, emb_ref,
                   wih_ref, whh_ref, b_ref, wout_ref, bout_ref,
                   out_ref, *, n_vocab):
    """Whole autoregressive decode in one kernel; time loop fully unrolled."""
    Tm1, Bp, _ = xtf_ref.shape
    Hp = h0_ref.shape[1]
    Vp = out_ref.shape[2]

    # Loop invariants hoisted once (broadcast_in_dim is not CSE'd by JAX).
    bias = jnp.broadcast_to(b_ref[...], (Bp, 4 * Hp))
    bout = jnp.broadcast_to(bout_ref[...], (Bp, Vp))
    lane_i = jax.lax.broadcasted_iota(jnp.int32, (Bp, Vp), 1)
    valid = lane_i < n_vocab

    def step(s, carry):
        h, c, prev1h = carry                       # f32, f32, bf16 one-hot
        # Teacher forcing (scalar SMEM flag): teacher embeddings were gathered
        # on the host; otherwise embed the previous argmax one-hot on the MXU
        # (only executed on non-TF steps thanks to lax.cond).
        x_tf = xtf_ref[s]                          # (Bp, Ep) bf16
        x = jax.lax.cond(
            tf_ref[s] > 0,
            lambda: x_tf,
            lambda: jnp.dot(prev1h, emb_ref[...],
                            preferred_element_type=jnp.float32
                            ).astype(jnp.bfloat16))

        gates = (jnp.dot(x, wih_ref[...], preferred_element_type=jnp.float32)
                 + jnp.dot(h.astype(jnp.bfloat16), whh_ref[...],
                           preferred_element_type=jnp.float32)
                 + bias)
        i = jax.nn.sigmoid(gates[:, 0 * Hp:1 * Hp])
        f = jax.nn.sigmoid(gates[:, 1 * Hp:2 * Hp])
        g = jnp.tanh(gates[:, 2 * Hp:3 * Hp])
        o = jax.nn.sigmoid(gates[:, 3 * Hp:4 * Hp])
        c_new = f * c + i * g
        h_new = o * jnp.tanh(c_new)

        logits = jnp.dot(h_new.astype(jnp.bfloat16), wout_ref[...],
                         preferred_element_type=jnp.float32) + bout
        out_ref[s] = logits                        # (Bp, Vp) lane-dense store

        # int32 argmax, first max wins, padded vocab lanes masked out.
        masked = jnp.where(valid, logits, -jnp.inf)
        row_max = jnp.max(masked, axis=1, keepdims=True)
        idx = jnp.min(jnp.where(masked == row_max, lane_i, Vp),
                      axis=1, keepdims=True)
        new1h = (lane_i == idx).astype(jnp.bfloat16)
        return h_new, c_new, new1h

    init = (h0_ref[...], c0_ref[...], jnp.zeros((Bp, Vp), jnp.bfloat16))
    jax.lax.fori_loop(0, Tm1, step, init, unroll=True)


def run_decoder(tf_flags, x_tf, h0, c0, emb, wih, whh, b, wout, bout, *, n_vocab):
    Tm1, Bp, _ = x_tf.shape
    Vp = wout.shape[1]
    kernel = functools.partial(decoder_kernel, n_vocab=n_vocab)
    vmem = pl.BlockSpec(memory_space=pltpu.MemorySpace.VMEM)
    return pl.pallas_call(
        kernel,
        out_shape=jax.ShapeDtypeStruct((Tm1, Bp, Vp), jnp.float32),
        in_specs=[
            pl.BlockSpec(memory_space=pltpu.MemorySpace.SMEM),   # tf flags (scalars)
            vmem, vmem, vmem, vmem, vmem, vmem, vmem, vmem, vmem,
        ],
        out_specs=pl.BlockSpec(memory_space=pltpu.MemorySpace.VMEM),
        compiler_params=pltpu.CompilerParams(vmem_limit_bytes=32 * 1024 * 1024),
    )(tf_flags, x_tf, h0, c0, emb, wih, whh, b, wout, bout)


# --------------------------------- params ------------------------------------

def init_params(key, src_vocab, trg_vocab, emb_dim, hidden_dim):
    ks = jax.random.split(key, 10)
    s = 0.1
    return {
        "enc_emb": s * jax.random.normal(ks[0], (src_vocab, emb_dim), jnp.float32),
        "enc_wih": s * jax.random.normal(ks[1], (emb_dim, 4 * hidden_dim), jnp.float32),
        "enc_whh": s * jax.random.normal(ks[2], (hidden_dim, 4 * hidden_dim), jnp.float32),
        "enc_b":   s * jax.random.normal(ks[3], (1, 4 * hidden_dim), jnp.float32),
        "dec_emb": s * jax.random.normal(ks[4], (trg_vocab, emb_dim), jnp.float32),
        "dec_wih": s * jax.random.normal(ks[5], (emb_dim, 4 * hidden_dim), jnp.float32),
        "dec_whh": s * jax.random.normal(ks[6], (hidden_dim, 4 * hidden_dim), jnp.float32),
        "dec_b":   s * jax.random.normal(ks[7], (1, 4 * hidden_dim), jnp.float32),
        "dec_wout": s * jax.random.normal(ks[8], (hidden_dim, trg_vocab), jnp.float32),
        "dec_bout": s * jax.random.normal(ks[9], (1, trg_vocab), jnp.float32),
    }


def _pad_gates_w(w, in_dim_p, H, Hp):
    """(in, 4H) -> (in_p, 4Hp), padding each gate block independently."""
    in_dim = w.shape[0]
    w4 = w.reshape(in_dim, 4, H)
    w4 = jnp.pad(w4, ((0, in_dim_p - in_dim), (0, 0), (0, Hp - H)))
    return w4.reshape(in_dim_p, 4 * Hp)


def _pad_gates_b(b, H, Hp):
    b4 = b.reshape(1, 4, H)
    b4 = jnp.pad(b4, ((0, 0), (0, 0), (0, Hp - H)))
    return b4.reshape(1, 4 * Hp)


def prepare_params(params):
    """Pad once to TPU-friendly shapes; bf16 MXU operands, f32 biases."""
    E = params["enc_wih"].shape[0]
    H = params["enc_whh"].shape[0]
    V = params["dec_wout"].shape[1]
    Ep, Hp, Vp = _round_up(E, 128), _round_up(H, 128), _round_up(V, 128)

    arrays = {
        "enc_emb": jnp.pad(params["enc_emb"], ((0, 0), (0, Ep - E))).astype(jnp.bfloat16),
        "enc_wih": _pad_gates_w(params["enc_wih"], Ep, H, Hp).astype(jnp.bfloat16),
        "enc_whh": _pad_gates_w(params["enc_whh"], Hp, H, Hp).astype(jnp.bfloat16),
        "enc_b":   _pad_gates_b(params["enc_b"], H, Hp),
        "dec_emb": jnp.pad(params["dec_emb"],
                           ((0, Vp - params["dec_emb"].shape[0]),
                            (0, Ep - E))).astype(jnp.bfloat16),
        "dec_wih": _pad_gates_w(params["dec_wih"], Ep, H, Hp).astype(jnp.bfloat16),
        "dec_whh": _pad_gates_w(params["dec_whh"], Hp, H, Hp).astype(jnp.bfloat16),
        "dec_b":   _pad_gates_b(params["dec_b"], H, Hp),
        "dec_wout": jnp.pad(params["dec_wout"],
                            ((0, Hp - H), (0, Vp - V))).astype(jnp.bfloat16),
        "dec_bout": jnp.pad(params["dec_bout"], ((0, 0), (0, Vp - V))),
    }
    dims = {"E": E, "H": H, "V": V, "Ep": Ep, "Hp": Hp, "Vp": Vp}
    return arrays, dims


# ------------------------------ Seq2Seq forward -------------------------------

def make_forward(arrays, dims, teacher_force_ratio=0.5):
    V = dims["V"]

    @jax.jit
    def forward(src, trg, key):
        """src/trg: (seq_len, batch) int32. Returns (trg_len, batch, V) f32."""
        T, B = trg.shape
        Bp = _round_up(B, 8)

        # Encoder: host embedding gather + streamed per-step LSTM kernel.
        src_emb = arrays["enc_emb"][src]                        # (S, B, Ep) bf16
        src_emb = jnp.pad(src_emb, ((0, 0), (0, Bp - B), (0, 0)))
        h0, c0 = run_encoder(src_emb, arrays["enc_wih"], arrays["enc_whh"],
                             arrays["enc_b"])

        # Teacher-force flags (one scalar draw per step, shared across batch)
        # and pre-gathered teacher embeddings (no one-hot stream).
        tf_rand = jax.random.uniform(key, (T,))
        tf_flags = tf_rand[:T - 1] < teacher_force_ratio
        tf_flags = tf_flags.at[0].set(True).astype(jnp.int32)   # step 0 uses trg[0]
        x_tf = arrays["dec_emb"][trg[:T - 1]]                   # (T-1, B, Ep) bf16
        x_tf = jnp.pad(x_tf, ((0, 0), (0, Bp - B), (0, 0)))

        logits = run_decoder(tf_flags, x_tf, h0, c0,
                             arrays["dec_emb"], arrays["dec_wih"],
                             arrays["dec_whh"], arrays["dec_b"],
                             arrays["dec_wout"], arrays["dec_bout"],
                             n_vocab=V)                         # (T-1, Bp, Vp)

        out = jnp.concatenate(
            [jnp.zeros((1, B, V), jnp.float32), logits[:, :B, :V]], axis=0)
        return out

    return forward


# ----------------------------------- main -------------------------------------

if __name__ == "__main__":
    SRC_VOCAB = 32
    TRG_VOCAB = 32
    EMB = 16
    HID = 32
    SEQ = 8
    BATCH = 4

    root = jax.random.PRNGKey(0)
    k_params, k_src, k_trg, k_tf = jax.random.split(root, 4)

    params = init_params(k_params, SRC_VOCAB, TRG_VOCAB, EMB, HID)
    arrays, dims = prepare_params(params)
    forward = make_forward(arrays, dims, teacher_force_ratio=0.5)

    src = jax.random.randint(k_src, (SEQ, BATCH), 0, SRC_VOCAB, dtype=jnp.int32)
    trg = jax.random.randint(k_trg, (SEQ, BATCH), 0, TRG_VOCAB, dtype=jnp.int32)

    out = forward(src, trg, k_tf)
    out = jax.block_until_ready(out)

    assert out.shape == (SEQ, BATCH, TRG_VOCAB), out.shape
    assert bool(jnp.all(jnp.isfinite(out)))
    assert bool(jnp.all(out[0] == 0))        # row 0 stays zero, like the reference
    print("KERNEL_OK")
</pallas_src>

<mosaic_0001>
module attributes {stable_mosaic.version = 11 : i64} {
  func.func @encoder_kernel(%arg0: i32, %arg1: memref<1x8x128xbf16, #tpu.memory_space<vmem>>, %arg2: memref<128x512xbf16, #tpu.memory_space<vmem>>, %arg3: memref<128x512xbf16, #tpu.memory_space<vmem>>, %arg4: memref<1x512xf32, #tpu.memory_space<vmem>>, %arg5: memref<8x128xf32, #tpu.memory_space<vmem>>, %arg6: memref<8x128xf32, #tpu.memory_space<vmem>>) attributes {dimension_semantics = [#tpu.dimension_semantics<arbitrary>], iteration_bounds = array<i64: 8>, scalar_prefetch = 0 : i64, scratch_operands = 0 : i64, tpu.core_type = #tpu.core_type<tc>, window_params = [{transform_indices = @transform_0, window_bounds = array<i64: 1, 8, 128>}, {pipeline_mode = #tpu.pipeline_mode<synchronous>, transform_indices = @transform_1, window_bounds = array<i64: 128, 512>}, {pipeline_mode = #tpu.pipeline_mode<synchronous>, transform_indices = @transform_2, window_bounds = array<i64: 128, 512>}, {pipeline_mode = #tpu.pipeline_mode<synchronous>, transform_indices = @transform_3, window_bounds = array<i64: 1, 512>}, {pipeline_mode = #tpu.pipeline_mode<synchronous>, transform_indices = @transform_4, window_bounds = array<i64: 8, 128>}, {pipeline_mode = #tpu.pipeline_mode<synchronous>, transform_indices = @transform_5, window_bounds = array<i64: 8, 128>}]} {
    %c0_i32 = arith.constant 0 : i32
    %0 = arith.cmpi eq, %arg0, %c0_i32 : i32
    %1 = arith.extui %0 : i1 to i32
    %c0_i32_0 = arith.constant 0 : i32
    %2 = arith.cmpi ne, %1, %c0_i32_0 : i32
    scf.if %2 {
      %cst_21 = arith.constant 0.000000e+00 : f32
      %43 = vector.broadcast %cst_21 : f32 to vector<8x128xf32>
      %c0_22 = arith.constant 0 : index
      %c0_23 = arith.constant 0 : index
      %44 = vector.load %arg5[%c0_22, %c0_23] : memref<8x128xf32, #tpu.memory_space<vmem>>, vector<8x128xf32>
      tpu.vector_store %arg5[%c0_22, %c0_23], %43 {strides = array<i32>} : memref<8x128xf32, #tpu.memory_space<vmem>>, vector<8x128xf32>,
      %cst_24 = arith.constant 0.000000e+00 : f32
      %45 = vector.broadcast %cst_24 : f32 to vector<8x128xf32>
      %c0_25 = arith.constant 0 : index
      %c0_26 = arith.constant 0 : index
      %46 = vector.load %arg6[%c0_25, %c0_26] : memref<8x128xf32, #tpu.memory_space<vmem>>, vector<8x128xf32>
      tpu.vector_store %arg6[%c0_25, %c0_26], %45 {strides = array<i32>} : memref<8x128xf32, #tpu.memory_space<vmem>>, vector<8x128xf32>,
    } else {
    }
    %c0 = arith.constant 0 : index
    %c0_1 = arith.constant 0 : index
    %c0_2 = arith.constant 0 : index
    %3 = vector.load %arg1[%c0, %c0_1, %c0_2] : memref<1x8x128xbf16, #tpu.memory_space<vmem>>, vector<1x8x128xbf16>
    %4 = vector.shape_cast %3 : vector<1x8x128xbf16> to vector<8x128xbf16>
    %c0_3 = arith.constant 0 : index
    %c0_4 = arith.constant 0 : index
    %5 = vector.load %arg5[%c0_3, %c0_4] : memref<8x128xf32, #tpu.memory_space<vmem>>, vector<8x128xf32>
    %c0_5 = arith.constant 0 : index
    %c0_6 = arith.constant 0 : index
    %6 = vector.load %arg6[%c0_5, %c0_6] : memref<8x128xf32, #tpu.memory_space<vmem>>, vector<8x128xf32>
    %c0_7 = arith.constant 0 : index
    %c0_8 = arith.constant 0 : index
    %7 = vector.load %arg2[%c0_7, %c0_8] : memref<128x512xbf16, #tpu.memory_space<vmem>>, vector<128x512xbf16>
    %cst = arith.constant dense<0.000000e+00> : vector<8x512xf32>
    %8 = tpu.matmul %4, %7, %cst {dimension_numbers = #tpu.dot_dimension_numbers<[1], [0], [0], [1], [0, 0, 1, 1], [], []>} : vector<8x128xbf16>, vector<128x512xbf16>, vector<8x512xf32> -> vector<8x512xf32>
    %9 = arith.truncf %5 : vector<8x128xf32> to vector<8x128xbf16>
    %c0_9 = arith.constant 0 : index
    %c0_10 = arith.constant 0 : index
    %10 = vector.load %arg3[%c0_9, %c0_10] : memref<128x512xbf16, #tpu.memory_space<vmem>>, vector<128x512xbf16>
    %cst_11 = arith.constant dense<0.000000e+00> : vector<8x512xf32>
    %11 = tpu.matmul %9, %10, %cst_11 {dimension_numbers = #tpu.dot_dimension_numbers<[1], [0], [0], [1], [0, 0, 1, 1], [], []>} : vector<8x128xbf16>, vector<128x512xbf16>, vector<8x512xf32> -> vector<8x512xf32>
    %12 = arith.addf %8, %11 : vector<8x512xf32>
    %c0_12 = arith.constant 0 : index
    %c0_13 = arith.constant 0 : index
    %13 = vector.load %arg4[%c0_12, %c0_13] : memref<1x512xf32, #tpu.memory_space<vmem>>, vector<1x512xf32>
    %14 = vector.broadcast %13 : vector<1x512xf32> to vector<8x512xf32>
    %15 = arith.addf %12, %14 : vector<8x512xf32>
    %16 = vector.extract_strided_slice %15 {offsets = [0, 0], sizes = [8, 128], strides = [1, 1]} : vector<8x512xf32> to vector<8x128xf32>
    %17 = arith.negf %16 : vector<8x128xf32>
    %18 = math.exp %17 : vector<8x128xf32>
    %cst_14 = arith.constant 1.000000e+00 : f32
    %19 = vector.broadcast %cst_14 : f32 to vector<8x128xf32>
    %20 = arith.addf %19, %18 : vector<8x128xf32>
    %21 = arith.divf %19, %20 : vector<8x128xf32>
    %22 = vector.extract_strided_slice %15 {offsets = [0, 128], sizes = [8, 128], strides = [1, 1]} : vector<8x512xf32> to vector<8x128xf32>
    %23 = arith.negf %22 : vector<8x128xf32>
    %24 = math.exp %23 : vector<8x128xf32>
    %cst_15 = arith.constant 1.000000e+00 : f32
    %25 = vector.broadcast %cst_15 : f32 to vector<8x128xf32>
    %26 = arith.addf %25, %24 : vector<8x128xf32>
    %27 = arith.divf %25, %26 : vector<8x128xf32>
    %28 = vector.extract_strided_slice %15 {offsets = [0, 256], sizes = [8, 128], strides = [1, 1]} : vector<8x512xf32> to vector<8x128xf32>
    %29 = math.tanh %28 : vector<8x128xf32>
    %30 = vector.extract_strided_slice %15 {offsets = [0, 384], sizes = [8, 128], strides = [1, 1]} : vector<8x512xf32> to vector<8x128xf32>
    %31 = arith.negf %30 : vector<8x128xf32>
    %32 = math.exp %31 : vector<8x128xf32>
    %cst_16 = arith.constant 1.000000e+00 : f32
    %33 = vector.broadcast %cst_16 : f32 to vector<8x128xf32>
    %34 = arith.addf %33, %32 : vector<8x128xf32>
    %35 = arith.divf %33, %34 : vector<8x128xf32>
    %36 = arith.mulf %27, %6 : vector<8x128xf32>
    %37 = arith.mulf %21, %29 : vector<8x128xf32>
    %38 = arith.addf %36, %37 : vector<8x128xf32>
    %c0_17 = arith.constant 0 : index
    %c0_18 = arith.constant 0 : index
    %39 = vector.load %arg6[%c0_17, %c0_18] : memref<8x128xf32, #tpu.memory_space<vmem>>, vector<8x128xf32>
    tpu.vector_store %arg6[%c0_17, %c0_18], %38 {strides = array<i32>} : memref<8x128xf32, #tpu.memory_space<vmem>>, vector<8x128xf32>,
    %40 = math.tanh %38 : vector<8x128xf32>
    %41 = arith.mulf %35, %40 : vector<8x128xf32>
    %c0_19 = arith.constant 0 : index
    %c0_20 = arith.constant 0 : index
    %42 = vector.load %arg5[%c0_19, %c0_20] : memref<8x128xf32, #tpu.memory_space<vmem>>, vector<8x128xf32>
    tpu.vector_store %arg5[%c0_19, %c0_20], %41 {strides = array<i32>} : memref<8x128xf32, #tpu.memory_space<vmem>>, vector<8x128xf32>,
    return
  }
  func.func @transform_0(%arg0: i32) -> (i32, i32, i32) {
    %c0_i32 = arith.constant 0 : i32
    %c0_i32_0 = arith.constant 0 : i32
    %c0_i32_1 = arith.constant 0 : i32
    return %arg0, %c0_i32, %c0_i32_0 : i32, i32, i32
  }
  func.func @transform_1(%arg0: i32) -> (i32, i32) {
    %c0_i32 = arith.constant 0 : i32
    %c0_i32_0 = arith.constant 0 : i32
    %c0_i32_1 = arith.constant 0 : i32
    return %c0_i32, %c0_i32_0 : i32, i32
  }
  func.func @transform_2(%arg0: i32) -> (i32, i32) {
    %c0_i32 = arith.constant 0 : i32
    %c0_i32_0 = arith.constant 0 : i32
    %c0_i32_1 = arith.constant 0 : i32
    return %c0_i32, %c0_i32_0 : i32, i32
  }
  func.func @transform_3(%arg0: i32) -> (i32, i32) {
    %c0_i32 = arith.constant 0 : i32
    %c0_i32_0 = arith.constant 0 : i32
    %c0_i32_1 = arith.constant 0 : i32
    return %c0_i32, %c0_i32_0 : i32, i32
  }
  func.func @transform_4(%arg0: i32) -> (i32, i32) {
    %c0_i32 = arith.constant 0 : i32
    %c0_i32_0 = arith.constant 0 : i32
    %c0_i32_1 = arith.constant 0 : i32
    return %c0_i32, %c0_i32_0 : i32, i32
  }
  func.func @transform_5(%arg0: i32) -> (i32, i32) {
    %c0_i32 = arith.constant 0 : i32
    %c0_i32_0 = arith.constant 0 : i32
    %c0_i32_1 = arith.constant 0 : i32
    return %c0_i32, %c0_i32_0 : i32, i32
  }
}

module attributes {stable_mosaic.version = 11 : i64} {
  func.func @decoder_kernel(%arg0: memref<7xi32, #tpu.memory_space<smem>>, %arg1: memref<7x8x128xbf16, #tpu.memory_space<vmem>>, %arg2: memref<8x128xf32, #tpu.memory_space<vmem>>, %arg3: memref<8x128xf32, #tpu.memory_space<vmem>>, %arg4: memref<128x128xbf16, #tpu.memory_space<vmem>>, %arg5: memref<128x512xbf16, #tpu.memory_space<vmem>>, %arg6: memref<128x512xbf16, #tpu.memory_space<vmem>>, %arg7: memref<1x512xf32, #tpu.memory_space<vmem>>, %arg8: memref<128x128xbf16, #tpu.memory_space<vmem>>, %arg9: memref<1x128xf32, #tpu.memory_space<vmem>>, %arg10: memref<7x8x128xf32, #tpu.memory_space<vmem>>) attributes {dimension_semantics = [], scalar_prefetch = 0 : i64, scratch_operands = 0 : i64, tpu.core_type = #tpu.core_type<tc>} {
    %c0 = arith.constant 0 : index
    %c0_0 = arith.constant 0 : index
    %0 = vector.load %arg7[%c0, %c0_0] : memref<1x512xf32, #tpu.memory_space<vmem>>, vector<1x512xf32>
    %1 = vector.shape_cast %0 : vector<1x512xf32> to vector<1x512xf32>
    %2 = vector.broadcast %1 : vector<1x512xf32> to vector<8x512xf32>
    %c0_1 = arith.constant 0 : index
    %c0_2 = arith.constant 0 : index
    %3 = vector.load %arg9[%c0_1, %c0_2] : memref<1x128xf32, #tpu.memory_space<vmem>>, vector<1x128xf32>
    %4 = vector.shape_cast %3 : vector<1x128xf32> to vector<1x128xf32>
    %5 = vector.broadcast %4 : vector<1x128xf32> to vector<8x128xf32>
    %6 = tpu.iota {dimensions = array<i32: 1>} : vector<8x128xi32>
    %c32_i32 = arith.constant 32 : i32
    %7 = vector.broadcast %c32_i32 : i32 to vector<8x128xi32>
    %8 = arith.cmpi slt, %6, %7 : vector<8x128xi32>
    %c0_3 = arith.constant 0 : index
    %c0_4 = arith.constant 0 : index
    %9 = vector.load %arg2[%c0_3, %c0_4] : memref<8x128xf32, #tpu.memory_space<vmem>>, vector<8x128xf32>
    %c0_5 = arith.constant 0 : index
    %c0_6 = arith.constant 0 : index
    %10 = vector.load %arg3[%c0_5, %c0_6] : memref<8x128xf32, #tpu.memory_space<vmem>>, vector<8x128xf32>
    %cst = arith.constant 0.000000e+00 : bf16
    %11 = vector.broadcast %cst : bf16 to vector<8x128xbf16>
    %c0_i32 = arith.constant 0 : i32
    %12 = arith.index_cast %c0_i32 : i32 to index
    %c0_7 = arith.constant 0 : index
    %c0_8 = arith.constant 0 : index
    %13 = vector.load %arg1[%12, %c0_7, %c0_8] : memref<7x8x128xbf16, #tpu.memory_space<vmem>>, vector<1x8x128xbf16>
    %14 = vector.shape_cast %13 : vector<1x8x128xbf16> to vector<8x128xbf16>
    %15 = arith.index_cast %c0_i32 : i32 to index
    %16 = memref.load %arg0[%15] : memref<7xi32, #tpu.memory_space<smem>>
    %c0_i32_9 = arith.constant 0 : i32
    %17 = arith.cmpi sgt, %16, %c0_i32_9 : i32
    %18 = arith.extui %17 : i1 to i32
    %c0_i32_10 = arith.constant 0 : i32
    %19 = arith.cmpi ne, %18, %c0_i32_10 : i32
    %20 = scf.if %19 -> (vector<8x128xbf16>) {
      scf.yield %14 : vector<8x128xbf16>
    } else {
      %c0_160 = arith.constant 0 : index
      %c0_161 = arith.constant 0 : index
      %460 = vector.load %arg4[%c0_160, %c0_161] : memref<128x128xbf16, #tpu.memory_space<vmem>>, vector<128x128xbf16>
      %cst_162 = arith.constant dense<0.000000e+00> : vector<8x128xf32>
      %461 = tpu.matmul %11, %460, %cst_162 {dimension_numbers = #tpu.dot_dimension_numbers<[1], [0], [0], [1], [0, 0, 1, 1], [], []>} : vector<8x128xbf16>, vector<128x128xbf16>, vector<8x128xf32> -> vector<8x128xf32>
      %462 = arith.truncf %461 : vector<8x128xf32> to vector<8x128xbf16>
      scf.yield %462 : vector<8x128xbf16>
    }
    %c0_11 = arith.constant 0 : index
    %c0_12 = arith.constant 0 : index
    %21 = vector.load %arg5[%c0_11, %c0_12] : memref<128x512xbf16, #tpu.memory_space<vmem>>, vector<128x512xbf16>
    %cst_13 = arith.constant dense<0.000000e+00> : vector<8x512xf32>
    %22 = tpu.matmul %20, %21, %cst_13 {dimension_numbers = #tpu.dot_dimension_numbers<[1], [0], [0], [1], [0, 0, 1, 1], [], []>} : vector<8x128xbf16>, vector<128x512xbf16>, vector<8x512xf32> -> vector<8x512xf32>
    %23 = arith.truncf %9 : vector<8x128xf32> to vector<8x128xbf16>
    %c0_14 = arith.constant 0 : index
    %c0_15 = arith.constant 0 : index
    %24 = vector.load %arg6[%c0_14, %c0_15] : memref<128x512xbf16, #tpu.memory_space<vmem>>, vector<128x512xbf16>
    %cst_16 = arith.constant dense<0.000000e+00> : vector<8x512xf32>
    %25 = tpu.matmul %23, %24, %cst_16 {dimension_numbers = #tpu.dot_dimension_numbers<[1], [0], [0], [1], [0, 0, 1, 1], [], []>} : vector<8x128xbf16>, vector<128x512xbf16>, vector<8x512xf32> -> vector<8x512xf32>
    %26 = arith.addf %22, %25 : vector<8x512xf32>
    %27 = arith.addf %26, %2 : vector<8x512xf32>
    %28 = vector.extract_strided_slice %27 {offsets = [0, 0], sizes = [8, 128], strides = [1, 1]} : vector<8x512xf32> to vector<8x128xf32>
    %29 = arith.negf %28 : vector<8x128xf32>
    %30 = math.exp %29 : vector<8x128xf32>
    %cst_17 = arith.constant 1.000000e+00 : f32
    %31 = vector.broadcast %cst_17 : f32 to vector<8x128xf32>
    %32 = arith.addf %31, %30 : vector<8x128xf32>
    %33 = arith.divf %31, %32 : vector<8x128xf32>
    %34 = vector.extract_strided_slice %27 {offsets = [0, 128], sizes = [8, 128], strides = [1, 1]} : vector<8x512xf32> to vector<8x128xf32>
    %35 = arith.negf %34 : vector<8x128xf32>
    %36 = math.exp %35 : vector<8x128xf32>
    %cst_18 = arith.constant 1.000000e+00 : f32
    %37 = vector.broadcast %cst_18 : f32 to vector<8x128xf32>
    %38 = arith.addf %37, %36 : vector<8x128xf32>
    %39 = arith.divf %37, %38 : vector<8x128xf32>
    %40 = vector.extract_strided_slice %27 {offsets = [0, 256], sizes = [8, 128], strides = [1, 1]} : vector<8x512xf32> to vector<8x128xf32>
    %41 = math.tanh %40 : vector<8x128xf32>
    %42 = vector.extract_strided_slice %27 {offsets = [0, 384], sizes = [8, 128], strides = [1, 1]} : vector<8x512xf32> to vector<8x128xf32>
    %43 = arith.negf %42 : vector<8x128xf32>
    %44 = math.exp %43 : vector<8x128xf32>
    %cst_19 = arith.constant 1.000000e+00 : f32
    %45 = vector.broadcast %cst_19 : f32 to vector<8x128xf32>
    %46 = arith.addf %45, %44 : vector<8x128xf32>
    %47 = arith.divf %45, %46 : vector<8x128xf32>
    %48 = arith.mulf %39, %10 : vector<8x128xf32>
    %49 = arith.mulf %33, %41 : vector<8x128xf32>
    %50 = arith.addf %48, %49 : vector<8x128xf32>
    %51 = math.tanh %50 : vector<8x128xf32>
    %52 = arith.mulf %47, %51 : vector<8x128xf32>
    %53 = arith.truncf %52 : vector<8x128xf32> to vector<8x128xbf16>
    %c0_20 = arith.constant 0 : index
    %c0_21 = arith.constant 0 : index
    %54 = vector.load %arg8[%c0_20, %c0_21] : memref<128x128xbf16, #tpu.memory_space<vmem>>, vector<128x128xbf16>
    %cst_22 = arith.constant dense<0.000000e+00> : vector<8x128xf32>
    %55 = tpu.matmul %53, %54, %cst_22 {dimension_numbers = #tpu.dot_dimension_numbers<[1], [0], [0], [1], [0, 0, 1, 1], [], []>} : vector<8x128xbf16>, vector<128x128xbf16>, vector<8x128xf32> -> vector<8x128xf32>
    %56 = arith.addf %55, %5 : vector<8x128xf32>
    %57 = arith.index_cast %c0_i32 : i32 to index
    %c0_23 = arith.constant 0 : index
    %c0_24 = arith.constant 0 : index
    %58 = vector.load %arg10[%57, %c0_23, %c0_24] : memref<7x8x128xf32, #tpu.memory_space<vmem>>, vector<1x8x128xf32>
    %59 = vector.shape_cast %58 : vector<1x8x128xf32> to vector<8x128xf32>
    %60 = vector.shape_cast %56 : vector<8x128xf32> to vector<1x8x128xf32>
    tpu.vector_store %arg10[%57, %c0_23, %c0_24], %60 {strides = array<i32>} : memref<7x8x128xf32, #tpu.memory_space<vmem>>, vector<1x8x128xf32>,
    %cst_25 = arith.constant 0xFF800000 : f32
    %61 = vector.broadcast %cst_25 : f32 to vector<8x128xf32>
    %62 = arith.select %8, %56, %61 : vector<8x128xi1>, vector<8x128xf32>
    %cst_26 = arith.constant dense<0xFF800000> : vector<8xf32>
    %63 = vector.multi_reduction <maximumf>, %62, %cst_26 [1] : vector<8x128xf32> to vector<8xf32>
    %64 = vector.shape_cast %63 : vector<8xf32> to vector<8x1xf32>
    %65 = vector.broadcast %64 : vector<8x1xf32> to vector<8x128xf32>
    %66 = arith.cmpf oeq, %62, %65 : vector<8x128xf32>
    %c128_i32 = arith.constant 128 : i32
    %67 = vector.broadcast %c128_i32 : i32 to vector<8x128xi32>
    %68 = arith.select %66, %6, %67 : vector<8x128xi1>, vector<8x128xi32>
    %cst_27 = arith.constant dense<2147483647> : vector<8xi32>
    %69 = vector.multi_reduction <minsi>, %68, %cst_27 [1] : vector<8x128xi32> to vector<8xi32>
    %70 = vector.shape_cast %69 : vector<8xi32> to vector<8x1xi32>
    %71 = vector.broadcast %70 : vector<8x1xi32> to vector<8x128xi32>
    %72 = arith.cmpi eq, %6, %71 : vector<8x128xi32>
    %73 = arith.extui %72 : vector<8x128xi1> to vector<8x128xi32>
    %74 = arith.sitofp %73 : vector<8x128xi32> to vector<8x128xf32>
    %75 = arith.truncf %74 : vector<8x128xf32> to vector<8x128xbf16>
    %c1_i32 = arith.constant 1 : i32
    %76 = arith.index_cast %c1_i32 : i32 to index
    %c0_28 = arith.constant 0 : index
    %c0_29 = arith.constant 0 : index
    %77 = vector.load %arg1[%76, %c0_28, %c0_29] : memref<7x8x128xbf16, #tpu.memory_space<vmem>>, vector<1x8x128xbf16>
    %78 = vector.shape_cast %77 : vector<1x8x128xbf16> to vector<8x128xbf16>
    %79 = arith.index_cast %c1_i32 : i32 to index
    %80 = memref.load %arg0[%79] : memref<7xi32, #tpu.memory_space<smem>>
    %c0_i32_30 = arith.constant 0 : i32
    %81 = arith.cmpi sgt, %80, %c0_i32_30 : i32
    %82 = arith.extui %81 : i1 to i32
    %c0_i32_31 = arith.constant 0 : i32
    %83 = arith.cmpi ne, %82, %c0_i32_31 : i32
    %84 = scf.if %83 -> (vector<8x128xbf16>) {
      scf.yield %78 : vector<8x128xbf16>
    } else {
      %c0_160 = arith.constant 0 : index
      %c0_161 = arith.constant 0 : index
      %460 = vector.load %arg4[%c0_160, %c0_161] : memref<128x128xbf16, #tpu.memory_space<vmem>>, vector<128x128xbf16>
      %cst_162 = arith.constant dense<0.000000e+00> : vector<8x128xf32>
      %461 = tpu.matmul %75, %460, %cst_162 {dimension_numbers = #tpu.dot_dimension_numbers<[1], [0], [0], [1], [0, 0, 1, 1], [], []>} : vector<8x128xbf16>, vector<128x128xbf16>, vector<8x128xf32> -> vector<8x128xf32>
      %462 = arith.truncf %461 : vector<8x128xf32> to vector<8x128xbf16>
      scf.yield %462 : vector<8x128xbf16>
    }
    %c0_32 = arith.constant 0 : index
    %c0_33 = arith.constant 0 : index
    %85 = vector.load %arg5[%c0_32, %c0_33] : memref<128x512xbf16, #tpu.memory_space<vmem>>, vector<128x512xbf16>
    %cst_34 = arith.constant dense<0.000000e+00> : vector<8x512xf32>
    %86 = tpu.matmul %84, %85, %cst_34 {dimension_numbers = #tpu.dot_dimension_numbers<[1], [0], [0], [1], [0, 0, 1, 1], [], []>} : vector<8x128xbf16>, vector<128x512xbf16>, vector<8x512xf32> -> vector<8x512xf32>
    %87 = arith.truncf %52 : vector<8x128xf32> to vector<8x128xbf16>
    %c0_35 = arith.constant 0 : index
    %c0_36 = arith.constant 0 : index
    %88 = vector.load %arg6[%c0_35, %c0_36] : memref<128x512xbf16, #tpu.memory_space<vmem>>, vector<128x512xbf16>
    %cst_37 = arith.constant dense<0.000000e+00> : vector<8x512xf32>
    %89 = tpu.matmul %87, %88, %cst_37 {dimension_numbers = #tpu.dot_dimension_numbers<[1], [0], [0], [1], [0, 0, 1, 1], [], []>} : vector<8x128xbf16>, vector<128x512xbf16>, vector<8x512xf32> -> vector<8x512xf32>
    %90 = arith.addf %86, %89 : vector<8x512xf32>
    %91 = arith.addf %90, %2 : vector<8x512xf32>
    %92 = vector.extract_strided_slice %91 {offsets = [0, 0], sizes = [8, 128], strides = [1, 1]} : vector<8x512xf32> to vector<8x128xf32>
    %93 = arith.negf %92 : vector<8x128xf32>
    %94 = math.exp %93 : vector<8x128xf32>
    %cst_38 = arith.constant 1.000000e+00 : f32
    %95 = vector.broadcast %cst_38 : f32 to vector<8x128xf32>
    %96 = arith.addf %95, %94 : vector<8x128xf32>
    %97 = arith.divf %95, %96 : vector<8x128xf32>
    %98 = vector.extract_strided_slice %91 {offsets = [0, 128], sizes = [8, 128], strides = [1, 1]} : vector<8x512xf32> to vector<8x128xf32>
    %99 = arith.negf %98 : vector<8x128xf32>
    %100 = math.exp %99 : vector<8x128xf32>
    %cst_39 = arith.constant 1.000000e+00 : f32
    %101 = vector.broadcast %cst_39 : f32 to vector<8x128xf32>
    %102 = arith.addf %101, %100 : vector<8x128xf32>
    %103 = arith.divf %101, %102 : vector<8x128xf32>
    %104 = vector.extract_strided_slice %91 {offsets = [0, 256], sizes = [8, 128], strides = [1, 1]} : vector<8x512xf32> to vector<8x128xf32>
    %105 = math.tanh %104 : vector<8x128xf32>
    %106 = vector.extract_strided_slice %91 {offsets = [0, 384], sizes = [8, 128], strides = [1, 1]} : vector<8x512xf32> to vector<8x128xf32>
    %107 = arith.negf %106 : vector<8x128xf32>
    %108 = math.exp %107 : vector<8x128xf32>
    %cst_40 = arith.constant 1.000000e+00 : f32
    %109 = vector.broadcast %cst_40 : f32 to vector<8x128xf32>
    %110 = arith.addf %109, %108 : vector<8x128xf32>
    %111 = arith.divf %109, %110 : vector<8x128xf32>
    %112 = arith.mulf %103, %50 : vector<8x128xf32>
    %113 = arith.mulf %97, %105 : vector<8x128xf32>
    %114 = arith.addf %112, %113 : vector<8x128xf32>
    %115 = math.tanh %114 : vector<8x128xf32>
    %116 = arith.mulf %111, %115 : vector<8x128xf32>
    %117 = arith.truncf %116 : vector<8x128xf32> to vector<8x128xbf16>
    %c0_41 = arith.constant 0 : index
    %c0_42 = arith.constant 0 : index
    %118 = vector.load %arg8[%c0_41, %c0_42] : memref<128x128xbf16, #tpu.memory_space<vmem>>, vector<128x128xbf16>
    %cst_43 = arith.constant dense<0.000000e+00> : vector<8x128xf32>
    %119 = tpu.matmul %117, %118, %cst_43 {dimension_numbers = #tpu.dot_dimension_numbers<[1], [0], [0], [1], [0, 0, 1, 1], [], []>} : vector<8x128xbf16>, vector<128x128xbf16>, vector<8x128xf32> -> vector<8x128xf32>
    %120 = arith.addf %119, %5 : vector<8x128xf32>
    %121 = arith.index_cast %c1_i32 : i32 to index
    %c0_44 = arith.constant 0 : index
    %c0_45 = arith.constant 0 : index
    %122 = vector.load %arg10[%121, %c0_44, %c0_45] : memref<7x8x128xf32, #tpu.memory_space<vmem>>, vector<1x8x128xf32>
    %123 = vector.shape_cast %122 : vector<1x8x128xf32> to vector<8x128xf32>
    %124 = vector.shape_cast %120 : vector<8x128xf32> to vector<1x8x128xf32>
    tpu.vector_store %arg10[%121, %c0_44, %c0_45], %124 {strides = array<i32>} : memref<7x8x128xf32, #tpu.memory_space<vmem>>, vector<1x8x128xf32>,
    %cst_46 = arith.constant 0xFF800000 : f32
    %125 = vector.broadcast %cst_46 : f32 to vector<8x128xf32>
    %126 = arith.select %8, %120, %125 : vector<8x128xi1>, vector<8x128xf32>
    %cst_47 = arith.constant dense<0xFF800000> : vector<8xf32>
    %127 = vector.multi_reduction <maximumf>, %126, %cst_47 [1] : vector<8x128xf32> to vector<8xf32>
    %128 = vector.shape_cast %127 : vector<8xf32> to vector<8x1xf32>
    %129 = vector.broadcast %128 : vector<8x1xf32> to vector<8x128xf32>
    %130 = arith.cmpf oeq, %126, %129 : vector<8x128xf32>
    %c128_i32_48 = arith.constant 128 : i32
    %131 = vector.broadcast %c128_i32_48 : i32 to vector<8x128xi32>
    %132 = arith.select %130, %6, %131 : vector<8x128xi1>, vector<8x128xi32>
    %cst_49 = arith.constant dense<2147483647> : vector<8xi32>
    %133 = vector.multi_reduction <minsi>, %132, %cst_49 [1] : vector<8x128xi32> to vector<8xi32>
    %134 = vector.shape_cast %133 : vector<8xi32> to vector<8x1xi32>
    %135 = vector.broadcast %134 : vector<8x1xi32> to vector<8x128xi32>
    %136 = arith.cmpi eq, %6, %135 : vector<8x128xi32>
    %137 = arith.extui %136 : vector<8x128xi1> to vector<8x128xi32>
    %138 = arith.sitofp %137 : vector<8x128xi32> to vector<8x128xf32>
    %139 = arith.truncf %138 : vector<8x128xf32> to vector<8x128xbf16>
    %c2_i32 = arith.constant 2 : i32
    %140 = arith.index_cast %c2_i32 : i32 to index
    %c0_50 = arith.constant 0 : index
    %c0_51 = arith.constant 0 : index
    %141 = vector.load %arg1[%140, %c0_50, %c0_51] : memref<7x8x128xbf16, #tpu.memory_space<vmem>>, vector<1x8x128xbf16>
    %142 = vector.shape_cast %141 : vector<1x8x128xbf16> to vector<8x128xbf16>
    %143 = arith.index_cast %c2_i32 : i32 to index
    %144 = memref.load %arg0[%143] : memref<7xi32, #tpu.memory_space<smem>>
    %c0_i32_52 = arith.constant 0 : i32
    %145 = arith.cmpi sgt, %144, %c0_i32_52 : i32
    %146 = arith.extui %145 : i1 to i32
    %c0_i32_53 = arith.constant 0 : i32
    %147 = arith.cmpi ne, %146, %c0_i32_53 : i32
    %148 = scf.if %147 -> (vector<8x128xbf16>) {
      scf.yield %142 : vector<8x128xbf16>
    } else {
      %c0_160 = arith.constant 0 : index
      %c0_161 = arith.constant 0 : index
      %460 = vector.load %arg4[%c0_160, %c0_161] : memref<128x128xbf16, #tpu.memory_space<vmem>>, vector<128x128xbf16>
      %cst_162 = arith.constant dense<0.000000e+00> : vector<8x128xf32>
      %461 = tpu.matmul %139, %460, %cst_162 {dimension_numbers = #tpu.dot_dimension_numbers<[1], [0], [0], [1], [0, 0, 1, 1], [], []>} : vector<8x128xbf16>, vector<128x128xbf16>, vector<8x128xf32> -> vector<8x128xf32>
      %462 = arith.truncf %461 : vector<8x128xf32> to vector<8x128xbf16>
      scf.yield %462 : vector<8x128xbf16>
    }
    %c0_54 = arith.constant 0 : index
    %c0_55 = arith.constant 0 : index
    %149 = vector.load %arg5[%c0_54, %c0_55] : memref<128x512xbf16, #tpu.memory_space<vmem>>, vector<128x512xbf16>
    %cst_56 = arith.constant dense<0.000000e+00> : vector<8x512xf32>
    %150 = tpu.matmul %148, %149, %cst_56 {dimension_numbers = #tpu.dot_dimension_numbers<[1], [0], [0], [1], [0, 0, 1, 1], [], []>} : vector<8x128xbf16>, vector<128x512xbf16>, vector<8x512xf32> -> vector<8x512xf32>
    %151 = arith.truncf %116 : vector<8x128xf32> to vector<8x128xbf16>
    %c0_57 = arith.constant 0 : index
    %c0_58 = arith.constant 0 : index
    %152 = vector.load %arg6[%c0_57, %c0_58] : memref<128x512xbf16, #tpu.memory_space<vmem>>, vector<128x512xbf16>
    %cst_59 = arith.constant dense<0.000000e+00> : vector<8x512xf32>
    %153 = tpu.matmul %151, %152, %cst_59 {dimension_numbers = #tpu.dot_dimension_numbers<[1], [0], [0], [1], [0, 0, 1, 1], [], []>} : vector<8x128xbf16>, vector<128x512xbf16>, vector<8x512xf32> -> vector<8x512xf32>
    %154 = arith.addf %150, %153 : vector<8x512xf32>
    %155 = arith.addf %154, %2 : vector<8x512xf32>
    %156 = vector.extract_strided_slice %155 {offsets = [0, 0], sizes = [8, 128], strides = [1, 1]} : vector<8x512xf32> to vector<8x128xf32>
    %157 = arith.negf %156 : vector<8x128xf32>
    %158 = math.exp %157 : vector<8x128xf32>
    %cst_60 = arith.constant 1.000000e+00 : f32
    %159 = vector.broadcast %cst_60 : f32 to vector<8x128xf32>
    %160 = arith.addf %159, %158 : vector<8x128xf32>
    %161 = arith.divf %159, %160 : vector<8x128xf32>
    %162 = vector.extract_strided_slice %155 {offsets = [0, 128], sizes = [8, 128], strides = [1, 1]} : vector<8x512xf32> to vector<8x128xf32>
    %163 = arith.negf %162 : vector<8x128xf32>
    %164 = math.exp %163 : vector<8x128xf32>
    %cst_61 = arith.constant 1.000000e+00 : f32
    %165 = vector.broadcast %cst_61 : f32 to vector<8x128xf32>
    %166 = arith.addf %165, %164 : vector<8x128xf32>
    %167 = arith.divf %165, %166 : vector<8x128xf32>
    %168 = vector.extract_strided_slice %155 {offsets = [0, 256], sizes = [8, 128], strides = [1, 1]} : vector<8x512xf32> to vector<8x128xf32>
    %169 = math.tanh %168 : vector<8x128xf32>
    %170 = vector.extract_strided_slice %155 {offsets = [0, 384], sizes = [8, 128], strides = [1, 1]} : vector<8x512xf32> to vector<8x128xf32>
    %171 = arith.negf %170 : vector<8x128xf32>
    %172 = math.exp %171 : vector<8x128xf32>
    %cst_62 = arith.constant 1.000000e+00 : f32
    %173 = vector.broadcast %cst_62 : f32 to vector<8x128xf32>
    %174 = arith.addf %173, %172 : vector<8x128xf32>
    %175 = arith.divf %173, %174 : vector<8x128xf32>
    %176 = arith.mulf %167, %114 : vector<8x128xf32>
    %177 = arith.mulf %161, %169 : vector<8x128xf32>
    %178 = arith.addf %176, %177 : vector<8x128xf32>
    %179 = math.tanh %178 : vector<8x128xf32>
    %180 = arith.mulf %175, %179 : vector<8x128xf32>
    %181 = arith.truncf %180 : vector<8x128xf32> to vector<8x128xbf16>
    %c0_63 = arith.constant 0 : index
    %c0_64 = arith.constant 0 : index
    %182 = vector.load %arg8[%c0_63, %c0_64] : memref<128x128xbf16, #tpu.memory_space<vmem>>, vector<128x128xbf16>
    %cst_65 = arith.constant dense<0.000000e+00> : vector<8x128xf32>
    %183 = tpu.matmul %181, %182, %cst_65 {dimension_numbers = #tpu.dot_dimension_numbers<[1], [0], [0], [1], [0, 0, 1, 1], [], []>} : vector<8x128xbf16>, vector<128x128xbf16>, vector<8x128xf32> -> vector<8x128xf32>
    %184 = arith.addf %183, %5 : vector<8x128xf32>
    %185 = arith.index_cast %c2_i32 : i32 to index
    %c0_66 = arith.constant 0 : index
    %c0_67 = arith.constant 0 : index
    %186 = vector.load %arg10[%185, %c0_66, %c0_67] : memref<7x8x128xf32, #tpu.memory_space<vmem>>, vector<1x8x128xf32>
    %187 = vector.shape_cast %186 : vector<1x8x128xf32> to vector<8x128xf32>
    %188 = vector.shape_cast %184 : vector<8x128xf32> to vector<1x8x128xf32>
    tpu.vector_store %arg10[%185, %c0_66, %c0_67], %188 {strides = array<i32>} : memref<7x8x128xf32, #tpu.memory_space<vmem>>, vector<1x8x128xf32>,
    %cst_68 = arith.constant 0xFF800000 : f32
    %189 = vector.broadcast %cst_68 : f32 to vector<8x128xf32>
    %190 = arith.select %8, %184, %189 : vector<8x128xi1>, vector<8x128xf32>
    %cst_69 = arith.constant dense<0xFF800000> : vector<8xf32>
    %191 = vector.multi_reduction <maximumf>, %190, %cst_69 [1] : vector<8x128xf32> to vector<8xf32>
    %192 = vector.shape_cast %191 : vector<8xf32> to vector<8x1xf32>
    %193 = vector.broadcast %192 : vector<8x1xf32> to vector<8x128xf32>
    %194 = arith.cmpf oeq, %190, %193 : vector<8x128xf32>
    %c128_i32_70 = arith.constant 128 : i32
    %195 = vector.broadcast %c128_i32_70 : i32 to vector<8x128xi32>
    %196 = arith.select %194, %6, %195 : vector<8x128xi1>, vector<8x128xi32>
    %cst_71 = arith.constant dense<2147483647> : vector<8xi32>
    %197 = vector.multi_reduction <minsi>, %196, %cst_71 [1] : vector<8x128xi32> to vector<8xi32>
    %198 = vector.shape_cast %197 : vector<8xi32> to vector<8x1xi32>
    %199 = vector.broadcast %198 : vector<8x1xi32> to vector<8x128xi32>
    %200 = arith.cmpi eq, %6, %199 : vector<8x128xi32>
    %201 = arith.extui %200 : vector<8x128xi1> to vector<8x128xi32>
    %202 = arith.sitofp %201 : vector<8x128xi32> to vector<8x128xf32>
    %203 = arith.truncf %202 : vector<8x128xf32> to vector<8x128xbf16>
    %c3_i32 = arith.constant 3 : i32
    %204 = arith.index_cast %c3_i32 : i32 to index
    %c0_72 = arith.constant 0 : index
    %c0_73 = arith.constant 0 : index
    %205 = vector.load %arg1[%204, %c0_72, %c0_73] : memref<7x8x128xbf16, #tpu.memory_space<vmem>>, vector<1x8x128xbf16>
    %206 = vector.shape_cast %205 : vector<1x8x128xbf16> to vector<8x128xbf16>
    %207 = arith.index_cast %c3_i32 : i32 to index
    %208 = memref.load %arg0[%207] : memref<7xi32, #tpu.memory_space<smem>>
    %c0_i32_74 = arith.constant 0 : i32
    %209 = arith.cmpi sgt, %208, %c0_i32_74 : i32
    %210 = arith.extui %209 : i1 to i32
    %c0_i32_75 = arith.constant 0 : i32
    %211 = arith.cmpi ne, %210, %c0_i32_75 : i32
    %212 = scf.if %211 -> (vector<8x128xbf16>) {
      scf.yield %206 : vector<8x128xbf16>
    } else {
      %c0_160 = arith.constant 0 : index
      %c0_161 = arith.constant 0 : index
      %460 = vector.load %arg4[%c0_160, %c0_161] : memref<128x128xbf16, #tpu.memory_space<vmem>>, vector<128x128xbf16>
      %cst_162 = arith.constant dense<0.000000e+00> : vector<8x128xf32>
      %461 = tpu.matmul %203, %460, %cst_162 {dimension_numbers = #tpu.dot_dimension_numbers<[1], [0], [0], [1], [0, 0, 1, 1], [], []>} : vector<8x128xbf16>, vector<128x128xbf16>, vector<8x128xf32> -> vector<8x128xf32>
      %462 = arith.truncf %461 : vector<8x128xf32> to vector<8x128xbf16>
      scf.yield %462 : vector<8x128xbf16>
    }
    %c0_76 = arith.constant 0 : index
    %c0_77 = arith.constant 0 : index
    %213 = vector.load %arg5[%c0_76, %c0_77] : memref<128x512xbf16, #tpu.memory_space<vmem>>, vector<128x512xbf16>
    %cst_78 = arith.constant dense<0.000000e+00> : vector<8x512xf32>
    %214 = tpu.matmul %212, %213, %cst_78 {dimension_numbers = #tpu.dot_dimension_numbers<[1], [0], [0], [1], [0, 0, 1, 1], [], []>} : vector<8x128xbf16>, vector<128x512xbf16>, vector<8x512xf32> -> vector<8x512xf32>
    %215 = arith.truncf %180 : vector<8x128xf32> to vector<8x128xbf16>
    %c0_79 = arith.constant 0 : index
    %c0_80 = arith.constant 0 : index
    %216 = vector.load %arg6[%c0_79, %c0_80] : memref<128x512xbf16, #tpu.memory_space<vmem>>, vector<128x512xbf16>
    %cst_81 = arith.constant dense<0.000000e+00> : vector<8x512xf32>
    %217 = tpu.matmul %215, %216, %cst_81 {dimension_numbers = #tpu.dot_dimension_numbers<[1], [0], [0], [1], [0, 0, 1, 1], [], []>} : vector<8x128xbf16>, vector<128x512xbf16>, vector<8x512xf32> -> vector<8x512xf32>
    %218 = arith.addf %214, %217 : vector<8x512xf32>
    %219 = arith.addf %218, %2 : vector<8x512xf32>
    %220 = vector.extract_strided_slice %219 {offsets = [0, 0], sizes = [8, 128], strides = [1, 1]} : vector<8x512xf32> to vector<8x128xf32>
    %221 = arith.negf %220 : vector<8x128xf32>
    %222 = math.exp %221 : vector<8x128xf32>
    %cst_82 = arith.constant 1.000000e+00 : f32
    %223 = vector.broadcast %cst_82 : f32 to vector<8x128xf32>
    %224 = arith.addf %223, %222 : vector<8x128xf32>
    %225 = arith.divf %223, %224 : vector<8x128xf32>
    %226 = vector.extract_strided_slice %219 {offsets = [0, 128], sizes = [8, 128], strides = [1, 1]} : vector<8x512xf32> to vector<8x128xf32>
    %227 = arith.negf %226 : vector<8x128xf32>
    %228 = math.exp %227 : vector<8x128xf32>
    %cst_83 = arith.constant 1.000000e+00 : f32
    %229 = vector.broadcast %cst_83 : f32 to vector<8x128xf32>
    %230 = arith.addf %229, %228 : vector<8x128xf32>
    %231 = arith.divf %229, %230 : vector<8x128xf32>
    %232 = vector.extract_strided_slice %219 {offsets = [0, 256], sizes = [8, 128], strides = [1, 1]} : vector<8x512xf32> to vector<8x128xf32>
    %233 = math.tanh %232 : vector<8x128xf32>
    %234 = vector.extract_strided_slice %219 {offsets = [0, 384], sizes = [8, 128], strides = [1, 1]} : vector<8x512xf32> to vector<8x128xf32>
    %235 = arith.negf %234 : vector<8x128xf32>
    %236 = math.exp %235 : vector<8x128xf32>
    %cst_84 = arith.constant 1.000000e+00 : f32
    %237 = vector.broadcast %cst_84 : f32 to vector<8x128xf32>
    %238 = arith.addf %237, %236 : vector<8x128xf32>
    %239 = arith.divf %237, %238 : vector<8x128xf32>
    %240 = arith.mulf %231, %178 : vector<8x128xf32>
    %241 = arith.mulf %225, %233 : vector<8x128xf32>
    %242 = arith.addf %240, %241 : vector<8x128xf32>
    %243 = math.tanh %242 : vector<8x128xf32>
    %244 = arith.mulf %239, %243 : vector<8x128xf32>
    %245 = arith.truncf %244 : vector<8x128xf32> to vector<8x128xbf16>
    %c0_85 = arith.constant 0 : index
    %c0_86 = arith.constant 0 : index
    %246 = vector.load %arg8[%c0_85, %c0_86] : memref<128x128xbf16, #tpu.memory_space<vmem>>, vector<128x128xbf16>
    %cst_87 = arith.constant dense<0.000000e+00> : vector<8x128xf32>
    %247 = tpu.matmul %245, %246, %cst_87 {dimension_numbers = #tpu.dot_dimension_numbers<[1], [0], [0], [1], [0, 0, 1, 1], [], []>} : vector<8x128xbf16>, vector<128x128xbf16>, vector<8x128xf32> -> vector<8x128xf32>
    %248 = arith.addf %247, %5 : vector<8x128xf32>
    %249 = arith.index_cast %c3_i32 : i32 to index
    %c0_88 = arith.constant 0 : index
    %c0_89 = arith.constant 0 : index
    %250 = vector.load %arg10[%249, %c0_88, %c0_89] : memref<7x8x128xf32, #tpu.memory_space<vmem>>, vector<1x8x128xf32>
    %251 = vector.shape_cast %250 : vector<1x8x128xf32> to vector<8x128xf32>
    %252 = vector.shape_cast %248 : vector<8x128xf32> to vector<1x8x128xf32>
    tpu.vector_store %arg10[%249, %c0_88, %c0_89], %252 {strides = array<i32>} : memref<7x8x128xf32, #tpu.memory_space<vmem>>, vector<1x8x128xf32>,
    %cst_90 = arith.constant 0xFF800000 : f32
    %253 = vector.broadcast %cst_90 : f32 to vector<8x128xf32>
    %254 = arith.select %8, %248, %253 : vector<8x128xi1>, vector<8x128xf32>
    %cst_91 = arith.constant dense<0xFF800000> : vector<8xf32>
    %255 = vector.multi_reduction <maximumf>, %254, %cst_91 [1] : vector<8x128xf32> to vector<8xf32>
    %256 = vector.shape_cast %255 : vector<8xf32> to vector<8x1xf32>
    %257 = vector.broadcast %256 : vector<8x1xf32> to vector<8x128xf32>
    %258 = arith.cmpf oeq, %254, %257 : vector<8x128xf32>
    %c128_i32_92 = arith.constant 128 : i32
    %259 = vector.broadcast %c128_i32_92 : i32 to vector<8x128xi32>
    %260 = arith.select %258, %6, %259 : vector<8x128xi1>, vector<8x128xi32>
    %cst_93 = arith.constant dense<2147483647> : vector<8xi32>
    %261 = vector.multi_reduction <minsi>, %260, %cst_93 [1] : vector<8x128xi32> to vector<8xi32>
    %262 = vector.shape_cast %261 : vector<8xi32> to vector<8x1xi32>
    %263 = vector.broadcast %262 : vector<8x1xi32> to vector<8x128xi32>
    %264 = arith.cmpi eq, %6, %263 : vector<8x128xi32>
    %265 = arith.extui %264 : vector<8x128xi1> to vector<8x128xi32>
    %266 = arith.sitofp %265 : vector<8x128xi32> to vector<8x128xf32>
    %267 = arith.truncf %266 : vector<8x128xf32> to vector<8x128xbf16>
    %c4_i32 = arith.constant 4 : i32
    %268 = arith.index_cast %c4_i32 : i32 to index
    %c0_94 = arith.constant 0 : index
    %c0_95 = arith.constant 0 : index
    %269 = vector.load %arg1[%268, %c0_94, %c0_95] : memref<7x8x128xbf16, #tpu.memory_space<vmem>>, vector<1x8x128xbf16>
    %270 = vector.shape_cast %269 : vector<1x8x128xbf16> to vector<8x128xbf16>
    %271 = arith.index_cast %c4_i32 : i32 to index
    %272 = memref.load %arg0[%271] : memref<7xi32, #tpu.memory_space<smem>>
    %c0_i32_96 = arith.constant 0 : i32
    %273 = arith.cmpi sgt, %272, %c0_i32_96 : i32
    %274 = arith.extui %273 : i1 to i32
    %c0_i32_97 = arith.constant 0 : i32
    %275 = arith.cmpi ne, %274, %c0_i32_97 : i32
    %276 = scf.if %275 -> (vector<8x128xbf16>) {
      scf.yield %270 : vector<8x128xbf16>
    } else {
      %c0_160 = arith.constant 0 : index
      %c0_161 = arith.constant 0 : index
      %460 = vector.load %arg4[%c0_160, %c0_161] : memref<128x128xbf16, #tpu.memory_space<vmem>>, vector<128x128xbf16>
      %cst_162 = arith.constant dense<0.000000e+00> : vector<8x128xf32>
      %461 = tpu.matmul %267, %460, %cst_162 {dimension_numbers = #tpu.dot_dimension_numbers<[1], [0], [0], [1], [0, 0, 1, 1], [], []>} : vector<8x128xbf16>, vector<128x128xbf16>, vector<8x128xf32> -> vector<8x128xf32>
      %462 = arith.truncf %461 : vector<8x128xf32> to vector<8x128xbf16>
      scf.yield %462 : vector<8x128xbf16>
    }
    %c0_98 = arith.constant 0 : index
    %c0_99 = arith.constant 0 : index
    %277 = vector.load %arg5[%c0_98, %c0_99] : memref<128x512xbf16, #tpu.memory_space<vmem>>, vector<128x512xbf16>
    %cst_100 = arith.constant dense<0.000000e+00> : vector<8x512xf32>
    %278 = tpu.matmul %276, %277, %cst_100 {dimension_numbers = #tpu.dot_dimension_numbers<[1], [0], [0], [1], [0, 0, 1, 1], [], []>} : vector<8x128xbf16>, vector<128x512xbf16>, vector<8x512xf32> -> vector<8x512xf32>
    %279 = arith.truncf %244 : vector<8x128xf32> to vector<8x128xbf16>
    %c0_101 = arith.constant 0 : index
    %c0_102 = arith.constant 0 : index
    %280 = vector.load %arg6[%c0_101, %c0_102] : memref<128x512xbf16, #tpu.memory_space<vmem>>, vector<128x512xbf16>
    %cst_103 = arith.constant dense<0.000000e+00> : vector<8x512xf32>
    %281 = tpu.matmul %279, %280, %cst_103 {dimension_numbers = #tpu.dot_dimension_numbers<[1], [0], [0], [1], [0, 0, 1, 1], [], []>} : vector<8x128xbf16>, vector<128x512xbf16>, vector<8x512xf32> -> vector<8x512xf32>
    %282 = arith.addf %278, %281 : vector<8x512xf32>
    %283 = arith.addf %282, %2 : vector<8x512xf32>
    %284 = vector.extract_strided_slice %283 {offsets = [0, 0], sizes = [8, 128], strides = [1, 1]} : vector<8x512xf32> to vector<8x128xf32>
    %285 = arith.negf %284 : vector<8x128xf32>
    %286 = math.exp %285 : vector<8x128xf32>
    %cst_104 = arith.constant 1.000000e+00 : f32
    %287 = vector.broadcast %cst_104 : f32 to vector<8x128xf32>
    %288 = arith.addf %287, %286 : vector<8x128xf32>
    %289 = arith.divf %287, %288 : vector<8x128xf32>
    %290 = vector.extract_strided_slice %283 {offsets = [0, 128], sizes = [8, 128], strides = [1, 1]} : vector<8x512xf32> to vector<8x128xf32>
    %291 = arith.negf %290 : vector<8x128xf32>
    %292 = math.exp %291 : vector<8x128xf32>
    %cst_105 = arith.constant 1.000000e+00 : f32
    %293 = vector.broadcast %cst_105 : f32 to vector<8x128xf32>
    %294 = arith.addf %293, %292 : vector<8x128xf32>
    %295 = arith.divf %293, %294 : vector<8x128xf32>
    %296 = vector.extract_strided_slice %283 {offsets = [0, 256], sizes = [8, 128], strides = [1, 1]} : vector<8x512xf32> to vector<8x128xf32>
    %297 = math.tanh %296 : vector<8x128xf32>
    %298 = vector.extract_strided_slice %283 {offsets = [0, 384], sizes = [8, 128], strides = [1, 1]} : vector<8x512xf32> to vector<8x128xf32>
    %299 = arith.negf %298 : vector<8x128xf32>
    %300 = math.exp %299 : vector<8x128xf32>
    %cst_106 = arith.constant 1.000000e+00 : f32
    %301 = vector.broadcast %cst_106 : f32 to vector<8x128xf32>
    %302 = arith.addf %301, %300 : vector<8x128xf32>
    %303 = arith.divf %301, %302 : vector<8x128xf32>
    %304 = arith.mulf %295, %242 : vector<8x128xf32>
    %305 = arith.mulf %289, %297 : vector<8x128xf32>
    %306 = arith.addf %304, %305 : vector<8x128xf32>
    %307 = math.tanh %306 : vector<8x128xf32>
    %308 = arith.mulf %303, %307 : vector<8x128xf32>
    %309 = arith.truncf %308 : vector<8x128xf32> to vector<8x128xbf16>
    %c0_107 = arith.constant 0 : index
    %c0_108 = arith.constant 0 : index
    %310 = vector.load %arg8[%c0_107, %c0_108] : memref<128x128xbf16, #tpu.memory_space<vmem>>, vector<128x128xbf16>
    %cst_109 = arith.constant dense<0.000000e+00> : vector<8x128xf32>
    %311 = tpu.matmul %309, %310, %cst_109 {dimension_numbers = #tpu.dot_dimension_numbers<[1], [0], [0], [1], [0, 0, 1, 1], [], []>} : vector<8x128xbf16>, vector<128x128xbf16>, vector<8x128xf32> -> vector<8x128xf32>
    %312 = arith.addf %311, %5 : vector<8x128xf32>
    %313 = arith.index_cast %c4_i32 : i32 to index
    %c0_110 = arith.constant 0 : index
    %c0_111 = arith.constant 0 : index
    %314 = vector.load %arg10[%313, %c0_110, %c0_111] : memref<7x8x128xf32, #tpu.memory_space<vmem>>, vector<1x8x128xf32>
    %315 = vector.shape_cast %314 : vector<1x8x128xf32> to vector<8x128xf32>
    %316 = vector.shape_cast %312 : vector<8x128xf32> to vector<1x8x128xf32>
    tpu.vector_store %arg10[%313, %c0_110, %c0_111], %316 {strides = array<i32>} : memref<7x8x128xf32, #tpu.memory_space<vmem>>, vector<1x8x128xf32>,
    %cst_112 = arith.constant 0xFF800000 : f32
    %317 = vector.broadcast %cst_112 : f32 to vector<8x128xf32>
    %318 = arith.select %8, %312, %317 : vector<8x128xi1>, vector<8x128xf32>
    %cst_113 = arith.constant dense<0xFF800000> : vector<8xf32>
    %319 = vector.multi_reduction <maximumf>, %318, %cst_113 [1] : vector<8x128xf32> to vector<8xf32>
    %320 = vector.shape_cast %319 : vector<8xf32> to vector<8x1xf32>
    %321 = vector.broadcast %320 : vector<8x1xf32> to vector<8x128xf32>
    %322 = arith.cmpf oeq, %318, %321 : vector<8x128xf32>
    %c128_i32_114 = arith.constant 128 : i32
    %323 = vector.broadcast %c128_i32_114 : i32 to vector<8x128xi32>
    %324 = arith.select %322, %6, %323 : vector<8x128xi1>, vector<8x128xi32>
    %cst_115 = arith.constant dense<2147483647> : vector<8xi32>
    %325 = vector.multi_reduction <minsi>, %324, %cst_115 [1] : vector<8x128xi32> to vector<8xi32>
    %326 = vector.shape_cast %325 : vector<8xi32> to vector<8x1xi32>
    %327 = vector.broadcast %326 : vector<8x1xi32> to vector<8x128xi32>
    %328 = arith.cmpi eq, %6, %327 : vector<8x128xi32>
    %329 = arith.extui %328 : vector<8x128xi1> to vector<8x128xi32>
    %330 = arith.sitofp %329 : vector<8x128xi32> to vector<8x128xf32>
    %331 = arith.truncf %330 : vector<8x128xf32> to vector<8x128xbf16>
    %c5_i32 = arith.constant 5 : i32
    %332 = arith.index_cast %c5_i32 : i32 to index
    %c0_116 = arith.constant 0 : index
    %c0_117 = arith.constant 0 : index
    %333 = vector.load %arg1[%332, %c0_116, %c0_117] : memref<7x8x128xbf16, #tpu.memory_space<vmem>>, vector<1x8x128xbf16>
    %334 = vector.shape_cast %333 : vector<1x8x128xbf16> to vector<8x128xbf16>
    %335 = arith.index_cast %c5_i32 : i32 to index
    %336 = memref.load %arg0[%335] : memref<7xi32, #tpu.memory_space<smem>>
    %c0_i32_118 = arith.constant 0 : i32
    %337 = arith.cmpi sgt, %336, %c0_i32_118 : i32
    %338 = arith.extui %337 : i1 to i32
    %c0_i32_119 = arith.constant 0 : i32
    %339 = arith.cmpi ne, %338, %c0_i32_119 : i32
    %340 = scf.if %339 -> (vector<8x128xbf16>) {
      scf.yield %334 : vector<8x128xbf16>
    } else {
      %c0_160 = arith.constant 0 : index
      %c0_161 = arith.constant 0 : index
      %460 = vector.load %arg4[%c0_160, %c0_161] : memref<128x128xbf16, #tpu.memory_space<vmem>>, vector<128x128xbf16>
      %cst_162 = arith.constant dense<0.000000e+00> : vector<8x128xf32>
      %461 = tpu.matmul %331, %460, %cst_162 {dimension_numbers = #tpu.dot_dimension_numbers<[1], [0], [0], [1], [0, 0, 1, 1], [], []>} : vector<8x128xbf16>, vector<128x128xbf16>, vector<8x128xf32> -> vector<8x128xf32>
      %462 = arith.truncf %461 : vector<8x128xf32> to vector<8x128xbf16>
      scf.yield %462 : vector<8x128xbf16>
    }
    %c0_120 = arith.constant 0 : index
    %c0_121 = arith.constant 0 : index
    %341 = vector.load %arg5[%c0_120, %c0_121] : memref<128x512xbf16, #tpu.memory_space<vmem>>, vector<128x512xbf16>
    %cst_122 = arith.constant dense<0.000000e+00> : vector<8x512xf32>
    %342 = tpu.matmul %340, %341, %cst_122 {dimension_numbers = #tpu.dot_dimension_numbers<[1], [0], [0], [1], [0, 0, 1, 1], [], []>} : vector<8x128xbf16>, vector<128x512xbf16>, vector<8x512xf32> -> vector<8x512xf32>
    %343 = arith.truncf %308 : vector<8x128xf32> to vector<8x128xbf16>
    %c0_123 = arith.constant 0 : index
    %c0_124 = arith.constant 0 : index
    %344 = vector.load %arg6[%c0_123, %c0_124] : memref<128x512xbf16, #tpu.memory_space<vmem>>, vector<128x512xbf16>
    %cst_125 = arith.constant dense<0.000000e+00> : vector<8x512xf32>
    %345 = tpu.matmul %343, %344, %cst_125 {dimension_numbers = #tpu.dot_dimension_numbers<[1], [0], [0], [1], [0, 0, 1, 1], [], []>} : vector<8x128xbf16>, vector<128x512xbf16>, vector<8x512xf32> -> vector<8x512xf32>
    %346 = arith.addf %342, %345 : vector<8x512xf32>
    %347 = arith.addf %346, %2 : vector<8x512xf32>
    %348 = vector.extract_strided_slice %347 {offsets = [0, 0], sizes = [8, 128], strides = [1, 1]} : vector<8x512xf32> to vector<8x128xf32>
    %349 = arith.negf %348 : vector<8x128xf32>
    %350 = math.exp %349 : vector<8x128xf32>
    %cst_126 = arith.constant 1.000000e+00 : f32
    %351 = vector.broadcast %cst_126 : f32 to vector<8x128xf32>
    %352 = arith.addf %351, %350 : vector<8x128xf32>
    %353 = arith.divf %351, %352 : vector<8x128xf32>
    %354 = vector.extract_strided_slice %347 {offsets = [0, 128], sizes = [8, 128], strides = [1, 1]} : vector<8x512xf32> to vector<8x128xf32>
    %355 = arith.negf %354 : vector<8x128xf32>
    %356 = math.exp %355 : vector<8x128xf32>
    %cst_127 = arith.constant 1.000000e+00 : f32
    %357 = vector.broadcast %cst_127 : f32 to vector<8x128xf32>
    %358 = arith.addf %357, %356 : vector<8x128xf32>
    %359 = arith.divf %357, %358 : vector<8x128xf32>
    %360 = vector.extract_strided_slice %347 {offsets = [0, 256], sizes = [8, 128], strides = [1, 1]} : vector<8x512xf32> to vector<8x128xf32>
    %361 = math.tanh %360 : vector<8x128xf32>
    %362 = vector.extract_strided_slice %347 {offsets = [0, 384], sizes = [8, 128], strides = [1, 1]} : vector<8x512xf32> to vector<8x128xf32>
    %363 = arith.negf %362 : vector<8x128xf32>
    %364 = math.exp %363 : vector<8x128xf32>
    %cst_128 = arith.constant 1.000000e+00 : f32
    %365 = vector.broadcast %cst_128 : f32 to vector<8x128xf32>
    %366 = arith.addf %365, %364 : vector<8x128xf32>
    %367 = arith.divf %365, %366 : vector<8x128xf32>
    %368 = arith.mulf %359, %306 : vector<8x128xf32>
    %369 = arith.mulf %353, %361 : vector<8x128xf32>
    %370 = arith.addf %368, %369 : vector<8x128xf32>
    %371 = math.tanh %370 : vector<8x128xf32>
    %372 = arith.mulf %367, %371 : vector<8x128xf32>
    %373 = arith.truncf %372 : vector<8x128xf32> to vector<8x128xbf16>
    %c0_129 = arith.constant 0 : index
    %c0_130 = arith.constant 0 : index
    %374 = vector.load %arg8[%c0_129, %c0_130] : memref<128x128xbf16, #tpu.memory_space<vmem>>, vector<128x128xbf16>
    %cst_131 = arith.constant dense<0.000000e+00> : vector<8x128xf32>
    %375 = tpu.matmul %373, %374, %cst_131 {dimension_numbers = #tpu.dot_dimension_numbers<[1], [0], [0], [1], [0, 0, 1, 1], [], []>} : vector<8x128xbf16>, vector<128x128xbf16>, vector<8x128xf32> -> vector<8x128xf32>
    %376 = arith.addf %375, %5 : vector<8x128xf32>
    %377 = arith.index_cast %c5_i32 : i32 to index
    %c0_132 = arith.constant 0 : index
    %c0_133 = arith.constant 0 : index
    %378 = vector.load %arg10[%377, %c0_132, %c0_133] : memref<7x8x128xf32, #tpu.memory_space<vmem>>, vector<1x8x128xf32>
    %379 = vector.shape_cast %378 : vector<1x8x128xf32> to vector<8x128xf32>
    %380 = vector.shape_cast %376 : vector<8x128xf32> to vector<1x8x128xf32>
    tpu.vector_store %arg10[%377, %c0_132, %c0_133], %380 {strides = array<i32>} : memref<7x8x128xf32, #tpu.memory_space<vmem>>, vector<1x8x128xf32>,
    %cst_134 = arith.constant 0xFF800000 : f32
    %381 = vector.broadcast %cst_134 : f32 to vector<8x128xf32>
    %382 = arith.select %8, %376, %381 : vector<8x128xi1>, vector<8x128xf32>
    %cst_135 = arith.constant dense<0xFF800000> : vector<8xf32>
    %383 = vector.multi_reduction <maximumf>, %382, %cst_135 [1] : vector<8x128xf32> to vector<8xf32>
    %384 = vector.shape_cast %383 : vector<8xf32> to vector<8x1xf32>
    %385 = vector.broadcast %384 : vector<8x1xf32> to vector<8x128xf32>
    %386 = arith.cmpf oeq, %382, %385 : vector<8x128xf32>
    %c128_i32_136 = arith.constant 128 : i32
    %387 = vector.broadcast %c128_i32_136 : i32 to vector<8x128xi32>
    %388 = arith.select %386, %6, %387 : vector<8x128xi1>, vector<8x128xi32>
    %cst_137 = arith.constant dense<2147483647> : vector<8xi32>
    %389 = vector.multi_reduction <minsi>, %388, %cst_137 [1] : vector<8x128xi32> to vector<8xi32>
    %390 = vector.shape_cast %389 : vector<8xi32> to vector<8x1xi32>
    %391 = vector.broadcast %390 : vector<8x1xi32> to vector<8x128xi32>
    %392 = arith.cmpi eq, %6, %391 : vector<8x128xi32>
    %393 = arith.extui %392 : vector<8x128xi1> to vector<8x128xi32>
    %394 = arith.sitofp %393 : vector<8x128xi32> to vector<8x128xf32>
    %395 = arith.truncf %394 : vector<8x128xf32> to vector<8x128xbf16>
    %c6_i32 = arith.constant 6 : i32
    %396 = arith.index_cast %c6_i32 : i32 to index
    %c0_138 = arith.constant 0 : index
    %c0_139 = arith.constant 0 : index
    %397 = vector.load %arg1[%396, %c0_138, %c0_139] : memref<7x8x128xbf16, #tpu.memory_space<vmem>>, vector<1x8x128xbf16>
    %398 = vector.shape_cast %397 : vector<1x8x128xbf16> to vector<8x128xbf16>
    %399 = arith.index_cast %c6_i32 : i32 to index
    %400 = memref.load %arg0[%399] : memref<7xi32, #tpu.memory_space<smem>>
    %c0_i32_140 = arith.constant 0 : i32
    %401 = arith.cmpi sgt, %400, %c0_i32_140 : i32
    %402 = arith.extui %401 : i1 to i32
    %c0_i32_141 = arith.constant 0 : i32
    %403 = arith.cmpi ne, %402, %c0_i32_141 : i32
    %404 = scf.if %403 -> (vector<8x128xbf16>) {
      scf.yield %398 : vector<8x128xbf16>
    } else {
      %c0_160 = arith.constant 0 : index
      %c0_161 = arith.constant 0 : index
      %460 = vector.load %arg4[%c0_160, %c0_161] : memref<128x128xbf16, #tpu.memory_space<vmem>>, vector<128x128xbf16>
      %cst_162 = arith.constant dense<0.000000e+00> : vector<8x128xf32>
      %461 = tpu.matmul %395, %460, %cst_162 {dimension_numbers = #tpu.dot_dimension_numbers<[1], [0], [0], [1], [0, 0, 1, 1], [], []>} : vector<8x128xbf16>, vector<128x128xbf16>, vector<8x128xf32> -> vector<8x128xf32>
      %462 = arith.truncf %461 : vector<8x128xf32> to vector<8x128xbf16>
      scf.yield %462 : vector<8x128xbf16>
    }
    %c0_142 = arith.constant 0 : index
    %c0_143 = arith.constant 0 : index
    %405 = vector.load %arg5[%c0_142, %c0_143] : memref<128x512xbf16, #tpu.memory_space<vmem>>, vector<128x512xbf16>
    %cst_144 = arith.constant dense<0.000000e+00> : vector<8x512xf32>
    %406 = tpu.matmul %404, %405, %cst_144 {dimension_numbers = #tpu.dot_dimension_numbers<[1], [0], [0], [1], [0, 0, 1, 1], [], []>} : vector<8x128xbf16>, vector<128x512xbf16>, vector<8x512xf32> -> vector<8x512xf32>
    %407 = arith.truncf %372 : vector<8x128xf32> to vector<8x128xbf16>
    %c0_145 = arith.constant 0 : index
    %c0_146 = arith.constant 0 : index
    %408 = vector.load %arg6[%c0_145, %c0_146] : memref<128x512xbf16, #tpu.memory_space<vmem>>, vector<128x512xbf16>
    %cst_147 = arith.constant dense<0.000000e+00> : vector<8x512xf32>
    %409 = tpu.matmul %407, %408, %cst_147 {dimension_numbers = #tpu.dot_dimension_numbers<[1], [0], [0], [1], [0, 0, 1, 1], [], []>} : vector<8x128xbf16>, vector<128x512xbf16>, vector<8x512xf32> -> vector<8x512xf32>
    %410 = arith.addf %406, %409 : vector<8x512xf32>
    %411 = arith.addf %410, %2 : vector<8x512xf32>
    %412 = vector.extract_strided_slice %411 {offsets = [0, 0], sizes = [8, 128], strides = [1, 1]} : vector<8x512xf32> to vector<8x128xf32>
    %413 = arith.negf %412 : vector<8x128xf32>
    %414 = math.exp %413 : vector<8x128xf32>
    %cst_148 = arith.constant 1.000000e+00 : f32
    %415 = vector.broadcast %cst_148 : f32 to vector<8x128xf32>
    %416 = arith.addf %415, %414 : vector<8x128xf32>
    %417 = arith.divf %415, %416 : vector<8x128xf32>
    %418 = vector.extract_strided_slice %411 {offsets = [0, 128], sizes = [8, 128], strides = [1, 1]} : vector<8x512xf32> to vector<8x128xf32>
    %419 = arith.negf %418 : vector<8x128xf32>
    %420 = math.exp %419 : vector<8x128xf32>
    %cst_149 = arith.constant 1.000000e+00 : f32
    %421 = vector.broadcast %cst_149 : f32 to vector<8x128xf32>
    %422 = arith.addf %421, %420 : vector<8x128xf32>
    %423 = arith.divf %421, %422 : vector<8x128xf32>
    %424 = vector.extract_strided_slice %411 {offsets = [0, 256], sizes = [8, 128], strides = [1, 1]} : vector<8x512xf32> to vector<8x128xf32>
    %425 = math.tanh %424 : vector<8x128xf32>
    %426 = vector.extract_strided_slice %411 {offsets = [0, 384], sizes = [8, 128], strides = [1, 1]} : vector<8x512xf32> to vector<8x128xf32>
    %427 = arith.negf %426 : vector<8x128xf32>
    %428 = math.exp %427 : vector<8x128xf32>
    %cst_150 = arith.constant 1.000000e+00 : f32
    %429 = vector.broadcast %cst_150 : f32 to vector<8x128xf32>
    %430 = arith.addf %429, %428 : vector<8x128xf32>
    %431 = arith.divf %429, %430 : vector<8x128xf32>
    %432 = arith.mulf %423, %370 : vector<8x128xf32>
    %433 = arith.mulf %417, %425 : vector<8x128xf32>
    %434 = arith.addf %432, %433 : vector<8x128xf32>
    %435 = math.tanh %434 : vector<8x128xf32>
    %436 = arith.mulf %431, %435 : vector<8x128xf32>
    %437 = arith.truncf %436 : vector<8x128xf32> to vector<8x128xbf16>
    %c0_151 = arith.constant 0 : index
    %c0_152 = arith.constant 0 : index
    %438 = vector.load %arg8[%c0_151, %c0_152] : memref<128x128xbf16, #tpu.memory_space<vmem>>, vector<128x128xbf16>
    %cst_153 = arith.constant dense<0.000000e+00> : vector<8x128xf32>
    %439 = tpu.matmul %437, %438, %cst_153 {dimension_numbers = #tpu.dot_dimension_numbers<[1], [0], [0], [1], [0, 0, 1, 1], [], []>} : vector<8x128xbf16>, vector<128x128xbf16>, vector<8x128xf32> -> vector<8x128xf32>
    %440 = arith.addf %439, %5 : vector<8x128xf32>
    %441 = arith.index_cast %c6_i32 : i32 to index
    %c0_154 = arith.constant 0 : index
    %c0_155 = arith.constant 0 : index
    %442 = vector.load %arg10[%441, %c0_154, %c0_155] : memref<7x8x128xf32, #tpu.memory_space<vmem>>, vector<1x8x128xf32>
    %443 = vector.shape_cast %442 : vector<1x8x128xf32> to vector<8x128xf32>
    %444 = vector.shape_cast %440 : vector<8x128xf32> to vector<1x8x128xf32>
    tpu.vector_store %arg10[%441, %c0_154, %c0_155], %444 {strides = array<i32>} : memref<7x8x128xf32, #tpu.memory_space<vmem>>, vector<1x8x128xf32>,
    %cst_156 = arith.constant 0xFF800000 : f32
    %445 = vector.broadcast %cst_156 : f32 to vector<8x128xf32>
    %446 = arith.select %8, %440, %445 : vector<8x128xi1>, vector<8x128xf32>
    %cst_157 = arith.constant dense<0xFF800000> : vector<8xf32>
    %447 = vector.multi_reduction <maximumf>, %446, %cst_157 [1] : vector<8x128xf32> to vector<8xf32>
    %448 = vector.shape_cast %447 : vector<8xf32> to vector<8x1xf32>
    %449 = vector.broadcast %448 : vector<8x1xf32> to vector<8x128xf32>
    %450 = arith.cmpf oeq, %446, %449 : vector<8x128xf32>
    %c128_i32_158 = arith.constant 128 : i32
    %451 = vector.broadcast %c128_i32_158 : i32 to vector<8x128xi32>
    %452 = arith.select %450, %6, %451 : vector<8x128xi1>, vector<8x128xi32>
    %cst_159 = arith.constant dense<2147483647> : vector<8xi32>
    %453 = vector.multi_reduction <minsi>, %452, %cst_159 [1] : vector<8x128xi32> to vector<8xi32>
    %454 = vector.shape_cast %453 : vector<8xi32> to vector<8x1xi32>
    %455 = vector.broadcast %454 : vector<8x1xi32> to vector<8x128xi32>
    %456 = arith.cmpi eq, %6, %455 : vector<8x128xi32>
    %457 = arith.extui %456 : vector<8x128xi1> to vector<8x128xi32>
    %458 = arith.sitofp %457 : vector<8x128xi32> to vector<8x128xf32>
    %459 = arith.truncf %458 : vector<8x128xf32> to vector<8x128xbf16>
    %c7_i32 = arith.constant 7 : i32
    return
  }
}

</mosaic_0001>

<llo_original>
// kernel: forward.2
$region0: #{forward.2}
  #allocation0 [shape = 'u32[]', space=smem, size = 0x4, offset = 0x4, fixed_abs, tag = 'smem constant byte address 0x4 - core index']
  #allocation1 [shape = 'u32[72,128]{1,0:T(1,128)}', space=vmem, size = 0x9000, scoped, tag = 'internal scratch']
  %s0 = inlined_call_operand.vmem [shape: bf16[8,8,128], index: 0, kind: input, shape index: {}]
  %s1 = inlined_call_operand.hbm [shape: bf16[128,512], index: 1, kind: input, shape index: {}]
  %s2 = inlined_call_operand.hbm [shape: bf16[128,512], index: 2, kind: input, shape index: {}]
  %s3 = inlined_call_operand.vmem [shape: f32[1,512], index: 3, kind: input, shape index: {}]
  %s4 = inlined_call_operand.vmem [shape: f32[8,128], index: 4, kind: output, shape index: {0}]
  %s5 = inlined_call_operand.vmem [shape: f32[8,128], index: 5, kind: output, shape index: {1}]
  %6 = xla_tuple %s4, %s5
  %s7 = sld [smem:[#allocation0]]
  $region69: #{forward.2} parent=0
    _
  %s9 = ssub.s32 1, %s7
  %s10 = scalar_select 0, %s9, %s7
  $region1: #{forward.2} parent=0
    #allocation2 [shape = 'u8[131072]{0}', space=vmem, size = 0x20000, scoped, tag = 'input window, operand 1, single buffered']
    #allocation3 [shape = 's32[2]{0}', space=sflag, size = 0x8, scoped, tag = 'scoped memory for forward.2']
    #allocation4 [shape = 'u8[131072]{0}', space=vmem, size = 0x20000, scoped, tag = 'input window, operand 2, single buffered']
    #allocation5 [shape = 's32[1]{0}', space=sflag, size = 0x4, scoped, tag = 'scoped memory for forward.2']
    %11 = vsyncpa [#allocation3], 0
    %12 = vsyncpa [#allocation5], 0
    loop: start=0, step=1, limit=10
    $region2: #{forward.2} parent=1 // loop_pre_header
      _
    $region3: #{forward.2} parent=1 // loop_header
      %s14 = sphi 0, %s18
      %p15 = scmp.ge.s32.totalorder %s14, 10
      %s24 = sphi 0, %s26
      %s27 = sphi 0, %s24
      %s28 = sphi 0, %s27
      %s44 = sphi 0, %s28
      %s48 = sphi 0, %s48
      %s50 = sphi 0, %s48
      %s51 = sphi 0, %s50
      %s65 = sphi 0, %s51
      %s69 = sphi 0, %s69
      %s71 = sphi 0, %s69
      %s72 = sphi 0, %s71
      %s86 = sphi 0, %s72
      %s90 = sphi 0, %s90
      %s92 = sphi 0, %s90
      %s93 = sphi 0, %s92
      %s107 = sphi 0, %s93
      %s111 = sphi 0, %s111
      %s113 = sphi 0, %s111
      %s114 = sphi 0, %s113
      %s128 = sphi 0, %s114
      %s132 = sphi 0, %s132
      %s134 = sphi 0, %s132
      %s135 = sphi 0, %s134
      %s149 = sphi 0, %s135
    $region4: #{forward.2} parent=1 // loop_header_branch
      %17 = sbr.rel (%p15) target = $region8
    $region5: #{forward.2} parent=1 // loop_body
      %s19 = ssub.s32 %s14, 1
      %s20 = ssub.s32 %s14, 2
      %s21 = sadd.s32 %s14, 1
      %s22 = ssub.s32 %s14, %s21
      %p23 = scmp.eq.s32.totalorder %s22, 0
      %s25 = sadd.s32 %s24, 1
      %s26 = scalar_select %p23, %s24, %s25
      %p29 = pneg %p23
      %p30 = scmp.eq.s32.totalorder %s14, 7
      %p31 = por %p29, %p30
      %p32 = scmp.ne.s32.totalorder %s24, %s27
      %p33 = scmp.eq.s32.totalorder %s14, 0
      %p34 = por %p32, %p33
      %p35 = scmp.ne.s32.totalorder %s24, %s27
      %p36 = scmp.eq.s32.totalorder %s19, 7
      %p37 = por %p35, %p36
      %p38 = scmp.ne.s32.totalorder %s27, %s28
      %p39 = scmp.eq.s32.totalorder %s19, 0
      %p40 = por %p38, %p39
      %p41 = scmp.ne.s32.totalorder %s27, %s28
      %p42 = scmp.eq.s32.totalorder %s20, 7
      %p43 = por %p41, %p42
      %p45 = scmp.ne.s32.totalorder %s28, %s44
      %p46 = scmp.eq.s32.totalorder %s20, 0
      %p47 = por %p45, %p46
      %s49 = sadd.s32 %s48, 1
      %p52 = scmp.eq.s32.totalorder %s14, 7
      %p53 = scmp.ne.s32.totalorder %s48, %s50
      %p54 = scmp.eq.s32.totalorder %s14, 0
      %p55 = por %p53, %p54
      %p56 = scmp.ne.s32.totalorder %s48, %s50
      %p57 = scmp.eq.s32.totalorder %s19, 7
      %p58 = por %p56, %p57
      %p59 = scmp.ne.s32.totalorder %s50, %s51
      %p60 = scmp.eq.s32.totalorder %s19, 0
      %p61 = por %p59, %p60
      %p62 = scmp.ne.s32.totalorder %s50, %s51
      %p63 = scmp.eq.s32.totalorder %s20, 7
      %p64 = por %p62, %p63
      %p66 = scmp.ne.s32.totalorder %s51, %s65
      %p67 = scmp.eq.s32.totalorder %s20, 0
      %p68 = por %p66, %p67
      %s70 = sadd.s32 %s69, 1
      %p73 = scmp.eq.s32.totalorder %s14, 7
      %p74 = scmp.ne.s32.totalorder %s69, %s71
      %p75 = scmp.eq.s32.totalorder %s14, 0
      %p76 = por %p74, %p75
      %p77 = scmp.ne.s32.totalorder %s69, %s71
      %p78 = scmp.eq.s32.totalorder %s19, 7
      %p79 = por %p77, %p78
      %p80 = scmp.ne.s32.totalorder %s71, %s72
      %p81 = scmp.eq.s32.totalorder %s19, 0
      %p82 = por %p80, %p81
      %p83 = scmp.ne.s32.totalorder %s71, %s72
      %p84 = scmp.eq.s32.totalorder %s20, 7
      %p85 = por %p83, %p84
      %p87 = scmp.ne.s32.totalorder %s72, %s86
      %p88 = scmp.eq.s32.totalorder %s20, 0
      %p89 = por %p87, %p88
      %s91 = sadd.s32 %s90, 1
      %p94 = scmp.eq.s32.totalorder %s14, 7
      %p95 = scmp.ne.s32.totalorder %s90, %s92
      %p96 = scmp.eq.s32.totalorder %s14, 0
      %p97 = por %p95, %p96
      %p98 = scmp.ne.s32.totalorder %s90, %s92
      %p99 = scmp.eq.s32.totalorder %s19, 7
      %p100 = por %p98, %p99
      %p101 = scmp.ne.s32.totalorder %s92, %s93
      %p102 = scmp.eq.s32.totalorder %s19, 0
      %p103 = por %p101, %p102
      %p104 = scmp.ne.s32.totalorder %s92, %s93
      %p105 = scmp.eq.s32.totalorder %s20, 7
      %p106 = por %p104, %p105
      %p108 = scmp.ne.s32.totalorder %s93, %s107
      %p109 = scmp.eq.s32.totalorder %s20, 0
      %p110 = por %p108, %p109
      %s112 = sadd.s32 %s111, 1
      %p115 = scmp.eq.s32.totalorder %s14, 7
      %p116 = scmp.ne.s32.totalorder %s111, %s113
      %p117 = scmp.eq.s32.totalorder %s14, 0
      %p118 = por %p116, %p117
      %p119 = scmp.ne.s32.totalorder %s111, %s113
      %p120 = scmp.eq.s32.totalorder %s19, 7
      %p121 = por %p119, %p120
      %p122 = scmp.ne.s32.totalorder %s113, %s114
      %p123 = scmp.eq.s32.totalorder %s19, 0
      %p124 = por %p122, %p123
      %p125 = scmp.ne.s32.totalorder %s113, %s114
      %p126 = scmp.eq.s32.totalorder %s20, 7
      %p127 = por %p125, %p126
      %p129 = scmp.ne.s32.totalorder %s114, %s128
      %p130 = scmp.eq.s32.totalorder %s20, 0
      %p131 = por %p129, %p130
      %s133 = sadd.s32 %s132, 1
      %p136 = scmp.eq.s32.totalorder %s14, 7
      %p137 = scmp.ne.s32.totalorder %s132, %s134
      %p138 = scmp.eq.s32.totalorder %s14, 0
      %p139 = por %p137, %p138
      %p140 = scmp.ne.s32.totalorder %s132, %s134
      %p141 = scmp.eq.s32.totalorder %s19, 7
      %p142 = por %p140, %p141
      %p143 = scmp.ne.s32.totalorder %s134, %s135
      %p144 = scmp.eq.s32.totalorder %s19, 0
      %p145 = por %p143, %p144
      %p146 = scmp.ne.s32.totalorder %s134, %s135
      %p147 = scmp.eq.s32.totalorder %s20, 7
      %p148 = por %p146, %p147
      %p150 = scmp.ne.s32.totalorder %s135, %s149
      %p151 = scmp.eq.s32.totalorder %s20, 0
      %p152 = por %p150, %p151
      %p153 = scmp.le.s32.totalorder 1, %s14
      %p154 = scmp.lt.s32.totalorder %s14, 9
      %p155 = pnand %p153, %p154
      %p156 = pneg %p155
      // Predicated region
      $region9: #{forward.2} parent=5 // pred_check
        _
      $region10: #{forward.2} parent=5 // pred_check_branch
        %158 = sbr.rel (%p155) target = $region12
      $region11: #{forward.2} parent=5 // pred_region
        %s159 = ssub.s32 %s14, 1
        // Predicated region
        $region13: #{forward.2} parent=11 // pred_check
          %p160 = pneg %p61
        $region14: #{forward.2} parent=11 // pred_check_branch
          %162 = sbr.rel (%p160) target = $region16
        $region15: #{forward.2} parent=11 // pred_region
          %164 = vsyncadd [#allocation3], 0
          %s165 = sshll.u32 %s1, 4
          %s166 = int_to_ptr.hbm [resolvable:$true] %s165
          %s167 = sshll.u32 [#allocation2], 4
          %s168 = int_to_ptr.vmem [resolvable:$true] %s167
          %173 = dma.hbm_to_vmem [thread:$0]  %s166, 4096, %s168, [#allocation3], 256, 256, 16
        $region16: #{forward.2} parent=11 // pred_fallthru
          _
        // Predicated region
        $region17: #{forward.2} parent=11 // pred_check
          %p174 = pneg %p82
        $region18: #{forward.2} parent=11 // pred_check_branch
          %176 = sbr.rel (%p174) target = $region20
        $region19: #{forward.2} parent=11 // pred_region
          %178 = vsyncadd [#allocation5], 0
          %s179 = sshll.u32 %s2, 4
          %s180 = int_to_ptr.hbm [resolvable:$true] %s179
          %s181 = sshll.u32 [#allocation4], 4
          %s182 = int_to_ptr.vmem [resolvable:$true] %s181
          %187 = dma.hbm_to_vmem [thread:$0]  %s180, 4096, %s182, [#allocation5], 256, 256, 16
        $region20: #{forward.2} parent=11 // pred_fallthru
          _
        // Predicated region
        $region21: #{forward.2} parent=11 // pred_check
          %p188 = pneg %p103
        $region22: #{forward.2} parent=11 // pred_check_branch
          %190 = sbr.rel (%p188) target = $region24
        $region23: #{forward.2} parent=11 // pred_region
          _
        $region24: #{forward.2} parent=11 // pred_fallthru
          _
      $region12: #{forward.2} parent=5 // pred_fallthru
        _
      %p191 = scmp.lt.s32.totalorder %s14, 8
      // Predicated region
      $region25: #{forward.2} parent=5 // pred_check
        %p192 = pneg %p191
      $region26: #{forward.2} parent=5 // pred_check_branch
        %194 = sbr.rel (%p192) target = $region28
      $region27: #{forward.2} parent=5 // pred_region
        // Predicated region
        $region29: #{forward.2} parent=27 // pred_check
          %p195 = pneg %p34
        $region30: #{forward.2} parent=27 // pred_check_branch
          %197 = sbr.rel (%p195) target = $region32
        $region31: #{forward.2} parent=27 // pred_region
          %p198 = scmp.lt.s32.totalorder %s14, 7
          %s199 = scalar_select %p198, %s14, 7
          %s200 = smul.addr %s199, 4
          %s201 = scalar_lea.vmem %s0, %s200
        $region32: #{forward.2} parent=27 // pred_fallthru
          _
      $region28: #{forward.2} parent=5 // pred_fallthru
        _
      %p202 = scmp.le.s32.totalorder 1, %s14
      %p203 = scmp.lt.s32.totalorder %s14, 9
      %p204 = pnand %p202, %p203
      %p205 = pneg %p204
      // Predicated region
      $region33: #{forward.2} parent=5 // pred_check
        _
      $region34: #{forward.2} parent=5 // pred_check_branch
        %207 = sbr.rel (%p204) target = $region36
      $region35: #{forward.2} parent=5 // pred_region
        %s208 = ssub.s32 %s14, 1
        // Predicated region
        $region37: #{forward.2} parent=35 // pred_check
          %p209 = pneg %p61
        $region38: #{forward.2} parent=35 // pred_check_branch
          %211 = sbr.rel (%p209) target = $region40
        $region39: #{forward.2} parent=35 // pred_region
          %213 = dma.done [#allocation3], 4096
        $region40: #{forward.2} parent=35 // pred_fallthru
          _
        // Predicated region
        $region41: #{forward.2} parent=35 // pred_check
          %p214 = pneg %p82
        $region42: #{forward.2} parent=35 // pred_check_branch
          %216 = sbr.rel (%p214) target = $region44
        $region43: #{forward.2} parent=35 // pred_region
          %218 = dma.done [#allocation5], 4096
        $region44: #{forward.2} parent=35 // pred_fallthru
          _
        %p219 = scmp.lt.s32.totalorder %s19, 7
        %s220 = scalar_select %p219, %s19, 7
        %s221 = smul.addr %s220, 4
        %s222 = scalar_lea.vmem %s0, %s221
        %p223 = pneg %p40
        %p224 = pneg %p37
        %p225 = pneg %p61
        %p226 = pneg %p58
        %p227 = pneg %p82
        %p228 = pneg %p79
        %p229 = pneg %p103
        %p230 = pneg %p100
        %p231 = pneg %p124
        %p232 = pneg %p121
        %p233 = pneg %p145
        %p234 = pneg %p142
        %p235 = scmp.lt.s32.totalorder %s19, 7
        %s236 = scalar_select %p235, %s19, 7
        %s237 = smul.addr %s236, 4
        %s238 = scalar_lea.vmem %s0, %s237
        %p239 = scmp.eq.s32.totalorder %s19, 0
        // Predicated region
        $region45: #{forward.2} parent=35 // pred_check
          %p240 = pneg %p239
        $region46: #{forward.2} parent=35 // pred_check_branch
          %242 = sbr.rel (%p240) target = $region48
        $region47: #{forward.2} parent=35 // pred_region
          %243 = vst [vmem:[%s4] sm:$0xff] 0.0
          %244 = vst [vmem:[%s5] sm:$0xff] 0.0
        $region48: #{forward.2} parent=35 // pred_fallthru
          _
        %v245 = vld [vmem:[%s238] sm:$0xf]
        %v246 = vld [vmem:[%s4] sm:$0xff]
        %v247 = vld [vmem:[%s5] sm:$0xff]
        %v248 = vld [vmem:[#allocation2] sm:$0xff]
        %v249 = vld [vmem:[#allocation2 + $0x8] sm:$0xff]
        %v250 = vld [vmem:[#allocation2 + $0x10] sm:$0xff]
        %v251 = vld [vmem:[#allocation2 + $0x18] sm:$0xff]
        %v252 = vld [vmem:[#allocation2 + $0x20] sm:$0xff]
        %v253 = vld [vmem:[#allocation2 + $0x28] sm:$0xff]
        %v254 = vld [vmem:[#allocation2 + $0x30] sm:$0xff]
        %v255 = vld [vmem:[#allocation2 + $0x38] sm:$0xff]
        %v256 = vld [vmem:[#allocation2 + $0x40] sm:$0xff]
        %v257 = vld [vmem:[#allocation2 + $0x48] sm:$0xff]
        %v258 = vld [vmem:[#allocation2 + $0x50] sm:$0xff]
        %v259 = vld [vmem:[#allocation2 + $0x58] sm:$0xff]
        %v260 = vld [vmem:[#allocation2 + $0x60] sm:$0xff]
        %v261 = vld [vmem:[#allocation2 + $0x68] sm:$0xff]
        %v262 = vld [vmem:[#allocation2 + $0x70] sm:$0xff]
        %v263 = vld [vmem:[#allocation2 + $0x78] sm:$0xff]
        %v264 = vld [vmem:[#allocation2 + $0x80] sm:$0xff]
        %v265 = vld [vmem:[#allocation2 + $0x88] sm:$0xff]
        %v266 = vld [vmem:[#allocation2 + $0x90] sm:$0xff]
        %v267 = vld [vmem:[#allocation2 + $0x98] sm:$0xff]
        %v268 = vld [vmem:[#allocation2 + $0xa0] sm:$0xff]
        %v269 = vld [vmem:[#allocation2 + $0xa8] sm:$0xff]
        %v270 = vld [vmem:[#allocation2 + $0xb0] sm:$0xff]
        %v271 = vld [vmem:[#allocation2 + $0xb8] sm:$0xff]
        %v272 = vld [vmem:[#allocation2 + $0xc0] sm:$0xff]
        %v273 = vld [vmem:[#allocation2 + $0xc8] sm:$0xff]
        %v274 = vld [vmem:[#allocation2 + $0xd0] sm:$0xff]
        %v275 = vld [vmem:[#allocation2 + $0xd8] sm:$0xff]
        %v276 = vld [vmem:[#allocation2 + $0xe0] sm:$0xff]
        %v277 = vld [vmem:[#allocation2 + $0xe8] sm:$0xff]
        %v278 = vld [vmem:[#allocation2 + $0xf0] sm:$0xff]
        %v279 = vld [vmem:[#allocation2 + $0xf8] sm:$0xff]
        %v280 = vpack.c.bf16 %v246, %v246
        %v281 = vld [vmem:[#allocation4] sm:$0xff]
        %v282 = vld [vmem:[#allocation4 + $0x8] sm:$0xff]
        %v283 = vld [vmem:[#allocation4 + $0x10] sm:$0xff]
        %v284 = vld [vmem:[#allocation4 + $0x18] sm:$0xff]
        %v285 = vld [vmem:[#allocation4 + $0x20] sm:$0xff]
        %v286 = vld [vmem:[#allocation4 + $0x28] sm:$0xff]
        %v287 = vld [vmem:[#allocation4 + $0x30] sm:$0xff]
        %v288 = vld [vmem:[#allocation4 + $0x38] sm:$0xff]
        %v289 = vld [vmem:[#allocation4 + $0x40] sm:$0xff]
        %v290 = vld [vmem:[#allocation4 + $0x48] sm:$0xff]
        %v291 = vld [vmem:[#allocation4 + $0x50] sm:$0xff]
        %v292 = vld [vmem:[#allocation4 + $0x58] sm:$0xff]
        %v293 = vld [vmem:[#allocation4 + $0x60] sm:$0xff]
        %v294 = vld [vmem:[#allocation4 + $0x68] sm:$0xff]
        %v295 = vld [vmem:[#allocation4 + $0x70] sm:$0xff]
        %v296 = vld [vmem:[#allocation4 + $0x78] sm:$0xff]
        %v297 = vld [vmem:[#allocation4 + $0x80] sm:$0xff]
        %v298 = vld [vmem:[#allocation4 + $0x88] sm:$0xff]
        %v299 = vld [vmem:[#allocation4 + $0x90] sm:$0xff]
        %v300 = vld [vmem:[#allocation4 + $0x98] sm:$0xff]
        %v301 = vld [vmem:[#allocation4 + $0xa0] sm:$0xff]
        %v302 = vld [vmem:[#allocation4 + $0xa8] sm:$0xff]
        %v303 = vld [vmem:[#allocation4 + $0xb0] sm:$0xff]
        %v304 = vld [vmem:[#allocation4 + $0xb8] sm:$0xff]
        %v305 = vld [vmem:[#allocation4 + $0xc0] sm:$0xff]
        %v306 = vld [vmem:[#allocation4 + $0xc8] sm:$0xff]
        %v307 = vld [vmem:[#allocation4 + $0xd0] sm:$0xff]
        %v308 = vld [vmem:[#allocation4 + $0xd8] sm:$0xff]
        %v309 = vld [vmem:[#allocation4 + $0xe0] sm:$0xff]
        %v310 = vld [vmem:[#allocation4 + $0xe8] sm:$0xff]
        %v311 = vld [vmem:[#allocation4 + $0xf0] sm:$0xff]
        %v312 = vld [vmem:[#allocation4 + $0xf8] sm:$0xff]
        %v345 = vunpack.c.l.b16 %v281
        %v346 = vunpack.c.h.b16 %v281
        %v347 = vunpack.c.l.b16 %v282
        %v348 = vunpack.c.h.b16 %v282
        %v349 = vunpack.c.l.b16 %v283
        %v350 = vunpack.c.h.b16 %v283
        %v351 = vunpack.c.l.b16 %v284
        %v352 = vunpack.c.h.b16 %v284
        %v353 = vunpack.c.l.b16 %v285
        %v354 = vunpack.c.h.b16 %v285
        %v355 = vunpack.c.l.b16 %v286
        %v356 = vunpack.c.h.b16 %v286
        %v357 = vunpack.c.l.b16 %v287
        %v358 = vunpack.c.h.b16 %v287
        %v359 = vunpack.c.l.b16 %v288
        %v360 = vunpack.c.h.b16 %v288
        %v361 = vunpack.c.l.b16 %v289
        %v362 = vunpack.c.h.b16 %v289
        %v363 = vunpack.c.l.b16 %v290
        %v364 = vunpack.c.h.b16 %v290
        %v365 = vunpack.c.l.b16 %v291
        %v366 = vunpack.c.h.b16 %v291
        %v367 = vunpack.c.l.b16 %v292
        %v368 = vunpack.c.h.b16 %v292
        %v369 = vunpack.c.l.b16 %v293
        %v370 = vunpack.c.h.b16 %v293
        %v371 = vunpack.c.l.b16 %v294
        %v372 = vunpack.c.h.b16 %v294
        %v373 = vunpack.c.l.b16 %v295
        %v374 = vunpack.c.h.b16 %v295
        %v375 = vunpack.c.l.b16 %v296
        %v376 = vunpack.c.h.b16 %v296
        %v377 = vunpack.c.l.b16 %v297
        %v378 = vunpack.c.h.b16 %v297
        %v379 = vunpack.c.l.b16 %v298
        %v380 = vunpack.c.h.b16 %v298
        %v381 = vunpack.c.l.b16 %v299
        %v382 = vunpack.c.h.b16 %v299
        %v383 = vunpack.c.l.b16 %v300
        %v384 = vunpack.c.h.b16 %v300
        %v385 = vunpack.c.l.b16 %v301
        %v386 = vunpack.c.h.b16 %v301
        %v387 = vunpack.c.l.b16 %v302
        %v388 = vunpack.c.h.b16 %v302
        %v389 = vunpack.c.l.b16 %v303
        %v390 = vunpack.c.h.b16 %v303
        %v391 = vunpack.c.l.b16 %v304
        %v392 = vunpack.c.h.b16 %v304
        %v393 = vunpack.c.l.b16 %v305
        %v394 = vunpack.c.h.b16 %v305
        %v395 = vunpack.c.l.b16 %v306
        %v396 = vunpack.c.h.b16 %v306
        %v397 = vunpack.c.l.b16 %v307
        %v398 = vunpack.c.h.b16 %v307
        %v399 = vunpack.c.l.b16 %v308
        %v400 = vunpack.c.h.b16 %v308
        %v401 = vunpack.c.l.b16 %v309
        %v402 = vunpack.c.h.b16 %v309
        %v403 = vunpack.c.l.b16 %v310
        %v404 = vunpack.c.h.b16 %v310
        %v405 = vunpack.c.l.b16 %v311
        %v406 = vunpack.c.h.b16 %v311
        %v407 = vunpack.c.l.b16 %v312
        %v408 = vunpack.c.h.b16 %v312
        %v409 = vpack.c.b16 %v349, %v345
        %v410 = vpack.c.b16 %v350, %v346
        %v411 = vpack.c.b16 %v351, %v347
        %v412 = vpack.c.b16 %v352, %v348
        %v413 = vpack.c.b16 %v357, %v353
        %v414 = vpack.c.b16 %v358, %v354
        %v415 = vpack.c.b16 %v359, %v355
        %v416 = vpack.c.b16 %v360, %v356
        %v417 = vpack.c.b16 %v365, %v361
        %v418 = vpack.c.b16 %v366, %v362
        %v419 = vpack.c.b16 %v367, %v363
        %v420 = vpack.c.b16 %v368, %v364
        %v421 = vpack.c.b16 %v373, %v369
        %v422 = vpack.c.b16 %v374, %v370
        %v423 = vpack.c.b16 %v375, %v371
        %v424 = vpack.c.b16 %v376, %v372
        %v425 = vpack.c.b16 %v381, %v377
        %v426 = vpack.c.b16 %v382, %v378
        %v427 = vpack.c.b16 %v383, %v379
        %v428 = vpack.c.b16 %v384, %v380
        %v429 = vpack.c.b16 %v389, %v385
        %v430 = vpack.c.b16 %v390, %v386
        %v431 = vpack.c.b16 %v391, %v387
        %v432 = vpack.c.b16 %v392, %v388
        %v433 = vpack.c.b16 %v397, %v393
        %v434 = vpack.c.b16 %v398, %v394
        %v435 = vpack.c.b16 %v399, %v395
        %v436 = vpack.c.b16 %v400, %v396
        %v437 = vpack.c.b16 %v405, %v401
        %v438 = vpack.c.b16 %v406, %v402
        %v439 = vpack.c.b16 %v407, %v403
        %v440 = vpack.c.b16 %v408, %v404
        %473 = vmatpush.bf16.msra.mxu0 %v437
        %474 = vmatpush.bf16.msra.mxu0 %v433
        %475 = vmatpush.bf16.msra.mxu0 %v429
        %476 = vmatpush.bf16.msra.mxu0 %v425
        %477 = vmatpush.bf16.msra.mxu0 %v421
        %478 = vmatpush.bf16.msra.mxu0 %v417
        %479 = vmatpush.bf16.msra.mxu0 %v413
        %480 = vmatpush.bf16.msra.mxu0 %v409
        %481 = vmatmul.bf16.gmra.mxu0 %v280
        %v482 = vpop.f32.mrf.mxu0
        %v483 = vadd.f32 0.0, %v482
        %v484 = vpop.f32.mrf.mxu0
        %485 = vdwg.mxu0
        %486 = vmatpush.bf16.msra.mxu0 %v438
        %487 = vmatpush.bf16.msra.mxu0 %v434
        %488 = vmatpush.bf16.msra.mxu0 %v430
        %489 = vmatpush.bf16.msra.mxu0 %v426
        %490 = vmatpush.bf16.msra.mxu0 %v422
        %491 = vmatpush.bf16.msra.mxu0 %v418
        %492 = vmatpush.bf16.msra.mxu0 %v414
        %493 = vmatpush.bf16.msra.mxu0 %v410
        %494 = vmatmul.bf16.gmra.mxu0 %v280
        %v495 = vpop.f32.mrf.mxu0
        %v496 = vadd.f32 0.0, %v495
        %v497 = vpop.f32.mrf.mxu0
        %498 = vdwg.mxu0
        %499 = vmatpush.bf16.msra.mxu0 %v439
        %500 = vmatpush.bf16.msra.mxu0 %v435
        %501 = vmatpush.bf16.msra.mxu0 %v431
        %502 = vmatpush.bf16.msra.mxu0 %v427
        %503 = vmatpush.bf16.msra.mxu0 %v423
        %504 = vmatpush.bf16.msra.mxu0 %v419
        %505 = vmatpush.bf16.msra.mxu0 %v415
        %506 = vmatpush.bf16.msra.mxu0 %v411
        %507 = vmatmul.bf16.gmra.mxu0 %v280
        %v508 = vpop.f32.mrf.mxu0
        %v509 = vadd.f32 0.0, %v508
        %v510 = vpop.f32.mrf.mxu0
        %511 = vdwg.mxu0
        %512 = vmatpush.bf16.msra.mxu0 %v440
        %513 = vmatpush.bf16.msra.mxu0 %v436
        %514 = vmatpush.bf16.msra.mxu0 %v432
        %515 = vmatpush.bf16.msra.mxu0 %v428
        %516 = vmatpush.bf16.msra.mxu0 %v424
        %517 = vmatpush.bf16.msra.mxu0 %v420
        %518 = vmatpush.bf16.msra.mxu0 %v416
        %519 = vmatpush.bf16.msra.mxu0 %v412
        %520 = vmatmul.bf16.gmra.mxu0 %v280
        %v521 = vpop.f32.mrf.mxu0
        %v522 = vadd.f32 0.0, %v521
        %v523 = vpop.f32.mrf.mxu0
        %524 = vdwg.mxu0
        %v557 = vunpack.c.l.b16 %v248
        %v558 = vunpack.c.h.b16 %v248
        %v559 = vunpack.c.l.b16 %v249
        %v560 = vunpack.c.h.b16 %v249
        %v561 = vunpack.c.l.b16 %v250
        %v562 = vunpack.c.h.b16 %v250
        %v563 = vunpack.c.l.b16 %v251
        %v564 = vunpack.c.h.b16 %v251
        %v565 = vunpack.c.l.b16 %v252
        %v566 = vunpack.c.h.b16 %v252
        %v567 = vunpack.c.l.b16 %v253
        %v568 = vunpack.c.h.b16 %v253
        %v569 = vunpack.c.l.b16 %v254
        %v570 = vunpack.c.h.b16 %v254
        %v571 = vunpack.c.l.b16 %v255
        %v572 = vunpack.c.h.b16 %v255
        %v573 = vunpack.c.l.b16 %v256
        %v574 = vunpack.c.h.b16 %v256
        %v575 = vunpack.c.l.b16 %v257
        %v576 = vunpack.c.h.b16 %v257
        %v577 = vunpack.c.l.b16 %v258
        %v578 = vunpack.c.h.b16 %v258
        %v579 = vunpack.c.l.b16 %v259
        %v580 = vunpack.c.h.b16 %v259
        %v581 = vunpack.c.l.b16 %v260
        %v582 = vunpack.c.h.b16 %v260
        %v583 = vunpack.c.l.b16 %v261
        %v584 = vunpack.c.h.b16 %v261
        %v585 = vunpack.c.l.b16 %v262
        %v586 = vunpack.c.h.b16 %v262
        %v587 = vunpack.c.l.b16 %v263
        %v588 = vunpack.c.h.b16 %v263
        %v589 = vunpack.c.l.b16 %v264
        %v590 = vunpack.c.h.b16 %v264
        %v591 = vunpack.c.l.b16 %v265
        %v592 = vunpack.c.h.b16 %v265
        %v593 = vunpack.c.l.b16 %v266
        %v594 = vunpack.c.h.b16 %v266
        %v595 = vunpack.c.l.b16 %v267
        %v596 = vunpack.c.h.b16 %v267
        %v597 = vunpack.c.l.b16 %v268
        %v598 = vunpack.c.h.b16 %v268
        %v599 = vunpack.c.l.b16 %v269
        %v600 = vunpack.c.h.b16 %v269
        %v601 = vunpack.c.l.b16 %v270
        %v602 = vunpack.c.h.b16 %v270
        %v603 = vunpack.c.l.b16 %v271
        %v604 = vunpack.c.h.b16 %v271
        %v605 = vunpack.c.l.b16 %v272
        %v606 = vunpack.c.h.b16 %v272
        %v607 = vunpack.c.l.b16 %v273
        %v608 = vunpack.c.h.b16 %v273
        %v609 = vunpack.c.l.b16 %v274
        %v610 = vunpack.c.h.b16 %v274
        %v611 = vunpack.c.l.b16 %v275
        %v612 = vunpack.c.h.b16 %v275
        %v613 = vunpack.c.l.b16 %v276
        %v614 = vunpack.c.h.b16 %v276
        %v615 = vunpack.c.l.b16 %v277
        %v616 = vunpack.c.h.b16 %v277
        %v617 = vunpack.c.l.b16 %v278
        %v618 = vunpack.c.h.b16 %v278
        %v619 = vunpack.c.l.b16 %v279
        %v620 = vunpack.c.h.b16 %v279
        %v621 = vpack.c.b16 %v561, %v557
        %v622 = vpack.c.b16 %v562, %v558
        %v623 = vpack.c.b16 %v563, %v559
        %v624 = vpack.c.b16 %v564, %v560
        %v625 = vpack.c.b16 %v569, %v565
        %v626 = vpack.c.b16 %v570, %v566
        %v627 = vpack.c.b16 %v571, %v567
        %v628 = vpack.c.b16 %v572, %v568
        %v629 = vpack.c.b16 %v577, %v573
        %v630 = vpack.c.b16 %v578, %v574
        %v631 = vpack.c.b16 %v579, %v575
        %v632 = vpack.c.b16 %v580, %v576
        %v633 = vpack.c.b16 %v585, %v581
        %v634 = vpack.c.b16 %v586, %v582
        %v635 = vpack.c.b16 %v587, %v583
        %v636 = vpack.c.b16 %v588, %v584
        %v637 = vpack.c.b16 %v593, %v589
        %v638 = vpack.c.b16 %v594, %v590
        %v639 = vpack.c.b16 %v595, %v591
        %v640 = vpack.c.b16 %v596, %v592
        %v641 = vpack.c.b16 %v601, %v597
        %v642 = vpack.c.b16 %v602, %v598
        %v643 = vpack.c.b16 %v603, %v599
        %v644 = vpack.c.b16 %v604, %v600
        %v645 = vpack.c.b16 %v609, %v605
        %v646 = vpack.c.b16 %v610, %v606
        %v647 = vpack.c.b16 %v611, %v607
        %v648 = vpack.c.b16 %v612, %v608
        %v649 = vpack.c.b16 %v617, %v613
        %v650 = vpack.c.b16 %v618, %v614
        %v651 = vpack.c.b16 %v619, %v615
        %v652 = vpack.c.b16 %v620, %v616
        %685 = vmatpush.bf16.msra.mxu0 %v649
        %686 = vmatpush.bf16.msra.mxu0 %v645
        %687 = vmatpush.bf16.msra.mxu0 %v641
        %688 = vmatpush.bf16.msra.mxu0 %v637
        %689 = vmatpush.bf16.msra.mxu0 %v633
        %690 = vmatpush.bf16.msra.mxu0 %v629
        %691 = vmatpush.bf16.msra.mxu0 %v625
        %692 = vmatpush.bf16.msra.mxu0 %v621
        %693 = vmatmul.bf16.gmra.mxu0 %v245
        %v694 = vpop.f32.mrf.mxu0
        %v695 = vadd.f32 %v483, %v694
        %v696 = vpop.f32.mrf.mxu0
        %697 = vdwg.mxu0
        %698 = vmatpush.bf16.msra.mxu0 %v650
        %699 = vmatpush.bf16.msra.mxu0 %v646
        %700 = vmatpush.bf16.msra.mxu0 %v642
        %701 = vmatpush.bf16.msra.mxu0 %v638
        %702 = vmatpush.bf16.msra.mxu0 %v634
        %703 = vmatpush.bf16.msra.mxu0 %v630
        %704 = vmatpush.bf16.msra.mxu0 %v626
        %705 = vmatpush.bf16.msra.mxu0 %v622
        %706 = vmatmul.bf16.gmra.mxu0 %v245
        %v707 = vpop.f32.mrf.mxu0
        %v708 = vadd.f32 %v496, %v707
        %v709 = vpop.f32.mrf.mxu0
        %710 = vdwg.mxu0
        %711 = vmatpush.bf16.msra.mxu0 %v651
        %712 = vmatpush.bf16.msra.mxu0 %v647
        %713 = vmatpush.bf16.msra.mxu0 %v643
        %714 = vmatpush.bf16.msra.mxu0 %v639
        %715 = vmatpush.bf16.msra.mxu0 %v635
        %716 = vmatpush.bf16.msra.mxu0 %v631
        %717 = vmatpush.bf16.msra.mxu0 %v627
        %718 = vmatpush.bf16.msra.mxu0 %v623
        %719 = vmatmul.bf16.gmra.mxu0 %v245
        %v720 = vpop.f32.mrf.mxu0
        %v721 = vadd.f32 %v509, %v720
        %v722 = vpop.f32.mrf.mxu0
        %723 = vdwg.mxu0
        %724 = vmatpush.bf16.msra.mxu0 %v652
        %725 = vmatpush.bf16.msra.mxu0 %v648
        %726 = vmatpush.bf16.msra.mxu0 %v644
        %727 = vmatpush.bf16.msra.mxu0 %v640
        %728 = vmatpush.bf16.msra.mxu0 %v636
        %729 = vmatpush.bf16.msra.mxu0 %v632
        %730 = vmatpush.bf16.msra.mxu0 %v628
        %731 = vmatpush.bf16.msra.mxu0 %v624
        %732 = vmatmul.bf16.gmra.mxu0 %v245
        %v733 = vpop.f32.mrf.mxu0
        %v734 = vadd.f32 %v522, %v733
        %v735 = vpop.f32.mrf.mxu0
        %736 = vdwg.mxu0
        %v737 = vld [vmem:[%s3] sm:$0xf]
        %v739 = vperm.slane %v737, 0
        %v740 = vperm.slane %v737, 1
        %v741 = vperm.slane %v737, 2
        %v742 = vperm.slane %v737, 3
        %v747 = vadd.f32 %v695, %v739
        %v748 = vadd.f32 %v708, %v740
        %v749 = vadd.f32 %v721, %v741
        %v750 = vadd.f32 %v734, %v742
        %v751 = vxor.u32 %v747, 2147483648
        %v752 = vmul.f32 %v751, 1.442695
        %v753 = vpow.pop %v752
        %v754 = vadd.f32 %v753, 1.0
        %v755 = vrcp.pop %v754
        %v756 = vmul.f32 %v754, %v755
        %v757 = vsub.f32 1.0, %v756
        %v758 = vmul.f32 %v755, %v757
        %v759 = vadd.f32 %v755, %v758
        %vm760 = vweird.f32 %v754
        %vm761 = vweird.f32 %v755
        %vm762 = vmor %vm760, %vm761
        %v763 = vsel %vm762, %v755, %v759
        %v764 = vand.u32 2147483647, %v754
        %vm765 = vcmp.eq.f32.partialorder %v764, 8.507059e+37
        %v766 = vand.u32 %v754, 2147483648
        %v767 = vor.u32 1.1754944e-38, %v766
        %v768 = vsel %vm765, %v767, %v763
        %v769 = vmul.f32 1.0, %v768
        %v770 = vxor.u32 %v748, 2147483648
        %v771 = vmul.f32 %v770, 1.442695
        %v772 = vpow.pop %v771
        %v773 = vadd.f32 %v772, 1.0
        %v774 = vrcp.pop %v773
        %v775 = vmul.f32 %v773, %v774
        %v776 = vsub.f32 1.0, %v775
        %v777 = vmul.f32 %v774, %v776
        %v778 = vadd.f32 %v774, %v777
        %vm779 = vweird.f32 %v773
        %vm780 = vweird.f32 %v774
        %vm781 = vmor %vm779, %vm780
        %v782 = vsel %vm781, %v774, %v778
        %v783 = vand.u32 2147483647, %v773
        %vm784 = vcmp.eq.f32.partialorder %v783, 8.507059e+37
        %v785 = vand.u32 %v773, 2147483648
        %v786 = vor.u32 1.1754944e-38, %v785
        %v787 = vsel %vm784, %v786, %v782
        %v788 = vmul.f32 1.0, %v787
        %v789 = vtanh.pop %v749
        %v790 = vxor.u32 %v750, 2147483648
        %v791 = vmul.f32 %v790, 1.442695
        %v792 = vpow.pop %v791
        %v793 = vadd.f32 %v792, 1.0
        %v794 = vrcp.pop %v793
        %v795 = vmul.f32 %v793, %v794
        %v796 = vsub.f32 1.0, %v795
        %v797 = vmul.f32 %v794, %v796
        %v798 = vadd.f32 %v794, %v797
        %vm799 = vweird.f32 %v793
        %vm800 = vweird.f32 %v794
        %vm801 = vmor %vm799, %vm800
        %v802 = vsel %vm801, %v794, %v798
        %v803 = vand.u32 2147483647, %v793
        %vm804 = vcmp.eq.f32.partialorder %v803, 8.507059e+37
        %v805 = vand.u32 %v793, 2147483648
        %v806 = vor.u32 1.1754944e-38, %v805
        %v807 = vsel %vm804, %v806, %v802
        %v808 = vmul.f32 1.0, %v807
        %v809 = vmul.f32 %v788, %v247
        %v810 = vmul.f32 %v769, %v789
        %v811 = vadd.f32 %v809, %v810
        %812 = vst [vmem:[%s5] sm:$0xff] %v811
        %v813 = vtanh.pop %v811
        %v814 = vmul.f32 %v808, %v813
        %815 = vst [vmem:[%s4] sm:$0xff] %v814
        // Predicated region
        $region49: #{forward.2} parent=35 // pred_check
          %p816 = pneg %p121
        $region50: #{forward.2} parent=35 // pred_check_branch
          %818 = sbr.rel (%p816) target = $region52
        $region51: #{forward.2} parent=35 // pred_region
          _
        $region52: #{forward.2} parent=35 // pred_fallthru
          _
        // Predicated region
        $region53: #{forward.2} parent=35 // pred_check
          %p819 = pneg %p142
        $region54: #{forward.2} parent=35 // pred_check_branch
          %821 = sbr.rel (%p819) target = $region56
        $region55: #{forward.2} parent=35 // pred_region
          _
        $region56: #{forward.2} parent=35 // pred_fallthru
          _
        // Predicated region
        $region57: #{forward.2} parent=35 // pred_check
          %p822 = pneg %p121
        $region58: #{forward.2} parent=35 // pred_check_branch
          %824 = sbr.rel (%p822) target = $region60
        $region59: #{forward.2} parent=35 // pred_region
          _
        $region60: #{forward.2} parent=35 // pred_fallthru
          _
        // Predicated region
        $region61: #{forward.2} parent=35 // pred_check
          %p825 = pneg %p142
        $region62: #{forward.2} parent=35 // pred_check_branch
          %827 = sbr.rel (%p825) target = $region64
        $region63: #{forward.2} parent=35 // pred_region
          _
        $region64: #{forward.2} parent=35 // pred_fallthru
          _
      $region36: #{forward.2} parent=5 // pred_fallthru
        _
      %p828 = scmp.le.s32.totalorder 2, %s14
      // Predicated region
      $region65: #{forward.2} parent=5 // pred_check
        %p829 = pneg %p828
      $region66: #{forward.2} parent=5 // pred_check_branch
        %831 = sbr.rel (%p829) target = $region68
      $region67: #{forward.2} parent=5 // pred_region
        %s832 = ssub.s32 %s14, 2
      $region68: #{forward.2} parent=5 // pred_fallthru
        _
    $region6: #{forward.2} parent=1 // loop_footer
      %s18 = sadd.s32 1, %s14
    $region7: #{forward.2} parent=1 // loop_footer_branch
      %13 = sbr.rel target = $region3
    $region8: #{forward.2} parent=1 // loop_exit
      _
    %833 = vsyncpa [#allocation3], 1
    %s834 = scalar_lea.sflag [#allocation3], 1
    %835 = vsyncpa %s834, 1
    %836 = vsyncpa [#allocation5], 1

// kernel: forward.3
$region0: #{forward.3}
  #allocation0 [shape = 'u32[]', space=smem, size = 0x4, offset = 0x4, fixed_abs, tag = 'smem constant byte address 0x4 - core index']
  #allocation1 [shape = 'u32[72,128]{1,0:T(1,128)}', space=vmem, size = 0x9000, scoped, tag = 'internal scratch']
  %s0 = inlined_call_operand.vmem [shape: s32[7], index: 0, kind: input, shape index: {}]
  %s1 = inlined_call_operand.vmem [shape: bf16[7,8,128], index: 1, kind: input, shape index: {}]
  %s2 = inlined_call_operand.vmem [shape: f32[8,128], index: 2, kind: input, shape index: {}]
  %s3 = inlined_call_operand.vmem [shape: f32[8,128], index: 3, kind: input, shape index: {}]
  %s4 = inlined_call_operand.vmem [shape: bf16[128,128], index: 4, kind: input, shape index: {}]
  %s5 = inlined_call_operand.hbm [shape: bf16[128,512], index: 5, kind: input, shape index: {}]
  %s6 = inlined_call_operand.vmem [shape: bf16[128,512], index: 6, kind: input, shape index: {}]
  %s7 = inlined_call_operand.vmem [shape: f32[1,512], index: 7, kind: input, shape index: {}]
  %s8 = inlined_call_operand.vmem [shape: bf16[128,128], index: 8, kind: input, shape index: {}]
  %s9 = inlined_call_operand.vmem [shape: f32[1,128], index: 9, kind: input, shape index: {}]
  %s10 = inlined_call_operand.vmem [shape: f32[7,8,128], index: 10, kind: output, shape index: {}]
  %s11 = sld [smem:[#allocation0]]
  $region114: #{forward.3} parent=0
    _
  %s13 = ssub.s32 1, %s11
  %s14 = scalar_select 0, %s13, %s11
  $region1: #{forward.3} parent=0
    #allocation2 [shape = 'u8[512]{0}', space=smem, size = 0x200, scoped, tag = 'input window, operand 0, single buffered']
    #allocation3 [shape = 's32[1]{0}', space=sflag, size = 0x4, scoped, tag = 'scoped memory for forward.3']
    #allocation4 [shape = 's32[1]{0}', space=sflag, size = 0x4, scoped, tag = 'scoped memory for forward.3']
    #allocation5 [shape = 'u8[131072]{0}', space=vmem, size = 0x20000, scoped, tag = 'input window, operand 5, single buffered']
    %15 = vsyncpa [#allocation4], 0
    %16 = vsyncpa [#allocation3], 0
    // Predicated region
    $region2: #{forward.3} parent=1 // pred_check
      _
    $region3: #{forward.3} parent=1 // pred_check_branch
      %18 = sbr.rel (0) target = $region5
    $region4: #{forward.3} parent=1 // pred_region
      %20 = vsyncadd [#allocation4], 0
      %s22 = sshll.u32 %s0, 4
      %s23 = int_to_ptr.vmem [resolvable:$true] %s22
      %25 = dma.vmem_to_smem %s23, 16, [#allocation2], [#allocation4]
    $region5: #{forward.3} parent=1 // pred_fallthru
      _
    // Predicated region
    $region6: #{forward.3} parent=1 // pred_check
      _
    $region7: #{forward.3} parent=1 // pred_check_branch
      %27 = sbr.rel (0) target = $region9
    $region8: #{forward.3} parent=1 // pred_region
      _
    $region9: #{forward.3} parent=1 // pred_fallthru
      _
    // Predicated region
    $region10: #{forward.3} parent=1 // pred_check
      _
    $region11: #{forward.3} parent=1 // pred_check_branch
      %29 = sbr.rel (0) target = $region13
    $region12: #{forward.3} parent=1 // pred_region
      _
    $region13: #{forward.3} parent=1 // pred_fallthru
      _
    // Predicated region
    $region14: #{forward.3} parent=1 // pred_check
      _
    $region15: #{forward.3} parent=1 // pred_check_branch
      %31 = sbr.rel (0) target = $region17
    $region16: #{forward.3} parent=1 // pred_region
      _
    $region17: #{forward.3} parent=1 // pred_fallthru
      _
    // Predicated region
    $region18: #{forward.3} parent=1 // pred_check
      _
    $region19: #{forward.3} parent=1 // pred_check_branch
      %33 = sbr.rel (0) target = $region21
    $region20: #{forward.3} parent=1 // pred_region
      _
    $region21: #{forward.3} parent=1 // pred_fallthru
      _
    // Predicated region
    $region22: #{forward.3} parent=1 // pred_check
      _
    $region23: #{forward.3} parent=1 // pred_check_branch
      %35 = sbr.rel (0) target = $region25
    $region24: #{forward.3} parent=1 // pred_region
      %37 = vsyncadd [#allocation3], 0
      %s38 = sshll.u32 %s5, 4
      %s39 = int_to_ptr.hbm [resolvable:$true] %s38
      %s40 = sshll.u32 [#allocation5], 4
      %s41 = int_to_ptr.vmem [resolvable:$true] %s40
      %46 = dma.hbm_to_vmem [thread:$0]  %s39, 4096, %s41, [#allocation3], 256, 256, 16
    $region25: #{forward.3} parent=1 // pred_fallthru
      _
    // Predicated region
    $region26: #{forward.3} parent=1 // pred_check
      _
    $region27: #{forward.3} parent=1 // pred_check_branch
      %48 = sbr.rel (0) target = $region29
    $region28: #{forward.3} parent=1 // pred_region
      _
    $region29: #{forward.3} parent=1 // pred_fallthru
      _
    // Predicated region
    $region30: #{forward.3} parent=1 // pred_check
      _
    $region31: #{forward.3} parent=1 // pred_check_branch
      %50 = sbr.rel (0) target = $region33
    $region32: #{forward.3} parent=1 // pred_region
      _
    $region33: #{forward.3} parent=1 // pred_fallthru
      _
    // Predicated region
    $region34: #{forward.3} parent=1 // pred_check
      _
    $region35: #{forward.3} parent=1 // pred_check_branch
      %52 = sbr.rel (0) target = $region37
    $region36: #{forward.3} parent=1 // pred_region
      _
    $region37: #{forward.3} parent=1 // pred_fallthru
      _
    // Predicated region
    $region38: #{forward.3} parent=1 // pred_check
      _
    $region39: #{forward.3} parent=1 // pred_check_branch
      %54 = sbr.rel (0) target = $region41
    $region40: #{forward.3} parent=1 // pred_region
      _
    $region41: #{forward.3} parent=1 // pred_fallthru
      _
    // Predicated region
    $region42: #{forward.3} parent=1 // pred_check
      _
    $region43: #{forward.3} parent=1 // pred_check_branch
      %56 = sbr.rel (0) target = $region45
    $region44: #{forward.3} parent=1 // pred_region
      %58 = dma.done [#allocation4], 16
    $region45: #{forward.3} parent=1 // pred_fallthru
      _
    // Predicated region
    $region46: #{forward.3} parent=1 // pred_check
      _
    $region47: #{forward.3} parent=1 // pred_check_branch
      %60 = sbr.rel (0) target = $region49
    $region48: #{forward.3} parent=1 // pred_region
      %62 = dma.done [#allocation3], 4096
    $region49: #{forward.3} parent=1 // pred_fallthru
      _
    %63 = sfence
    %v65 = vld [vmem:[%s7] sm:$0xf]
    %v67 = vperm.slane %v65, 0
    %v68 = vperm.slane %v65, 1
    %v69 = vperm.slane %v65, 2
    %v70 = vperm.slane %v65, 3
    %v75 = vld [vmem:[%s9] sm:$0x1]
    %v77 = vperm.slane %v75, 0
    %v79 = vlaneseq
    %v80 = vand.u32 %v79, 127
    %vm81 = vcmp.lt.s32.totalorder %v80, 32
    %v82 = vld [vmem:[%s2] sm:$0xff]
    %v83 = vld [vmem:[%s3] sm:$0xff]
    %v84 = vld [vmem:[%s1] sm:$0xf]
    %s85 = sld [smem:[#allocation2]]
    %p86 = scmp.gt.s32.totalorder %s85, 0
    // Predicated region
    $region50: #{forward.3} parent=1 // pred_check
      %p87 = pneg %p86
    $region51: #{forward.3} parent=1 // pred_check_branch
      %89 = sbr.rel (%p87) target = $region53
    $region52: #{forward.3} parent=1 // pred_region
      _
    $region53: #{forward.3} parent=1 // pred_fallthru
      _
    %p90 = pneg %p86
    // Predicated region
    $region54: #{forward.3} parent=1 // pred_check
      _
    $region55: #{forward.3} parent=1 // pred_check_branch
      %92 = sbr.rel (%p86) target = $region57
    $region56: #{forward.3} parent=1 // pred_region
      %v93 = vld [vmem:[%s4] sm:$0xf]
      %v94 = vld [vmem:[%s4 + $0x4] sm:$0xf]
      %v95 = vld [vmem:[%s4 + $0x8] sm:$0xf]
      %v96 = vld [vmem:[%s4 + $0xc] sm:$0xf]
      %v97 = vld [vmem:[%s4 + $0x10] sm:$0xf]
      %v98 = vld [vmem:[%s4 + $0x14] sm:$0xf]
      %v99 = vld [vmem:[%s4 + $0x18] sm:$0xf]
      %v100 = vld [vmem:[%s4 + $0x1c] sm:$0xf]
      %v101 = vld [vmem:[%s4 + $0x20] sm:$0xf]
      %v102 = vld [vmem:[%s4 + $0x24] sm:$0xf]
      %v103 = vld [vmem:[%s4 + $0x28] sm:$0xf]
      %v104 = vld [vmem:[%s4 + $0x2c] sm:$0xf]
      %v105 = vld [vmem:[%s4 + $0x30] sm:$0xf]
      %v106 = vld [vmem:[%s4 + $0x34] sm:$0xf]
      %v107 = vld [vmem:[%s4 + $0x38] sm:$0xf]
      %v108 = vld [vmem:[%s4 + $0x3c] sm:$0xf]
      %v125 = vunpack.c.l.b16 %v93
      %v126 = vunpack.c.l.b16 %v94
      %v127 = vunpack.c.l.b16 %v95
      %v128 = vunpack.c.l.b16 %v96
      %v129 = vunpack.c.l.b16 %v97
      %v130 = vunpack.c.l.b16 %v98
      %v131 = vunpack.c.l.b16 %v99
      %v132 = vunpack.c.l.b16 %v100
      %v133 = vunpack.c.l.b16 %v101
      %v134 = vunpack.c.l.b16 %v102
      %v135 = vunpack.c.l.b16 %v103
      %v136 = vunpack.c.l.b16 %v104
      %v137 = vunpack.c.l.b16 %v105
      %v138 = vunpack.c.l.b16 %v106
      %v139 = vunpack.c.l.b16 %v107
      %v140 = vunpack.c.l.b16 %v108
      %v141 = vpack.c.b16 %v126, %v125
      %v142 = vpack.c.b16 %v128, %v127
      %v143 = vpack.c.b16 %v130, %v129
      %v144 = vpack.c.b16 %v132, %v131
      %v145 = vpack.c.b16 %v134, %v133
      %v146 = vpack.c.b16 %v136, %v135
      %v147 = vpack.c.b16 %v138, %v137
      %v148 = vpack.c.b16 %v140, %v139
      %157 = vmatpush.bf16.msra.mxu0 %v148
      %158 = vmatpush.bf16.msra.mxu0 %v147
      %159 = vmatpush.bf16.msra.mxu0 %v146
      %160 = vmatpush.bf16.msra.mxu0 %v145
      %161 = vmatpush.bf16.msra.mxu0 %v144
      %162 = vmatpush.bf16.msra.mxu0 %v143
      %163 = vmatpush.bf16.msra.mxu0 %v142
      %164 = vmatpush.bf16.msra.mxu0 %v141
      %165 = vmatmul.bf16.gmra.mxu0 0
      %v166 = vpop.f32.mrf.mxu0
      %v167 = vadd.f32 0.0, %v166
      %v168 = vpop.f32.mrf.mxu0
      %169 = vdwg.mxu0
      %v170 = vpack.c.bf16 %v167, %v167
    $region57: #{forward.3} parent=1 // pred_fallthru
      %v171 = vphi %v84, %v170
    %v172 = vld [vmem:[#allocation5] sm:$0xff]
    %v173 = vld [vmem:[#allocation5 + $0x8] sm:$0xff]
    %v174 = vld [vmem:[#allocation5 + $0x10] sm:$0xff]
    %v175 = vld [vmem:[#allocation5 + $0x18] sm:$0xff]
    %v176 = vld [vmem:[#allocation5 + $0x20] sm:$0xff]
    %v177 = vld [vmem:[#allocation5 + $0x28] sm:$0xff]
    %v178 = vld [vmem:[#allocation5 + $0x30] sm:$0xff]
    %v179 = vld [vmem:[#allocation5 + $0x38] sm:$0xff]
    %v180 = vld [vmem:[#allocation5 + $0x40] sm:$0xff]
    %v181 = vld [vmem:[#allocation5 + $0x48] sm:$0xff]
    %v182 = vld [vmem:[#allocation5 + $0x50] sm:$0xff]
    %v183 = vld [vmem:[#allocation5 + $0x58] sm:$0xff]
    %v184 = vld [vmem:[#allocation5 + $0x60] sm:$0xff]
    %v185 = vld [vmem:[#allocation5 + $0x68] sm:$0xff]
    %v186 = vld [vmem:[#allocation5 + $0x70] sm:$0xff]
    %v187 = vld [vmem:[#allocation5 + $0x78] sm:$0xff]
    %v188 = vld [vmem:[#allocation5 + $0x80] sm:$0xff]
    %v189 = vld [vmem:[#allocation5 + $0x88] sm:$0xff]
    %v190 = vld [vmem:[#allocation5 + $0x90] sm:$0xff]
    %v191 = vld [vmem:[#allocation5 + $0x98] sm:$0xff]
    %v192 = vld [vmem:[#allocation5 + $0xa0] sm:$0xff]
    %v193 = vld [vmem:[#allocation5 + $0xa8] sm:$0xff]
    %v194 = vld [vmem:[#allocation5 + $0xb0] sm:$0xff]
    %v195 = vld [vmem:[#allocation5 + $0xb8] sm:$0xff]
    %v196 = vld [vmem:[#allocation5 + $0xc0] sm:$0xff]
    %v197 = vld [vmem:[#allocation5 + $0xc8] sm:$0xff]
    %v198 = vld [vmem:[#allocation5 + $0xd0] sm:$0xff]
    %v199 = vld [vmem:[#allocation5 + $0xd8] sm:$0xff]
    %v200 = vld [vmem:[#allocation5 + $0xe0] sm:$0xff]
    %v201 = vld [vmem:[#allocation5 + $0xe8] sm:$0xff]
    %v202 = vld [vmem:[#allocation5 + $0xf0] sm:$0xff]
    %v203 = vld [vmem:[#allocation5 + $0xf8] sm:$0xff]
    %v204 = vpack.c.bf16 %v82, %v82
    %v205 = vld [vmem:[%s6] sm:$0xff]
    %v206 = vld [vmem:[%s6 + $0x8] sm:$0xff]
    %v207 = vld [vmem:[%s6 + $0x10] sm:$0xff]
    %v208 = vld [vmem:[%s6 + $0x18] sm:$0xff]
    %v209 = vld [vmem:[%s6 + $0x20] sm:$0xff]
    %v210 = vld [vmem:[%s6 + $0x28] sm:$0xff]
    %v211 = vld [vmem:[%s6 + $0x30] sm:$0xff]
    %v212 = vld [vmem:[%s6 + $0x38] sm:$0xff]
    %v213 = vld [vmem:[%s6 + $0x40] sm:$0xff]
    %v214 = vld [vmem:[%s6 + $0x48] sm:$0xff]
    %v215 = vld [vmem:[%s6 + $0x50] sm:$0xff]
    %v216 = vld [vmem:[%s6 + $0x58] sm:$0xff]
    %v217 = vld [vmem:[%s6 + $0x60] sm:$0xff]
    %v218 = vld [vmem:[%s6 + $0x68] sm:$0xff]
    %v219 = vld [vmem:[%s6 + $0x70] sm:$0xff]
    %v220 = vld [vmem:[%s6 + $0x78] sm:$0xff]
    %v221 = vld [vmem:[%s6 + $0x80] sm:$0xff]
    %v222 = vld [vmem:[%s6 + $0x88] sm:$0xff]
    %v223 = vld [vmem:[%s6 + $0x90] sm:$0xff]
    %v224 = vld [vmem:[%s6 + $0x98] sm:$0xff]
    %v225 = vld [vmem:[%s6 + $0xa0] sm:$0xff]
    %v226 = vld [vmem:[%s6 + $0xa8] sm:$0xff]
    %v227 = vld [vmem:[%s6 + $0xb0] sm:$0xff]
    %v228 = vld [vmem:[%s6 + $0xb8] sm:$0xff]
    %v229 = vld [vmem:[%s6 + $0xc0] sm:$0xff]
    %v230 = vld [vmem:[%s6 + $0xc8] sm:$0xff]
    %v231 = vld [vmem:[%s6 + $0xd0] sm:$0xff]
    %v232 = vld [vmem:[%s6 + $0xd8] sm:$0xff]
    %v233 = vld [vmem:[%s6 + $0xe0] sm:$0xff]
    %v234 = vld [vmem:[%s6 + $0xe8] sm:$0xff]
    %v235 = vld [vmem:[%s6 + $0xf0] sm:$0xff]
    %v236 = vld [vmem:[%s6 + $0xf8] sm:$0xff]
    %v269 = vunpack.c.l.b16 %v205
    %v270 = vunpack.c.h.b16 %v205
    %v271 = vunpack.c.l.b16 %v206
    %v272 = vunpack.c.h.b16 %v206
    %v273 = vunpack.c.l.b16 %v207
    %v274 = vunpack.c.h.b16 %v207
    %v275 = vunpack.c.l.b16 %v208
    %v276 = vunpack.c.h.b16 %v208
    %v277 = vunpack.c.l.b16 %v209
    %v278 = vunpack.c.h.b16 %v209
    %v279 = vunpack.c.l.b16 %v210
    %v280 = vunpack.c.h.b16 %v210
    %v281 = vunpack.c.l.b16 %v211
    %v282 = vunpack.c.h.b16 %v211
    %v283 = vunpack.c.l.b16 %v212
    %v284 = vunpack.c.h.b16 %v212
    %v285 = vunpack.c.l.b16 %v213
    %v286 = vunpack.c.h.b16 %v213
    %v287 = vunpack.c.l.b16 %v214
    %v288 = vunpack.c.h.b16 %v214
    %v289 = vunpack.c.l.b16 %v215
    %v290 = vunpack.c.h.b16 %v215
    %v291 = vunpack.c.l.b16 %v216
    %v292 = vunpack.c.h.b16 %v216
    %v293 = vunpack.c.l.b16 %v217
    %v294 = vunpack.c.h.b16 %v217
    %v295 = vunpack.c.l.b16 %v218
    %v296 = vunpack.c.h.b16 %v218
    %v297 = vunpack.c.l.b16 %v219
    %v298 = vunpack.c.h.b16 %v219
    %v299 = vunpack.c.l.b16 %v220
    %v300 = vunpack.c.h.b16 %v220
    %v301 = vunpack.c.l.b16 %v221
    %v302 = vunpack.c.h.b16 %v221
    %v303 = vunpack.c.l.b16 %v222
    %v304 = vunpack.c.h.b16 %v222
    %v305 = vunpack.c.l.b16 %v223
    %v306 = vunpack.c.h.b16 %v223
    %v307 = vunpack.c.l.b16 %v224
    %v308 = vunpack.c.h.b16 %v224
    %v309 = vunpack.c.l.b16 %v225
    %v310 = vunpack.c.h.b16 %v225
    %v311 = vunpack.c.l.b16 %v226
    %v312 = vunpack.c.h.b16 %v226
    %v313 = vunpack.c.l.b16 %v227
    %v314 = vunpack.c.h.b16 %v227
    %v315 = vunpack.c.l.b16 %v228
    %v316 = vunpack.c.h.b16 %v228
    %v317 = vunpack.c.l.b16 %v229
    %v318 = vunpack.c.h.b16 %v229
    %v319 = vunpack.c.l.b16 %v230
    %v320 = vunpack.c.h.b16 %v230
    %v321 = vunpack.c.l.b16 %v231
    %v322 = vunpack.c.h.b16 %v231
    %v323 = vunpack.c.l.b16 %v232
    %v324 = vunpack.c.h.b16 %v232
    %v325 = vunpack.c.l.b16 %v233
    %v326 = vunpack.c.h.b16 %v233
    %v327 = vunpack.c.l.b16 %v234
    %v328 = vunpack.c.h.b16 %v234
    %v329 = vunpack.c.l.b16 %v235
    %v330 = vunpack.c.h.b16 %v235
    %v331 = vunpack.c.l.b16 %v236
    %v332 = vunpack.c.h.b16 %v236
    %v333 = vpack.c.b16 %v273, %v269
    %v334 = vpack.c.b16 %v274, %v270
    %v335 = vpack.c.b16 %v275, %v271
    %v336 = vpack.c.b16 %v276, %v272
    %v337 = vpack.c.b16 %v281, %v277
    %v338 = vpack.c.b16 %v282, %v278
    %v339 = vpack.c.b16 %v283, %v279
    %v340 = vpack.c.b16 %v284, %v280
    %v341 = vpack.c.b16 %v289, %v285
    %v342 = vpack.c.b16 %v290, %v286
    %v343 = vpack.c.b16 %v291, %v287
    %v344 = vpack.c.b16 %v292, %v288
    %v345 = vpack.c.b16 %v297, %v293
    %v346 = vpack.c.b16 %v298, %v294
    %v347 = vpack.c.b16 %v299, %v295
    %v348 = vpack.c.b16 %v300, %v296
    %v349 = vpack.c.b16 %v305, %v301
    %v350 = vpack.c.b16 %v306, %v302
    %v351 = vpack.c.b16 %v307, %v303
    %v352 = vpack.c.b16 %v308, %v304
    %v353 = vpack.c.b16 %v313, %v309
    %v354 = vpack.c.b16 %v314, %v310
    %v355 = vpack.c.b16 %v315, %v311
    %v356 = vpack.c.b16 %v316, %v312
    %v357 = vpack.c.b16 %v321, %v317
    %v358 = vpack.c.b16 %v322, %v318
    %v359 = vpack.c.b16 %v323, %v319
    %v360 = vpack.c.b16 %v324, %v320
    %v361 = vpack.c.b16 %v329, %v325
    %v362 = vpack.c.b16 %v330, %v326
    %v363 = vpack.c.b16 %v331, %v327
    %v364 = vpack.c.b16 %v332, %v328
    %397 = vmatpush.bf16.msra.mxu0 %v361
    %398 = vmatpush.bf16.msra.mxu0 %v357
    %399 = vmatpush.bf16.msra.mxu0 %v353
    %400 = vmatpush.bf16.msra.mxu0 %v349
    %401 = vmatpush.bf16.msra.mxu0 %v345
    %402 = vmatpush.bf16.msra.mxu0 %v341
    %403 = vmatpush.bf16.msra.mxu0 %v337
    %404 = vmatpush.bf16.msra.mxu0 %v333
    %405 = vmatmul.bf16.gmra.mxu0 %v204
    %v406 = vpop.f32.mrf.mxu0
    %v407 = vadd.f32 0.0, %v406
    %v408 = vpop.f32.mrf.mxu0
    %409 = vdwg.mxu0
    %410 = vmatpush.bf16.msra.mxu0 %v362
    %411 = vmatpush.bf16.msra.mxu0 %v358
    %412 = vmatpush.bf16.msra.mxu0 %v354
    %413 = vmatpush.bf16.msra.mxu0 %v350
    %414 = vmatpush.bf16.msra.mxu0 %v346
    %415 = vmatpush.bf16.msra.mxu0 %v342
    %416 = vmatpush.bf16.msra.mxu0 %v338
    %417 = vmatpush.bf16.msra.mxu0 %v334
    %418 = vmatmul.bf16.gmra.mxu0 %v204
    %v419 = vpop.f32.mrf.mxu0
    %v420 = vadd.f32 0.0, %v419
    %v421 = vpop.f32.mrf.mxu0
    %422 = vdwg.mxu0
    %423 = vmatpush.bf16.msra.mxu0 %v363
    %424 = vmatpush.bf16.msra.mxu0 %v359
    %425 = vmatpush.bf16.msra.mxu0 %v355
    %426 = vmatpush.bf16.msra.mxu0 %v351
    %427 = vmatpush.bf16.msra.mxu0 %v347
    %428 = vmatpush.bf16.msra.mxu0 %v343
    %429 = vmatpush.bf16.msra.mxu0 %v339
    %430 = vmatpush.bf16.msra.mxu0 %v335
    %431 = vmatmul.bf16.gmra.mxu0 %v204
    %v432 = vpop.f32.mrf.mxu0
    %v433 = vadd.f32 0.0, %v432
    %v434 = vpop.f32.mrf.mxu0
    %435 = vdwg.mxu0
    %436 = vmatpush.bf16.msra.mxu0 %v364
    %437 = vmatpush.bf16.msra.mxu0 %v360
    %438 = vmatpush.bf16.msra.mxu0 %v356
    %439 = vmatpush.bf16.msra.mxu0 %v352
    %440 = vmatpush.bf16.msra.mxu0 %v348
    %441 = vmatpush.bf16.msra.mxu0 %v344
    %442 = vmatpush.bf16.msra.mxu0 %v340
    %443 = vmatpush.bf16.msra.mxu0 %v336
    %444 = vmatmul.bf16.gmra.mxu0 %v204
    %v445 = vpop.f32.mrf.mxu0
    %v446 = vadd.f32 0.0, %v445
    %v447 = vpop.f32.mrf.mxu0
    %448 = vdwg.mxu0
    %v481 = vunpack.c.l.b16 %v172
    %v482 = vunpack.c.h.b16 %v172
    %v483 = vunpack.c.l.b16 %v173
    %v484 = vunpack.c.h.b16 %v173
    %v485 = vunpack.c.l.b16 %v174
    %v486 = vunpack.c.h.b16 %v174
    %v487 = vunpack.c.l.b16 %v175
    %v488 = vunpack.c.h.b16 %v175
    %v489 = vunpack.c.l.b16 %v176
    %v490 = vunpack.c.h.b16 %v176
    %v491 = vunpack.c.l.b16 %v177
    %v492 = vunpack.c.h.b16 %v177
    %v493 = vunpack.c.l.b16 %v178
    %v494 = vunpack.c.h.b16 %v178
    %v495 = vunpack.c.l.b16 %v179
    %v496 = vunpack.c.h.b16 %v179
    %v497 = vunpack.c.l.b16 %v180
    %v498 = vunpack.c.h.b16 %v180
    %v499 = vunpack.c.l.b16 %v181
    %v500 = vunpack.c.h.b16 %v181
    %v501 = vunpack.c.l.b16 %v182
    %v502 = vunpack.c.h.b16 %v182
    %v503 = vunpack.c.l.b16 %v183
    %v504 = vunpack.c.h.b16 %v183
    %v505 = vunpack.c.l.b16 %v184
    %v506 = vunpack.c.h.b16 %v184
    %v507 = vunpack.c.l.b16 %v185
    %v508 = vunpack.c.h.b16 %v185
    %v509 = vunpack.c.l.b16 %v186
    %v510 = vunpack.c.h.b16 %v186
    %v511 = vunpack.c.l.b16 %v187
    %v512 = vunpack.c.h.b16 %v187
    %v513 = vunpack.c.l.b16 %v188
    %v514 = vunpack.c.h.b16 %v188
    %v515 = vunpack.c.l.b16 %v189
    %v516 = vunpack.c.h.b16 %v189
    %v517 = vunpack.c.l.b16 %v190
    %v518 = vunpack.c.h.b16 %v190
    %v519 = vunpack.c.l.b16 %v191
    %v520 = vunpack.c.h.b16 %v191
    %v521 = vunpack.c.l.b16 %v192
    %v522 = vunpack.c.h.b16 %v192
    %v523 = vunpack.c.l.b16 %v193
    %v524 = vunpack.c.h.b16 %v193
    %v525 = vunpack.c.l.b16 %v194
    %v526 = vunpack.c.h.b16 %v194
    %v527 = vunpack.c.l.b16 %v195
    %v528 = vunpack.c.h.b16 %v195
    %v529 = vunpack.c.l.b16 %v196
    %v530 = vunpack.c.h.b16 %v196
    %v531 = vunpack.c.l.b16 %v197
    %v532 = vunpack.c.h.b16 %v197
    %v533 = vunpack.c.l.b16 %v198
    %v534 = vunpack.c.h.b16 %v198
    %v535 = vunpack.c.l.b16 %v199
    %v536 = vunpack.c.h.b16 %v199
    %v537 = vunpack.c.l.b16 %v200
    %v538 = vunpack.c.h.b16 %v200
    %v539 = vunpack.c.l.b16 %v201
    %v540 = vunpack.c.h.b16 %v201
    %v541 = vunpack.c.l.b16 %v202
    %v542 = vunpack.c.h.b16 %v202
    %v543 = vunpack.c.l.b16 %v203
    %v544 = vunpack.c.h.b16 %v203
    %v545 = vpack.c.b16 %v485, %v481
    %v546 = vpack.c.b16 %v486, %v482
    %v547 = vpack.c.b16 %v487, %v483
    %v548 = vpack.c.b16 %v488, %v484
    %v549 = vpack.c.b16 %v493, %v489
    %v550 = vpack.c.b16 %v494, %v490
    %v551 = vpack.c.b16 %v495, %v491
    %v552 = vpack.c.b16 %v496, %v492
    %v553 = vpack.c.b16 %v501, %v497
    %v554 = vpack.c.b16 %v502, %v498
    %v555 = vpack.c.b16 %v503, %v499
    %v556 = vpack.c.b16 %v504, %v500
    %v557 = vpack.c.b16 %v509, %v505
    %v558 = vpack.c.b16 %v510, %v506
    %v559 = vpack.c.b16 %v511, %v507
    %v560 = vpack.c.b16 %v512, %v508
    %v561 = vpack.c.b16 %v517, %v513
    %v562 = vpack.c.b16 %v518, %v514
    %v563 = vpack.c.b16 %v519, %v515
    %v564 = vpack.c.b16 %v520, %v516
    %v565 = vpack.c.b16 %v525, %v521
    %v566 = vpack.c.b16 %v526, %v522
    %v567 = vpack.c.b16 %v527, %v523
    %v568 = vpack.c.b16 %v528, %v524
    %v569 = vpack.c.b16 %v533, %v529
    %v570 = vpack.c.b16 %v534, %v530
    %v571 = vpack.c.b16 %v535, %v531
    %v572 = vpack.c.b16 %v536, %v532
    %v573 = vpack.c.b16 %v541, %v537
    %v574 = vpack.c.b16 %v542, %v538
    %v575 = vpack.c.b16 %v543, %v539
    %v576 = vpack.c.b16 %v544, %v540
    %609 = vmatpush.bf16.msra.mxu0 %v573
    %610 = vmatpush.bf16.msra.mxu0 %v569
    %611 = vmatpush.bf16.msra.mxu0 %v565
    %612 = vmatpush.bf16.msra.mxu0 %v561
    %613 = vmatpush.bf16.msra.mxu0 %v557
    %614 = vmatpush.bf16.msra.mxu0 %v553
    %615 = vmatpush.bf16.msra.mxu0 %v549
    %616 = vmatpush.bf16.msra.mxu0 %v545
    %617 = vmatmul.bf16.gmra.mxu0 %v171
    %v618 = vpop.f32.mrf.mxu0
    %v619 = vadd.f32 %v407, %v618
    %v620 = vpop.f32.mrf.mxu0
    %621 = vdwg.mxu0
    %622 = vmatpush.bf16.msra.mxu0 %v574
    %623 = vmatpush.bf16.msra.mxu0 %v570
    %624 = vmatpush.bf16.msra.mxu0 %v566
    %625 = vmatpush.bf16.msra.mxu0 %v562
    %626 = vmatpush.bf16.msra.mxu0 %v558
    %627 = vmatpush.bf16.msra.mxu0 %v554
    %628 = vmatpush.bf16.msra.mxu0 %v550
    %629 = vmatpush.bf16.msra.mxu0 %v546
    %630 = vmatmul.bf16.gmra.mxu0 %v171
    %v631 = vpop.f32.mrf.mxu0
    %v632 = vadd.f32 %v420, %v631
    %v633 = vpop.f32.mrf.mxu0
    %634 = vdwg.mxu0
    %635 = vmatpush.bf16.msra.mxu0 %v575
    %636 = vmatpush.bf16.msra.mxu0 %v571
    %637 = vmatpush.bf16.msra.mxu0 %v567
    %638 = vmatpush.bf16.msra.mxu0 %v563
    %639 = vmatpush.bf16.msra.mxu0 %v559
    %640 = vmatpush.bf16.msra.mxu0 %v555
    %641 = vmatpush.bf16.msra.mxu0 %v551
    %642 = vmatpush.bf16.msra.mxu0 %v547
    %643 = vmatmul.bf16.gmra.mxu0 %v171
    %v644 = vpop.f32.mrf.mxu0
    %v645 = vadd.f32 %v433, %v644
    %v646 = vpop.f32.mrf.mxu0
    %647 = vdwg.mxu0
    %648 = vmatpush.bf16.msra.mxu0 %v576
    %649 = vmatpush.bf16.msra.mxu0 %v572
    %650 = vmatpush.bf16.msra.mxu0 %v568
    %651 = vmatpush.bf16.msra.mxu0 %v564
    %652 = vmatpush.bf16.msra.mxu0 %v560
    %653 = vmatpush.bf16.msra.mxu0 %v556
    %654 = vmatpush.bf16.msra.mxu0 %v552
    %655 = vmatpush.bf16.msra.mxu0 %v548
    %656 = vmatmul.bf16.gmra.mxu0 %v171
    %v657 = vpop.f32.mrf.mxu0
    %v658 = vadd.f32 %v446, %v657
    %v659 = vpop.f32.mrf.mxu0
    %660 = vdwg.mxu0
    %v661 = vadd.f32 %v619, %v67
    %v662 = vadd.f32 %v632, %v68
    %v663 = vadd.f32 %v645, %v69
    %v664 = vadd.f32 %v658, %v70
    %v665 = vxor.u32 %v661, 2147483648
    %v666 = vmul.f32 %v665, 1.442695
    %v667 = vpow.pop %v666
    %v668 = vadd.f32 %v667, 1.0
    %v669 = vrcp.pop %v668
    %v670 = vmul.f32 %v668, %v669
    %v671 = vsub.f32 1.0, %v670
    %v672 = vmul.f32 %v669, %v671
    %v673 = vadd.f32 %v669, %v672
    %vm674 = vweird.f32 %v668
    %vm675 = vweird.f32 %v669
    %vm676 = vmor %vm674, %vm675
    %v677 = vsel %vm676, %v669, %v673
    %v678 = vand.u32 2147483647, %v668
    %vm679 = vcmp.eq.f32.partialorder %v678, 8.507059e+37
    %v680 = vand.u32 %v668, 2147483648
    %v681 = vor.u32 1.1754944e-38, %v680
    %v682 = vsel %vm679, %v681, %v677
    %v683 = vmul.f32 1.0, %v682
    %v684 = vxor.u32 %v662, 2147483648
    %v685 = vmul.f32 %v684, 1.442695
    %v686 = vpow.pop %v685
    %v687 = vadd.f32 %v686, 1.0
    %v688 = vrcp.pop %v687
    %v689 = vmul.f32 %v687, %v688
    %v690 = vsub.f32 1.0, %v689
    %v691 = vmul.f32 %v688, %v690
    %v692 = vadd.f32 %v688, %v691
    %vm693 = vweird.f32 %v687
    %vm694 = vweird.f32 %v688
    %vm695 = vmor %vm693, %vm694
    %v696 = vsel %vm695, %v688, %v692
    %v697 = vand.u32 2147483647, %v687
    %vm698 = vcmp.eq.f32.partialorder %v697, 8.507059e+37
    %v699 = vand.u32 %v687, 2147483648
    %v700 = vor.u32 1.1754944e-38, %v699
    %v701 = vsel %vm698, %v700, %v696
    %v702 = vmul.f32 1.0, %v701
    %v703 = vtanh.pop %v663
    %v704 = vxor.u32 %v664, 2147483648
    %v705 = vmul.f32 %v704, 1.442695
    %v706 = vpow.pop %v705
    %v707 = vadd.f32 %v706, 1.0
    %v708 = vrcp.pop %v707
    %v709 = vmul.f32 %v707, %v708
    %v710 = vsub.f32 1.0, %v709
    %v711 = vmul.f32 %v708, %v710
    %v712 = vadd.f32 %v708, %v711
    %vm713 = vweird.f32 %v707
    %vm714 = vweird.f32 %v708
    %vm715 = vmor %vm713, %vm714
    %v716 = vsel %vm715, %v708, %v712
    %v717 = vand.u32 2147483647, %v707
    %vm718 = vcmp.eq.f32.partialorder %v717, 8.507059e+37
    %v719 = vand.u32 %v707, 2147483648
    %v720 = vor.u32 1.1754944e-38, %v719
    %v721 = vsel %vm718, %v720, %v716
    %v722 = vmul.f32 1.0, %v721
    %v723 = vmul.f32 %v702, %v83
    %v724 = vmul.f32 %v683, %v703
    %v725 = vadd.f32 %v723, %v724
    %v726 = vtanh.pop %v725
    %v727 = vmul.f32 %v722, %v726
    %v728 = vpack.c.bf16 %v727, %v727
    %v729 = vld [vmem:[%s8] sm:$0xf]
    %v730 = vld [vmem:[%s8 + $0x4] sm:$0xf]
    %v731 = vld [vmem:[%s8 + $0x8] sm:$0xf]
    %v732 = vld [vmem:[%s8 + $0xc] sm:$0xf]
    %v733 = vld [vmem:[%s8 + $0x10] sm:$0xf]
    %v734 = vld [vmem:[%s8 + $0x14] sm:$0xf]
    %v735 = vld [vmem:[%s8 + $0x18] sm:$0xf]
    %v736 = vld [vmem:[%s8 + $0x1c] sm:$0xf]
    %v737 = vld [vmem:[%s8 + $0x20] sm:$0xf]
    %v738 = vld [vmem:[%s8 + $0x24] sm:$0xf]
    %v739 = vld [vmem:[%s8 + $0x28] sm:$0xf]
    %v740 = vld [vmem:[%s8 + $0x2c] sm:$0xf]
    %v741 = vld [vmem:[%s8 + $0x30] sm:$0xf]
    %v742 = vld [vmem:[%s8 + $0x34] sm:$0xf]
    %v743 = vld [vmem:[%s8 + $0x38] sm:$0xf]
    %v744 = vld [vmem:[%s8 + $0x3c] sm:$0xf]
    %v761 = vunpack.c.l.b16 %v729
    %v762 = vunpack.c.l.b16 %v730
    %v763 = vunpack.c.l.b16 %v731
    %v764 = vunpack.c.l.b16 %v732
    %v765 = vunpack.c.l.b16 %v733
    %v766 = vunpack.c.l.b16 %v734
    %v767 = vunpack.c.l.b16 %v735
    %v768 = vunpack.c.l.b16 %v736
    %v769 = vunpack.c.l.b16 %v737
    %v770 = vunpack.c.l.b16 %v738
    %v771 = vunpack.c.l.b16 %v739
    %v772 = vunpack.c.l.b16 %v740
    %v773 = vunpack.c.l.b16 %v741
    %v774 = vunpack.c.l.b16 %v742
    %v775 = vunpack.c.l.b16 %v743
    %v776 = vunpack.c.l.b16 %v744
    %v777 = vpack.c.b16 %v762, %v761
    %v778 = vpack.c.b16 %v764, %v763
    %v779 = vpack.c.b16 %v766, %v765
    %v780 = vpack.c.b16 %v768, %v767
    %v781 = vpack.c.b16 %v770, %v769
    %v782 = vpack.c.b16 %v772, %v771
    %v783 = vpack.c.b16 %v774, %v773
    %v784 = vpack.c.b16 %v776, %v775
    %793 = vmatpush.bf16.msra.mxu0 %v784
    %794 = vmatpush.bf16.msra.mxu0 %v783
    %795 = vmatpush.bf16.msra.mxu0 %v782
    %796 = vmatpush.bf16.msra.mxu0 %v781
    %797 = vmatpush.bf16.msra.mxu0 %v780
    %798 = vmatpush.bf16.msra.mxu0 %v779
    %799 = vmatpush.bf16.msra.mxu0 %v778
    %800 = vmatpush.bf16.msra.mxu0 %v777
    %801 = vmatmul.bf16.gmra.mxu0 %v728
    %v802 = vpop.f32.mrf.mxu0
    %v803 = vadd.f32 %v77, %v802
    %v804 = vpop.f32.mrf.mxu0
    %805 = vdwg.mxu0
    %806 = vst [vmem:[%s10] sm:$0xff] %v803
    %v807 = vsel %vm81, %v803, -inf
    %808 = vmax.xlane.f32.xlu0 %v807
    %v809 = vpop.xlane.xlu0 %808
    %vm810 = vcmp.eq.f32.partialorder %v807, %v809
    %v811 = vsel %vm810, %v80, 128
    %v812 = vand.u32 %v811, 65535
    %v813 = vshra.s32 %v811, 16
    %v814 = vcvt.s32.f32 %v812
    %v815 = vcvt.s32.f32 %v813
    %816 = vmin.xlane.f32.xlu0 %v815
    %v817 = vpop.xlane.xlu0 %816
    %vm818 = vcmp.eq.f32.partialorder %v815, %v817
    %v819 = vsel %vm818, %v814, inf
    %820 = vmin.xlane.f32.xlu0 %v819
    %v821 = vpop.xlane.xlu0 %820
    %v822 = vcvt.f32.s32 %v821
    %v823 = vcvt.f32.s32 %v817
    %v824 = vshll.u32 %v823, 16
    %v825 = vadd.s32 %v824, %v822
    %vm826 = vcmp.eq.s32.totalorder %v80, %v825
    %v827 = vsel %vm826, 1, 0
    %v828 = vcvt.s32.f32 %v827
    %v829 = vpack.c.bf16 %v828, %v828
    %s830 = scalar_lea.vmem %s1, 4
    %v831 = vld [vmem:[%s830] sm:$0xf]
    %s832 = sld [smem:[#allocation2 + $0x1]]
    %p833 = scmp.gt.s32.totalorder %s832, 0
    // Predicated region
    $region58: #{forward.3} parent=1 // pred_check
      %p834 = pneg %p833
    $region59: #{forward.3} parent=1 // pred_check_branch
      %836 = sbr.rel (%p834) target = $region61
    $region60: #{forward.3} parent=1 // pred_region
      _
    $region61: #{forward.3} parent=1 // pred_fallthru
      _
    %p837 = pneg %p833
    // Predicated region
    $region62: #{forward.3} parent=1 // pred_check
      _
    $region63: #{forward.3} parent=1 // pred_check_branch
      %839 = sbr.rel (%p833) target = $region65
    $region64: #{forward.3} parent=1 // pred_region
      %v840 = vld [vmem:[%s4] sm:$0xf]
      %v841 = vld [vmem:[%s4 + $0x4] sm:$0xf]
      %v842 = vld [vmem:[%s4 + $0x8] sm:$0xf]
      %v843 = vld [vmem:[%s4 + $0xc] sm:$0xf]
      %v844 = vld [vmem:[%s4 + $0x10] sm:$0xf]
      %v845 = vld [vmem:[%s4 + $0x14] sm:$0xf]
      %v846 = vld [vmem:[%s4 + $0x18] sm:$0xf]
      %v847 = vld [vmem:[%s4 + $0x1c] sm:$0xf]
      %v848 = vld [vmem:[%s4 + $0x20] sm:$0xf]
      %v849 = vld [vmem:[%s4 + $0x24] sm:$0xf]
      %v850 = vld [vmem:[%s4 + $0x28] sm:$0xf]
      %v851 = vld [vmem:[%s4 + $0x2c] sm:$0xf]
      %v852 = vld [vmem:[%s4 + $0x30] sm:$0xf]
      %v853 = vld [vmem:[%s4 + $0x34] sm:$0xf]
      %v854 = vld [vmem:[%s4 + $0x38] sm:$0xf]
      %v855 = vld [vmem:[%s4 + $0x3c] sm:$0xf]
      %v872 = vunpack.c.l.b16 %v840
      %v873 = vunpack.c.l.b16 %v841
      %v874 = vunpack.c.l.b16 %v842
      %v875 = vunpack.c.l.b16 %v843
      %v876 = vunpack.c.l.b16 %v844
      %v877 = vunpack.c.l.b16 %v845
      %v878 = vunpack.c.l.b16 %v846
      %v879 = vunpack.c.l.b16 %v847
      %v880 = vunpack.c.l.b16 %v848
      %v881 = vunpack.c.l.b16 %v849
      %v882 = vunpack.c.l.b16 %v850
      %v883 = vunpack.c.l.b16 %v851
      %v884 = vunpack.c.l.b16 %v852
      %v885 = vunpack.c.l.b16 %v853
      %v886 = vunpack.c.l.b16 %v854
      %v887 = vunpack.c.l.b16 %v855
      %v888 = vpack.c.b16 %v873, %v872
      %v889 = vpack.c.b16 %v875, %v874
      %v890 = vpack.c.b16 %v877, %v876
      %v891 = vpack.c.b16 %v879, %v878
      %v892 = vpack.c.b16 %v881, %v880
      %v893 = vpack.c.b16 %v883, %v882
      %v894 = vpack.c.b16 %v885, %v884
      %v895 = vpack.c.b16 %v887, %v886
      %904 = vmatpush.bf16.msra.mxu0 %v895
      %905 = vmatpush.bf16.msra.mxu0 %v894
      %906 = vmatpush.bf16.msra.mxu0 %v893
      %907 = vmatpush.bf16.msra.mxu0 %v892
      %908 = vmatpush.bf16.msra.mxu0 %v891
      %909 = vmatpush.bf16.msra.mxu0 %v890
      %910 = vmatpush.bf16.msra.mxu0 %v889
      %911 = vmatpush.bf16.msra.mxu0 %v888
      %912 = vmatmul.bf16.gmra.mxu0 %v829
      %v913 = vpop.f32.mrf.mxu0
      %v914 = vadd.f32 0.0, %v913
      %v915 = vpop.f32.mrf.mxu0
      %916 = vdwg.mxu0
      %v917 = vpack.c.bf16 %v914, %v914
    $region65: #{forward.3} parent=1 // pred_fallthru
      %v918 = vphi %v831, %v917
    %v919 = vld [vmem:[#allocation5] sm:$0xff]
    %v920 = vld [vmem:[#allocation5 + $0x8] sm:$0xff]
    %v921 = vld [vmem:[#allocation5 + $0x10] sm:$0xff]
    %v922 = vld [vmem:[#allocation5 + $0x18] sm:$0xff]
    %v923 = vld [vmem:[#allocation5 + $0x20] sm:$0xff]
    %v924 = vld [vmem:[#allocation5 + $0x28] sm:$0xff]
    %v925 = vld [vmem:[#allocation5 + $0x30] sm:$0xff]
    %v926 = vld [vmem:[#allocation5 + $0x38] sm:$0xff]
    %v927 = vld [vmem:[#allocation5 + $0x40] sm:$0xff]
    %v928 = vld [vmem:[#allocation5 + $0x48] sm:$0xff]
    %v929 = vld [vmem:[#allocation5 + $0x50] sm:$0xff]
    %v930 = vld [vmem:[#allocation5 + $0x58] sm:$0xff]
    %v931 = vld [vmem:[#allocation5 + $0x60] sm:$0xff]
    %v932 = vld [vmem:[#allocation5 + $0x68] sm:$0xff]
    %v933 = vld [vmem:[#allocation5 + $0x70] sm:$0xff]
    %v934 = vld [vmem:[#allocation5 + $0x78] sm:$0xff]
    %v935 = vld [vmem:[#allocation5 + $0x80] sm:$0xff]
    %v936 = vld [vmem:[#allocation5 + $0x88] sm:$0xff]
    %v937 = vld [vmem:[#allocation5 + $0x90] sm:$0xff]
    %v938 = vld [vmem:[#allocation5 + $0x98] sm:$0xff]
    %v939 = vld [vmem:[#allocation5 + $0xa0] sm:$0xff]
    %v940 = vld [vmem:[#allocation5 + $0xa8] sm:$0xff]
    %v941 = vld [vmem:[#allocation5 + $0xb0] sm:$0xff]
    %v942 = vld [vmem:[#allocation5 + $0xb8] sm:$0xff]
    %v943 = vld [vmem:[#allocation5 + $0xc0] sm:$0xff]
    %v944 = vld [vmem:[#allocation5 + $0xc8] sm:$0xff]
    %v945 = vld [vmem:[#allocation5 + $0xd0] sm:$0xff]
    %v946 = vld [vmem:[#allocation5 + $0xd8] sm:$0xff]
    %v947 = vld [vmem:[#allocation5 + $0xe0] sm:$0xff]
    %v948 = vld [vmem:[#allocation5 + $0xe8] sm:$0xff]
    %v949 = vld [vmem:[#allocation5 + $0xf0] sm:$0xff]
    %v950 = vld [vmem:[#allocation5 + $0xf8] sm:$0xff]
    %v951 = vld [vmem:[%s6] sm:$0xff]
    %v952 = vld [vmem:[%s6 + $0x8] sm:$0xff]
    %v953 = vld [vmem:[%s6 + $0x10] sm:$0xff]
    %v954 = vld [vmem:[%s6 + $0x18] sm:$0xff]
    %v955 = vld [vmem:[%s6 + $0x20] sm:$0xff]
    %v956 = vld [vmem:[%s6 + $0x28] sm:$0xff]
    %v957 = vld [vmem:[%s6 + $0x30] sm:$0xff]
    %v958 = vld [vmem:[%s6 + $0x38] sm:$0xff]
    %v959 = vld [vmem:[%s6 + $0x40] sm:$0xff]
    %v960 = vld [vmem:[%s6 + $0x48] sm:$0xff]
    %v961 = vld [vmem:[%s6 + $0x50] sm:$0xff]
    %v962 = vld [vmem:[%s6 + $0x58] sm:$0xff]
    %v963 = vld [vmem:[%s6 + $0x60] sm:$0xff]
    %v964 = vld [vmem:[%s6 + $0x68] sm:$0xff]
    %v965 = vld [vmem:[%s6 + $0x70] sm:$0xff]
    %v966 = vld [vmem:[%s6 + $0x78] sm:$0xff]
    %v967 = vld [vmem:[%s6 + $0x80] sm:$0xff]
    %v968 = vld [vmem:[%s6 + $0x88] sm:$0xff]
    %v969 = vld [vmem:[%s6 + $0x90] sm:$0xff]
    %v970 = vld [vmem:[%s6 + $0x98] sm:$0xff]
    %v971 = vld [vmem:[%s6 + $0xa0] sm:$0xff]
    %v972 = vld [vmem:[%s6 + $0xa8] sm:$0xff]
    %v973 = vld [vmem:[%s6 + $0xb0] sm:$0xff]
    %v974 = vld [vmem:[%s6 + $0xb8] sm:$0xff]
    %v975 = vld [vmem:[%s6 + $0xc0] sm:$0xff]
    %v976 = vld [vmem:[%s6 + $0xc8] sm:$0xff]
    %v977 = vld [vmem:[%s6 + $0xd0] sm:$0xff]
    %v978 = vld [vmem:[%s6 + $0xd8] sm:$0xff]
    %v979 = vld [vmem:[%s6 + $0xe0] sm:$0xff]
    %v980 = vld [vmem:[%s6 + $0xe8] sm:$0xff]
    %v981 = vld [vmem:[%s6 + $0xf0] sm:$0xff]
    %v982 = vld [vmem:[%s6 + $0xf8] sm:$0xff]
    %v1015 = vunpack.c.l.b16 %v951
    %v1016 = vunpack.c.h.b16 %v951
    %v1017 = vunpack.c.l.b16 %v952
    %v1018 = vunpack.c.h.b16 %v952
    %v1019 = vunpack.c.l.b16 %v953
    %v1020 = vunpack.c.h.b16 %v953
    %v1021 = vunpack.c.l.b16 %v954
    %v1022 = vunpack.c.h.b16 %v954
    %v1023 = vunpack.c.l.b16 %v955
    %v1024 = vunpack.c.h.b16 %v955
    %v1025 = vunpack.c.l.b16 %v956
    %v1026 = vunpack.c.h.b16 %v956
    %v1027 = vunpack.c.l.b16 %v957
    %v1028 = vunpack.c.h.b16 %v957
    %v1029 = vunpack.c.l.b16 %v958
    %v1030 = vunpack.c.h.b16 %v958
    %v1031 = vunpack.c.l.b16 %v959
    %v1032 = vunpack.c.h.b16 %v959
    %v1033 = vunpack.c.l.b16 %v960
    %v1034 = vunpack.c.h.b16 %v960
    %v1035 = vunpack.c.l.b16 %v961
    %v1036 = vunpack.c.h.b16 %v961
    %v1037 = vunpack.c.l.b16 %v962
    %v1038 = vunpack.c.h.b16 %v962
    %v1039 = vunpack.c.l.b16 %v963
    %v1040 = vunpack.c.h.b16 %v963
    %v1041 = vunpack.c.l.b16 %v964
    %v1042 = vunpack.c.h.b16 %v964
    %v1043 = vunpack.c.l.b16 %v965
    %v1044 = vunpack.c.h.b16 %v965
    %v1045 = vunpack.c.l.b16 %v966
    %v1046 = vunpack.c.h.b16 %v966
    %v1047 = vunpack.c.l.b16 %v967
    %v1048 = vunpack.c.h.b16 %v967
    %v1049 = vunpack.c.l.b16 %v968
    %v1050 = vunpack.c.h.b16 %v968
    %v1051 = vunpack.c.l.b16 %v969
    %v1052 = vunpack.c.h.b16 %v969
    %v1053 = vunpack.c.l.b16 %v970
    %v1054 = vunpack.c.h.b16 %v970
    %v1055 = vunpack.c.l.b16 %v971
    %v1056 = vunpack.c.h.b16 %v971
    %v1057 = vunpack.c.l.b16 %v972
    %v1058 = vunpack.c.h.b16 %v972
    %v1059 = vunpack.c.l.b16 %v973
    %v1060 = vunpack.c.h.b16 %v973
    %v1061 = vunpack.c.l.b16 %v974
    %v1062 = vunpack.c.h.b16 %v974
    %v1063 = vunpack.c.l.b16 %v975
    %v1064 = vunpack.c.h.b16 %v975
    %v1065 = vunpack.c.l.b16 %v976
    %v1066 = vunpack.c.h.b16 %v976
    %v1067 = vunpack.c.l.b16 %v977
    %v1068 = vunpack.c.h.b16 %v977
    %v1069 = vunpack.c.l.b16 %v978
    %v1070 = vunpack.c.h.b16 %v978
    %v1071 = vunpack.c.l.b16 %v979
    %v1072 = vunpack.c.h.b16 %v979
    %v1073 = vunpack.c.l.b16 %v980
    %v1074 = vunpack.c.h.b16 %v980
    %v1075 = vunpack.c.l.b16 %v981
    %v1076 = vunpack.c.h.b16 %v981
    %v1077 = vunpack.c.l.b16 %v982
    %v1078 = vunpack.c.h.b16 %v982
    %v1079 = vpack.c.b16 %v1019, %v1015
    %v1080 = vpack.c.b16 %v1020, %v1016
    %v1081 = vpack.c.b16 %v1021, %v1017
    %v1082 = vpack.c.b16 %v1022, %v1018
    %v1083 = vpack.c.b16 %v1027, %v1023
    %v1084 = vpack.c.b16 %v1028, %v1024
    %v1085 = vpack.c.b16 %v1029, %v1025
    %v1086 = vpack.c.b16 %v1030, %v1026
    %v1087 = vpack.c.b16 %v1035, %v1031
    %v1088 = vpack.c.b16 %v1036, %v1032
    %v1089 = vpack.c.b16 %v1037, %v1033
    %v1090 = vpack.c.b16 %v1038, %v1034
    %v1091 = vpack.c.b16 %v1043, %v1039
    %v1092 = vpack.c.b16 %v1044, %v1040
    %v1093 = vpack.c.b16 %v1045, %v1041
    %v1094 = vpack.c.b16 %v1046, %v1042
    %v1095 = vpack.c.b16 %v1051, %v1047
    %v1096 = vpack.c.b16 %v1052, %v1048
    %v1097 = vpack.c.b16 %v1053, %v1049
    %v1098 = vpack.c.b16 %v1054, %v1050
    %v1099 = vpack.c.b16 %v1059, %v1055
    %v1100 = vpack.c.b16 %v1060, %v1056
    %v1101 = vpack.c.b16 %v1061, %v1057
    %v1102 = vpack.c.b16 %v1062, %v1058
    %v1103 = vpack.c.b16 %v1067, %v1063
    %v1104 = vpack.c.b16 %v1068, %v1064
    %v1105 = vpack.c.b16 %v1069, %v1065
    %v1106 = vpack.c.b16 %v1070, %v1066
    %v1107 = vpack.c.b16 %v1075, %v1071
    %v1108 = vpack.c.b16 %v1076, %v1072
    %v1109 = vpack.c.b16 %v1077, %v1073
    %v1110 = vpack.c.b16 %v1078, %v1074
    %1143 = vmatpush.bf16.msra.mxu0 %v1107
    %1144 = vmatpush.bf16.msra.mxu0 %v1103
    %1145 = vmatpush.bf16.msra.mxu0 %v1099
    %1146 = vmatpush.bf16.msra.mxu0 %v1095
    %1147 = vmatpush.bf16.msra.mxu0 %v1091
    %1148 = vmatpush.bf16.msra.mxu0 %v1087
    %1149 = vmatpush.bf16.msra.mxu0 %v1083
    %1150 = vmatpush.bf16.msra.mxu0 %v1079
    %1151 = vmatmul.bf16.gmra.mxu0 %v728
    %v1152 = vpop.f32.mrf.mxu0
    %v1153 = vadd.f32 0.0, %v1152
    %v1154 = vpop.f32.mrf.mxu0
    %1155 = vdwg.mxu0
    %1156 = vmatpush.bf16.msra.mxu0 %v1108
    %1157 = vmatpush.bf16.msra.mxu0 %v1104
    %1158 = vmatpush.bf16.msra.mxu0 %v1100
    %1159 = vmatpush.bf16.msra.mxu0 %v1096
    %1160 = vmatpush.bf16.msra.mxu0 %v1092
    %1161 = vmatpush.bf16.msra.mxu0 %v1088
    %1162 = vmatpush.bf16.msra.mxu0 %v1084
    %1163 = vmatpush.bf16.msra.mxu0 %v1080
    %1164 = vmatmul.bf16.gmra.mxu0 %v728
    %v1165 = vpop.f32.mrf.mxu0
    %v1166 = vadd.f32 0.0, %v1165
    %v1167 = vpop.f32.mrf.mxu0
    %1168 = vdwg.mxu0
    %1169 = vmatpush.bf16.msra.mxu0 %v1109
    %1170 = vmatpush.bf16.msra.mxu0 %v1105
    %1171 = vmatpush.bf16.msra.mxu0 %v1101
    %1172 = vmatpush.bf16.msra.mxu0 %v1097
    %1173 = vmatpush.bf16.msra.mxu0 %v1093
    %1174 = vmatpush.bf16.msra.mxu0 %v1089
    %1175 = vmatpush.bf16.msra.mxu0 %v1085
    %1176 = vmatpush.bf16.msra.mxu0 %v1081
    %1177 = vmatmul.bf16.gmra.mxu0 %v728
    %v1178 = vpop.f32.mrf.mxu0
    %v1179 = vadd.f32 0.0, %v1178
    %v1180 = vpop.f32.mrf.mxu0
    %1181 = vdwg.mxu0
    %1182 = vmatpush.bf16.msra.mxu0 %v1110
    %1183 = vmatpush.bf16.msra.mxu0 %v1106
    %1184 = vmatpush.bf16.msra.mxu0 %v1102
    %1185 = vmatpush.bf16.msra.mxu0 %v1098
    %1186 = vmatpush.bf16.msra.mxu0 %v1094
    %1187 = vmatpush.bf16.msra.mxu0 %v1090
    %1188 = vmatpush.bf16.msra.mxu0 %v1086
    %1189 = vmatpush.bf16.msra.mxu0 %v1082
    %1190 = vmatmul.bf16.gmra.mxu0 %v728
    %v1191 = vpop.f32.mrf.mxu0
    %v1192 = vadd.f32 0.0, %v1191
    %v1193 = vpop.f32.mrf.mxu0
    %1194 = vdwg.mxu0
    %v1227 = vunpack.c.l.b16 %v919
    %v1228 = vunpack.c.h.b16 %v919
    %v1229 = vunpack.c.l.b16 %v920
    %v1230 = vunpack.c.h.b16 %v920
    %v1231 = vunpack.c.l.b16 %v921
    %v1232 = vunpack.c.h.b16 %v921
    %v1233 = vunpack.c.l.b16 %v922
    %v1234 = vunpack.c.h.b16 %v922
    %v1235 = vunpack.c.l.b16 %v923
    %v1236 = vunpack.c.h.b16 %v923
    %v1237 = vunpack.c.l.b16 %v924
    %v1238 = vunpack.c.h.b16 %v924
    %v1239 = vunpack.c.l.b16 %v925
    %v1240 = vunpack.c.h.b16 %v925
    %v1241 = vunpack.c.l.b16 %v926
    %v1242 = vunpack.c.h.b16 %v926
    %v1243 = vunpack.c.l.b16 %v927
    %v1244 = vunpack.c.h.b16 %v927
    %v1245 = vunpack.c.l.b16 %v928
    %v1246 = vunpack.c.h.b16 %v928
    %v1247 = vunpack.c.l.b16 %v929
    %v1248 = vunpack.c.h.b16 %v929
    %v1249 = vunpack.c.l.b16 %v930
    %v1250 = vunpack.c.h.b16 %v930
    %v1251 = vunpack.c.l.b16 %v931
    %v1252 = vunpack.c.h.b16 %v931
    %v1253 = vunpack.c.l.b16 %v932
    %v1254 = vunpack.c.h.b16 %v932
    %v1255 = vunpack.c.l.b16 %v933
    %v1256 = vunpack.c.h.b16 %v933
    %v1257 = vunpack.c.l.b16 %v934
    %v1258 = vunpack.c.h.b16 %v934
    %v1259 = vunpack.c.l.b16 %v935
    %v1260 = vunpack.c.h.b16 %v935
    %v1261 = vunpack.c.l.b16 %v936
    %v1262 = vunpack.c.h.b16 %v936
    %v1263 = vunpack.c.l.b16 %v937
    %v1264 = vunpack.c.h.b16 %v937
    %v1265 = vunpack.c.l.b16 %v938
    %v1266 = vunpack.c.h.b16 %v938
    %v1267 = vunpack.c.l.b16 %v939
    %v1268 = vunpack.c.h.b16 %v939
    %v1269 = vunpack.c.l.b16 %v940
    %v1270 = vunpack.c.h.b16 %v940
    %v1271 = vunpack.c.l.b16 %v941
    %v1272 = vunpack.c.h.b16 %v941
    %v1273 = vunpack.c.l.b16 %v942
    %v1274 = vunpack.c.h.b16 %v942
    %v1275 = vunpack.c.l.b16 %v943
    %v1276 = vunpack.c.h.b16 %v943
    %v1277 = vunpack.c.l.b16 %v944
    %v1278 = vunpack.c.h.b16 %v944
    %v1279 = vunpack.c.l.b16 %v945
    %v1280 = vunpack.c.h.b16 %v945
    %v1281 = vunpack.c.l.b16 %v946
    %v1282 = vunpack.c.h.b16 %v946
    %v1283 = vunpack.c.l.b16 %v947
    %v1284 = vunpack.c.h.b16 %v947
    %v1285 = vunpack.c.l.b16 %v948
    %v1286 = vunpack.c.h.b16 %v948
    %v1287 = vunpack.c.l.b16 %v949
    %v1288 = vunpack.c.h.b16 %v949
    %v1289 = vunpack.c.l.b16 %v950
    %v1290 = vunpack.c.h.b16 %v950
    %v1291 = vpack.c.b16 %v1231, %v1227
    %v1292 = vpack.c.b16 %v1232, %v1228
    %v1293 = vpack.c.b16 %v1233, %v1229
    %v1294 = vpack.c.b16 %v1234, %v1230
    %v1295 = vpack.c.b16 %v1239, %v1235
    %v1296 = vpack.c.b16 %v1240, %v1236
    %v1297 = vpack.c.b16 %v1241, %v1237
    %v1298 = vpack.c.b16 %v1242, %v1238
    %v1299 = vpack.c.b16 %v1247, %v1243
    %v1300 = vpack.c.b16 %v1248, %v1244
    %v1301 = vpack.c.b16 %v1249, %v1245
    %v1302 = vpack.c.b16 %v1250, %v1246
    %v1303 = vpack.c.b16 %v1255, %v1251
    %v1304 = vpack.c.b16 %v1256, %v1252
    %v1305 = vpack.c.b16 %v1257, %v1253
    %v1306 = vpack.c.b16 %v1258, %v1254
    %v1307 = vpack.c.b16 %v1263, %v1259
    %v1308 = vpack.c.b16 %v1264, %v1260
    %v1309 = vpack.c.b16 %v1265, %v1261
    %v1310 = vpack.c.b16 %v1266, %v1262
    %v1311 = vpack.c.b16 %v1271, %v1267
    %v1312 = vpack.c.b16 %v1272, %v1268
    %v1313 = vpack.c.b16 %v1273, %v1269
    %v1314 = vpack.c.b16 %v1274, %v1270
    %v1315 = vpack.c.b16 %v1279, %v1275
    %v1316 = vpack.c.b16 %v1280, %v1276
    %v1317 = vpack.c.b16 %v1281, %v1277
    %v1318 = vpack.c.b16 %v1282, %v1278
    %v1319 = vpack.c.b16 %v1287, %v1283
    %v1320 = vpack.c.b16 %v1288, %v1284
    %v1321 = vpack.c.b16 %v1289, %v1285
    %v1322 = vpack.c.b16 %v1290, %v1286
    %1355 = vmatpush.bf16.msra.mxu0 %v1319
    %1356 = vmatpush.bf16.msra.mxu0 %v1315
    %1357 = vmatpush.bf16.msra.mxu0 %v1311
    %1358 = vmatpush.bf16.msra.mxu0 %v1307
    %1359 = vmatpush.bf16.msra.mxu0 %v1303
    %1360 = vmatpush.bf16.msra.mxu0 %v1299
    %1361 = vmatpush.bf16.msra.mxu0 %v1295
    %1362 = vmatpush.bf16.msra.mxu0 %v1291
    %1363 = vmatmul.bf16.gmra.mxu0 %v918
    %v1364 = vpop.f32.mrf.mxu0
    %v1365 = vadd.f32 %v1153, %v1364
    %v1366 = vpop.f32.mrf.mxu0
    %1367 = vdwg.mxu0
    %1368 = vmatpush.bf16.msra.mxu0 %v1320
    %1369 = vmatpush.bf16.msra.mxu0 %v1316
    %1370 = vmatpush.bf16.msra.mxu0 %v1312
    %1371 = vmatpush.bf16.msra.mxu0 %v1308
    %1372 = vmatpush.bf16.msra.mxu0 %v1304
    %1373 = vmatpush.bf16.msra.mxu0 %v1300
    %1374 = vmatpush.bf16.msra.mxu0 %v1296
    %1375 = vmatpush.bf16.msra.mxu0 %v1292
    %1376 = vmatmul.bf16.gmra.mxu0 %v918
    %v1377 = vpop.f32.mrf.mxu0
    %v1378 = vadd.f32 %v1166, %v1377
    %v1379 = vpop.f32.mrf.mxu0
    %1380 = vdwg.mxu0
    %1381 = vmatpush.bf16.msra.mxu0 %v1321
    %1382 = vmatpush.bf16.msra.mxu0 %v1317
    %1383 = vmatpush.bf16.msra.mxu0 %v1313
    %1384 = vmatpush.bf16.msra.mxu0 %v1309
    %1385 = vmatpush.bf16.msra.mxu0 %v1305
    %1386 = vmatpush.bf16.msra.mxu0 %v1301
    %1387 = vmatpush.bf16.msra.mxu0 %v1297
    %1388 = vmatpush.bf16.msra.mxu0 %v1293
    %1389 = vmatmul.bf16.gmra.mxu0 %v918
    %v1390 = vpop.f32.mrf.mxu0
    %v1391 = vadd.f32 %v1179, %v1390
    %v1392 = vpop.f32.mrf.mxu0
    %1393 = vdwg.mxu0
    %1394 = vmatpush.bf16.msra.mxu0 %v1322
    %1395 = vmatpush.bf16.msra.mxu0 %v1318
    %1396 = vmatpush.bf16.msra.mxu0 %v1314
    %1397 = vmatpush.bf16.msra.mxu0 %v1310
    %1398 = vmatpush.bf16.msra.mxu0 %v1306
    %1399 = vmatpush.bf16.msra.mxu0 %v1302
    %1400 = vmatpush.bf16.msra.mxu0 %v1298
    %1401 = vmatpush.bf16.msra.mxu0 %v1294
    %1402 = vmatmul.bf16.gmra.mxu0 %v918
    %v1403 = vpop.f32.mrf.mxu0
    %v1404 = vadd.f32 %v1192, %v1403
    %v1405 = vpop.f32.mrf.mxu0
    %1406 = vdwg.mxu0
    %v1407 = vadd.f32 %v1365, %v67
    %v1408 = vadd.f32 %v1378, %v68
    %v1409 = vadd.f32 %v1391, %v69
    %v1410 = vadd.f32 %v1404, %v70
    %v1411 = vxor.u32 %v1407, 2147483648
    %v1412 = vmul.f32 %v1411, 1.442695
    %v1413 = vpow.pop %v1412
    %v1414 = vadd.f32 %v1413, 1.0
    %v1415 = vrcp.pop %v1414
    %v1416 = vmul.f32 %v1414, %v1415
    %v1417 = vsub.f32 1.0, %v1416
    %v1418 = vmul.f32 %v1415, %v1417
    %v1419 = vadd.f32 %v1415, %v1418
    %vm1420 = vweird.f32 %v1414
    %vm1421 = vweird.f32 %v1415
    %vm1422 = vmor %vm1420, %vm1421
    %v1423 = vsel %vm1422, %v1415, %v1419
    %v1424 = vand.u32 2147483647, %v1414
    %vm1425 = vcmp.eq.f32.partialorder %v1424, 8.507059e+37
    %v1426 = vand.u32 %v1414, 2147483648
    %v1427 = vor.u32 1.1754944e-38, %v1426
    %v1428 = vsel %vm1425, %v1427, %v1423
    %v1429 = vmul.f32 1.0, %v1428
    %v1430 = vxor.u32 %v1408, 2147483648
    %v1431 = vmul.f32 %v1430, 1.442695
    %v1432 = vpow.pop %v1431
    %v1433 = vadd.f32 %v1432, 1.0
    %v1434 = vrcp.pop %v1433
    %v1435 = vmul.f32 %v1433, %v1434
    %v1436 = vsub.f32 1.0, %v1435
    %v1437 = vmul.f32 %v1434, %v1436
    %v1438 = vadd.f32 %v1434, %v1437
    %vm1439 = vweird.f32 %v1433
    %vm1440 = vweird.f32 %v1434
    %vm1441 = vmor %vm1439, %vm1440
    %v1442 = vsel %vm1441, %v1434, %v1438
    %v1443 = vand.u32 2147483647, %v1433
    %vm1444 = vcmp.eq.f32.partialorder %v1443, 8.507059e+37
    %v1445 = vand.u32 %v1433, 2147483648
    %v1446 = vor.u32 1.1754944e-38, %v1445
    %v1447 = vsel %vm1444, %v1446, %v1442
    %v1448 = vmul.f32 1.0, %v1447
    %v1449 = vtanh.pop %v1409
    %v1450 = vxor.u32 %v1410, 2147483648
    %v1451 = vmul.f32 %v1450, 1.442695
    %v1452 = vpow.pop %v1451
    %v1453 = vadd.f32 %v1452, 1.0
    %v1454 = vrcp.pop %v1453
    %v1455 = vmul.f32 %v1453, %v1454
    %v1456 = vsub.f32 1.0, %v1455
    %v1457 = vmul.f32 %v1454, %v1456
    %v1458 = vadd.f32 %v1454, %v1457
    %vm1459 = vweird.f32 %v1453
    %vm1460 = vweird.f32 %v1454
    %vm1461 = vmor %vm1459, %vm1460
    %v1462 = vsel %vm1461, %v1454, %v1458
    %v1463 = vand.u32 2147483647, %v1453
    %vm1464 = vcmp.eq.f32.partialorder %v1463, 8.507059e+37
    %v1465 = vand.u32 %v1453, 2147483648
    %v1466 = vor.u32 1.1754944e-38, %v1465
    %v1467 = vsel %vm1464, %v1466, %v1462
    %v1468 = vmul.f32 1.0, %v1467
    %v1469 = vmul.f32 %v1448, %v725
    %v1470 = vmul.f32 %v1429, %v1449
    %v1471 = vadd.f32 %v1469, %v1470
    %v1472 = vtanh.pop %v1471
    %v1473 = vmul.f32 %v1468, %v1472
    %v1474 = vpack.c.bf16 %v1473, %v1473
    %v1475 = vld [vmem:[%s8] sm:$0xf]
    %v1476 = vld [vmem:[%s8 + $0x4] sm:$0xf]
    %v1477 = vld [vmem:[%s8 + $0x8] sm:$0xf]
    %v1478 = vld [vmem:[%s8 + $0xc] sm:$0xf]
    %v1479 = vld [vmem:[%s8 + $0x10] sm:$0xf]
    %v1480 = vld [vmem:[%s8 + $0x14] sm:$0xf]
    %v1481 = vld [vmem:[%s8 + $0x18] sm:$0xf]
    %v1482 = vld [vmem:[%s8 + $0x1c] sm:$0xf]
    %v1483 = vld [vmem:[%s8 + $0x20] sm:$0xf]
    %v1484 = vld [vmem:[%s8 + $0x24] sm:$0xf]
    %v1485 = vld [vmem:[%s8 + $0x28] sm:$0xf]
    %v1486 = vld [vmem:[%s8 + $0x2c] sm:$0xf]
    %v1487 = vld [vmem:[%s8 + $0x30] sm:$0xf]
    %v1488 = vld [vmem:[%s8 + $0x34] sm:$0xf]
    %v1489 = vld [vmem:[%s8 + $0x38] sm:$0xf]
    %v1490 = vld [vmem:[%s8 + $0x3c] sm:$0xf]
    %v1507 = vunpack.c.l.b16 %v1475
    %v1508 = vunpack.c.l.b16 %v1476
    %v1509 = vunpack.c.l.b16 %v1477
    %v1510 = vunpack.c.l.b16 %v1478
    %v1511 = vunpack.c.l.b16 %v1479
    %v1512 = vunpack.c.l.b16 %v1480
    %v1513 = vunpack.c.l.b16 %v1481
    %v1514 = vunpack.c.l.b16 %v1482
    %v1515 = vunpack.c.l.b16 %v1483
    %v1516 = vunpack.c.l.b16 %v1484
    %v1517 = vunpack.c.l.b16 %v1485
    %v1518 = vunpack.c.l.b16 %v1486
    %v1519 = vunpack.c.l.b16 %v1487
    %v1520 = vunpack.c.l.b16 %v1488
    %v1521 = vunpack.c.l.b16 %v1489
    %v1522 = vunpack.c.l.b16 %v1490
    %v1523 = vpack.c.b16 %v1508, %v1507
    %v1524 = vpack.c.b16 %v1510, %v1509
    %v1525 = vpack.c.b16 %v1512, %v1511
    %v1526 = vpack.c.b16 %v1514, %v1513
    %v1527 = vpack.c.b16 %v1516, %v1515
    %v1528 = vpack.c.b16 %v1518, %v1517
    %v1529 = vpack.c.b16 %v1520, %v1519
    %v1530 = vpack.c.b16 %v1522, %v1521
    %1539 = vmatpush.bf16.msra.mxu0 %v1530
    %1540 = vmatpush.bf16.msra.mxu0 %v1529
    %1541 = vmatpush.bf16.msra.mxu0 %v1528
    %1542 = vmatpush.bf16.msra.mxu0 %v1527
    %1543 = vmatpush.bf16.msra.mxu0 %v1526
    %1544 = vmatpush.bf16.msra.mxu0 %v1525
    %1545 = vmatpush.bf16.msra.mxu0 %v1524
    %1546 = vmatpush.bf16.msra.mxu0 %v1523
    %1547 = vmatmul.bf16.gmra.mxu0 %v1474
    %v1548 = vpop.f32.mrf.mxu0
    %v1549 = vadd.f32 %v77, %v1548
    %v1550 = vpop.f32.mrf.mxu0
    %1551 = vdwg.mxu0
    %s1552 = scalar_lea.vmem %s10, 8
    %1553 = vst [vmem:[%s1552] sm:$0xff] %v1549
    %v1554 = vsel %vm81, %v1549, -inf
    %1555 = vmax.xlane.f32.xlu0 %v1554
    %v1556 = vpop.xlane.xlu0 %1555
    %vm1557 = vcmp.eq.f32.partialorder %v1554, %v1556
    %v1558 = vsel %vm1557, %v80, 128
    %v1559 = vand.u32 %v1558, 65535
    %v1560 = vshra.s32 %v1558, 16
    %v1561 = vcvt.s32.f32 %v1559
    %v1562 = vcvt.s32.f32 %v1560
    %1563 = vmin.xlane.f32.xlu0 %v1562
    %v1564 = vpop.xlane.xlu0 %1563
    %vm1565 = vcmp.eq.f32.partialorder %v1562, %v1564
    %v1566 = vsel %vm1565, %v1561, inf
    %1567 = vmin.xlane.f32.xlu0 %v1566
    %v1568 = vpop.xlane.xlu0 %1567
    %v1569 = vcvt.f32.s32 %v1568
    %v1570 = vcvt.f32.s32 %v1564
    %v1571 = vshll.u32 %v1570, 16
    %v1572 = vadd.s32 %v1571, %v1569
    %vm1573 = vcmp.eq.s32.totalorder %v80, %v1572
    %v1574 = vsel %vm1573, 1, 0
    %v1575 = vcvt.s32.f32 %v1574
    %v1576 = vpack.c.bf16 %v1575, %v1575
    %s1577 = scalar_lea.vmem %s1, 8
    %v1578 = vld [vmem:[%s1577] sm:$0xf]
    %s1579 = sld [smem:[#allocation2 + $0x2]]
    %p1580 = scmp.gt.s32.totalorder %s1579, 0
    // Predicated region
    $region66: #{forward.3} parent=1 // pred_check
      %p1581 = pneg %p1580
    $region67: #{forward.3} parent=1 // pred_check_branch
      %1583 = sbr.rel (%p1581) target = $region69
    $region68: #{forward.3} parent=1 // pred_region
      _
    $region69: #{forward.3} parent=1 // pred_fallthru
      _
    %p1584 = pneg %p1580
    // Predicated region
    $region70: #{forward.3} parent=1 // pred_check
      _
    $region71: #{forward.3} parent=1 // pred_check_branch
      %1586 = sbr.rel (%p1580) target = $region73
    $region72: #{forward.3} parent=1 // pred_region
      %v1587 = vld [vmem:[%s4] sm:$0xf]
      %v1588 = vld [vmem:[%s4 + $0x4] sm:$0xf]
      %v1589 = vld [vmem:[%s4 + $0x8] sm:$0xf]
      %v1590 = vld [vmem:[%s4 + $0xc] sm:$0xf]
      %v1591 = vld [vmem:[%s4 + $0x10] sm:$0xf]
      %v1592 = vld [vmem:[%s4 + $0x14] sm:$0xf]
      %v1593 = vld [vmem:[%s4 + $0x18] sm:$0xf]
      %v1594 = vld [vmem:[%s4 + $0x1c] sm:$0xf]
      %v1595 = vld [vmem:[%s4 + $0x20] sm:$0xf]
      %v1596 = vld [vmem:[%s4 + $0x24] sm:$0xf]
      %v1597 = vld [vmem:[%s4 + $0x28] sm:$0xf]
      %v1598 = vld [vmem:[%s4 + $0x2c] sm:$0xf]
      %v1599 = vld [vmem:[%s4 + $0x30] sm:$0xf]
      %v1600 = vld [vmem:[%s4 + $0x34] sm:$0xf]
      %v1601 = vld [vmem:[%s4 + $0x38] sm:$0xf]
      %v1602 = vld [vmem:[%s4 + $0x3c] sm:$0xf]
      %v1619 = vunpack.c.l.b16 %v1587
      %v1620 = vunpack.c.l.b16 %v1588
      %v1621 = vunpack.c.l.b16 %v1589
      %v1622 = vunpack.c.l.b16 %v1590
      %v1623 = vunpack.c.l.b16 %v1591
      %v1624 = vunpack.c.l.b16 %v1592
      %v1625 = vunpack.c.l.b16 %v1593
      %v1626 = vunpack.c.l.b16 %v1594
      %v1627 = vunpack.c.l.b16 %v1595
      %v1628 = vunpack.c.l.b16 %v1596
      %v1629 = vunpack.c.l.b16 %v1597
      %v1630 = vunpack.c.l.b16 %v1598
      %v1631 = vunpack.c.l.b16 %v1599
      %v1632 = vunpack.c.l.b16 %v1600
      %v1633 = vunpack.c.l.b16 %v1601
      %v1634 = vunpack.c.l.b16 %v1602
      %v1635 = vpack.c.b16 %v1620, %v1619
      %v1636 = vpack.c.b16 %v1622, %v1621
      %v1637 = vpack.c.b16 %v1624, %v1623
      %v1638 = vpack.c.b16 %v1626, %v1625
      %v1639 = vpack.c.b16 %v1628, %v1627
      %v1640 = vpack.c.b16 %v1630, %v1629
      %v1641 = vpack.c.b16 %v1632, %v1631
      %v1642 = vpack.c.b16 %v1634, %v1633
      %1651 = vmatpush.bf16.msra.mxu0 %v1642
      %1652 = vmatpush.bf16.msra.mxu0 %v1641
      %1653 = vmatpush.bf16.msra.mxu0 %v1640
      %1654 = vmatpush.bf16.msra.mxu0 %v1639
      %1655 = vmatpush.bf16.msra.mxu0 %v1638
      %1656 = vmatpush.bf16.msra.mxu0 %v1637
      %1657 = vmatpush.bf16.msra.mxu0 %v1636
      %1658 = vmatpush.bf16.msra.mxu0 %v1635
      %1659 = vmatmul.bf16.gmra.mxu0 %v1576
      %v1660 = vpop.f32.mrf.mxu0
      %v1661 = vadd.f32 0.0, %v1660
      %v1662 = vpop.f32.mrf.mxu0
      %1663 = vdwg.mxu0
      %v1664 = vpack.c.bf16 %v1661, %v1661
    $region73: #{forward.3} parent=1 // pred_fallthru
      %v1665 = vphi %v1578, %v1664
    %v1666 = vld [vmem:[#allocation5] sm:$0xff]
    %v1667 = vld [vmem:[#allocation5 + $0x8] sm:$0xff]
    %v1668 = vld [vmem:[#allocation5 + $0x10] sm:$0xff]
    %v1669 = vld [vmem:[#allocation5 + $0x18] sm:$0xff]
    %v1670 = vld [vmem:[#allocation5 + $0x20] sm:$0xff]
    %v1671 = vld [vmem:[#allocation5 + $0x28] sm:$0xff]
    %v1672 = vld [vmem:[#allocation5 + $0x30] sm:$0xff]
    %v1673 = vld [vmem:[#allocation5 + $0x38] sm:$0xff]
    %v1674 = vld [vmem:[#allocation5 + $0x40] sm:$0xff]
    %v1675 = vld [vmem:[#allocation5 + $0x48] sm:$0xff]
    %v1676 = vld [vmem:[#allocation5 + $0x50] sm:$0xff]
    %v1677 = vld [vmem:[#allocation5 + $0x58] sm:$0xff]
    %v1678 = vld [vmem:[#allocation5 + $0x60] sm:$0xff]
    %v1679 = vld [vmem:[#allocation5 + $0x68] sm:$0xff]
    %v1680 = vld [vmem:[#allocation5 + $0x70] sm:$0xff]
    %v1681 = vld [vmem:[#allocation5 + $0x78] sm:$0xff]
    %v1682 = vld [vmem:[#allocation5 + $0x80] sm:$0xff]
    %v1683 = vld [vmem:[#allocation5 + $0x88] sm:$0xff]
    %v1684 = vld [vmem:[#allocation5 + $0x90] sm:$0xff]
    %v1685 = vld [vmem:[#allocation5 + $0x98] sm:$0xff]
    %v1686 = vld [vmem:[#allocation5 + $0xa0] sm:$0xff]
    %v1687 = vld [vmem:[#allocation5 + $0xa8] sm:$0xff]
    %v1688 = vld [vmem:[#allocation5 + $0xb0] sm:$0xff]
    %v1689 = vld [vmem:[#allocation5 + $0xb8] sm:$0xff]
    %v1690 = vld [vmem:[#allocation5 + $0xc0] sm:$0xff]
    %v1691 = vld [vmem:[#allocation5 + $0xc8] sm:$0xff]
    %v1692 = vld [vmem:[#allocation5 + $0xd0] sm:$0xff]
    %v1693 = vld [vmem:[#allocation5 + $0xd8] sm:$0xff]
    %v1694 = vld [vmem:[#allocation5 + $0xe0] sm:$0xff]
    %v1695 = vld [vmem:[#allocation5 + $0xe8] sm:$0xff]
    %v1696 = vld [vmem:[#allocation5 + $0xf0] sm:$0xff]
    %v1697 = vld [vmem:[#allocation5 + $0xf8] sm:$0xff]
    %v1698 = vld [vmem:[%s6] sm:$0xff]
    %v1699 = vld [vmem:[%s6 + $0x8] sm:$0xff]
    %v1700 = vld [vmem:[%s6 + $0x10] sm:$0xff]
    %v1701 = vld [vmem:[%s6 + $0x18] sm:$0xff]
    %v1702 = vld [vmem:[%s6 + $0x20] sm:$0xff]
    %v1703 = vld [vmem:[%s6 + $0x28] sm:$0xff]
    %v1704 = vld [vmem:[%s6 + $0x30] sm:$0xff]
    %v1705 = vld [vmem:[%s6 + $0x38] sm:$0xff]
    %v1706 = vld [vmem:[%s6 + $0x40] sm:$0xff]
    %v1707 = vld [vmem:[%s6 + $0x48] sm:$0xff]
    %v1708 = vld [vmem:[%s6 + $0x50] sm:$0xff]
    %v1709 = vld [vmem:[%s6 + $0x58] sm:$0xff]
    %v1710 = vld [vmem:[%s6 + $0x60] sm:$0xff]
    %v1711 = vld [vmem:[%s6 + $0x68] sm:$0xff]
    %v1712 = vld [vmem:[%s6 + $0x70] sm:$0xff]
    %v1713 = vld [vmem:[%s6 + $0x78] sm:$0xff]
    %v1714 = vld [vmem:[%s6 + $0x80] sm:$0xff]
    %v1715 = vld [vmem:[%s6 + $0x88] sm:$0xff]
    %v1716 = vld [vmem:[%s6 + $0x90] sm:$0xff]
    %v1717 = vld [vmem:[%s6 + $0x98] sm:$0xff]
    %v1718 = vld [vmem:[%s6 + $0xa0] sm:$0xff]
    %v1719 = vld [vmem:[%s6 + $0xa8] sm:$0xff]
    %v1720 = vld [vmem:[%s6 + $0xb0] sm:$0xff]
    %v1721 = vld [vmem:[%s6 + $0xb8] sm:$0xff]
    %v1722 = vld [vmem:[%s6 + $0xc0] sm:$0xff]
    %v1723 = vld [vmem:[%s6 + $0xc8] sm:$0xff]
    %v1724 = vld [vmem:[%s6 + $0xd0] sm:$0xff]
    %v1725 = vld [vmem:[%s6 + $0xd8] sm:$0xff]
    %v1726 = vld [vmem:[%s6 + $0xe0] sm:$0xff]
    %v1727 = vld [vmem:[%s6 + $0xe8] sm:$0xff]
    %v1728 = vld [vmem:[%s6 + $0xf0] sm:$0xff]
    %v1729 = vld [vmem:[%s6 + $0xf8] sm:$0xff]
    %v1762 = vunpack.c.l.b16 %v1698
    %v1763 = vunpack.c.h.b16 %v1698
    %v1764 = vunpack.c.l.b16 %v1699
    %v1765 = vunpack.c.h.b16 %v1699
    %v1766 = vunpack.c.l.b16 %v1700
    %v1767 = vunpack.c.h.b16 %v1700
    %v1768 = vunpack.c.l.b16 %v1701
    %v1769 = vunpack.c.h.b16 %v1701
    %v1770 = vunpack.c.l.b16 %v1702
    %v1771 = vunpack.c.h.b16 %v1702
    %v1772 = vunpack.c.l.b16 %v1703
    %v1773 = vunpack.c.h.b16 %v1703
    %v1774 = vunpack.c.l.b16 %v1704
    %v1775 = vunpack.c.h.b16 %v1704
    %v1776 = vunpack.c.l.b16 %v1705
    %v1777 = vunpack.c.h.b16 %v1705
    %v1778 = vunpack.c.l.b16 %v1706
    %v1779 = vunpack.c.h.b16 %v1706
    %v1780 = vunpack.c.l.b16 %v1707
    %v1781 = vunpack.c.h.b16 %v1707
    %v1782 = vunpack.c.l.b16 %v1708
    %v1783 = vunpack.c.h.b16 %v1708
    %v1784 = vunpack.c.l.b16 %v1709
    %v1785 = vunpack.c.h.b16 %v1709
    %v1786 = vunpack.c.l.b16 %v1710
    %v1787 = vunpack.c.h.b16 %v1710
    %v1788 = vunpack.c.l.b16 %v1711
    %v1789 = vunpack.c.h.b16 %v1711
    %v1790 = vunpack.c.l.b16 %v1712
    %v1791 = vunpack.c.h.b16 %v1712
    %v1792 = vunpack.c.l.b16 %v1713
    %v1793 = vunpack.c.h.b16 %v1713
    %v1794 = vunpack.c.l.b16 %v1714
    %v1795 = vunpack.c.h.b16 %v1714
    %v1796 = vunpack.c.l.b16 %v1715
    %v1797 = vunpack.c.h.b16 %v1715
    %v1798 = vunpack.c.l.b16 %v1716
    %v1799 = vunpack.c.h.b16 %v1716
    %v1800 = vunpack.c.l.b16 %v1717
    %v1801 = vunpack.c.h.b16 %v1717
    %v1802 = vunpack.c.l.b16 %v1718
    %v1803 = vunpack.c.h.b16 %v1718
    %v1804 = vunpack.c.l.b16 %v1719
    %v1805 = vunpack.c.h.b16 %v1719
    %v1806 = vunpack.c.l.b16 %v1720
    %v1807 = vunpack.c.h.b16 %v1720
    %v1808 = vunpack.c.l.b16 %v1721
    %v1809 = vunpack.c.h.b16 %v1721
    %v1810 = vunpack.c.l.b16 %v1722
    %v1811 = vunpack.c.h.b16 %v1722
    %v1812 = vunpack.c.l.b16 %v1723
    %v1813 = vunpack.c.h.b16 %v1723
    %v1814 = vunpack.c.l.b16 %v1724
    %v1815 = vunpack.c.h.b16 %v1724
    %v1816 = vunpack.c.l.b16 %v1725
    %v1817 = vunpack.c.h.b16 %v1725
    %v1818 = vunpack.c.l.b16 %v1726
    %v1819 = vunpack.c.h.b16 %v1726
    %v1820 = vunpack.c.l.b16 %v1727
    %v1821 = vunpack.c.h.b16 %v1727
    %v1822 = vunpack.c.l.b16 %v1728
    %v1823 = vunpack.c.h.b16 %v1728
    %v1824 = vunpack.c.l.b16 %v1729
    %v1825 = vunpack.c.h.b16 %v1729
    %v1826 = vpack.c.b16 %v1766, %v1762
    %v1827 = vpack.c.b16 %v1767, %v1763
    %v1828 = vpack.c.b16 %v1768, %v1764
    %v1829 = vpack.c.b16 %v1769, %v1765
    %v1830 = vpack.c.b16 %v1774, %v1770
    %v1831 = vpack.c.b16 %v1775, %v1771
    %v1832 = vpack.c.b16 %v1776, %v1772
    %v1833 = vpack.c.b16 %v1777, %v1773
    %v1834 = vpack.c.b16 %v1782, %v1778
    %v1835 = vpack.c.b16 %v1783, %v1779
    %v1836 = vpack.c.b16 %v1784, %v1780
    %v1837 = vpack.c.b16 %v1785, %v1781
    %v1838 = vpack.c.b16 %v1790, %v1786
    %v1839 = vpack.c.b16 %v1791, %v1787
    %v1840 = vpack.c.b16 %v1792, %v1788
    %v1841 = vpack.c.b16 %v1793, %v1789
    %v1842 = vpack.c.b16 %v1798, %v1794
    %v1843 = vpack.c.b16 %v1799, %v1795
    %v1844 = vpack.c.b16 %v1800, %v1796
    %v1845 = vpack.c.b16 %v1801, %v1797
    %v1846 = vpack.c.b16 %v1806, %v1802
    %v1847 = vpack.c.b16 %v1807, %v1803
    %v1848 = vpack.c.b16 %v1808, %v1804
    %v1849 = vpack.c.b16 %v1809, %v1805
    %v1850 = vpack.c.b16 %v1814, %v1810
    %v1851 = vpack.c.b16 %v1815, %v1811
    %v1852 = vpack.c.b16 %v1816, %v1812
    %v1853 = vpack.c.b16 %v1817, %v1813
    %v1854 = vpack.c.b16 %v1822, %v1818
    %v1855 = vpack.c.b16 %v1823, %v1819
    %v1856 = vpack.c.b16 %v1824, %v1820
    %v1857 = vpack.c.b16 %v1825, %v1821
    %1890 = vmatpush.bf16.msra.mxu0 %v1854
    %1891 = vmatpush.bf16.msra.mxu0 %v1850
    %1892 = vmatpush.bf16.msra.mxu0 %v1846
    %1893 = vmatpush.bf16.msra.mxu0 %v1842
    %1894 = vmatpush.bf16.msra.mxu0 %v1838
    %1895 = vmatpush.bf16.msra.mxu0 %v1834
    %1896 = vmatpush.bf16.msra.mxu0 %v1830
    %1897 = vmatpush.bf16.msra.mxu0 %v1826
    %1898 = vmatmul.bf16.gmra.mxu0 %v1474
    %v1899 = vpop.f32.mrf.mxu0
    %v1900 = vadd.f32 0.0, %v1899
    %v1901 = vpop.f32.mrf.mxu0
    %1902 = vdwg.mxu0
    %1903 = vmatpush.bf16.msra.mxu0 %v1855
    %1904 = vmatpush.bf16.msra.mxu0 %v1851
    %1905 = vmatpush.bf16.msra.mxu0 %v1847
    %1906 = vmatpush.bf16.msra.mxu0 %v1843
    %1907 = vmatpush.bf16.msra.mxu0 %v1839
    %1908 = vmatpush.bf16.msra.mxu0 %v1835
    %1909 = vmatpush.bf16.msra.mxu0 %v1831
    %1910 = vmatpush.bf16.msra.mxu0 %v1827
    %1911 = vmatmul.bf16.gmra.mxu0 %v1474
    %v1912 = vpop.f32.mrf.mxu0
    %v1913 = vadd.f32 0.0, %v1912
    %v1914 = vpop.f32.mrf.mxu0
    %1915 = vdwg.mxu0
    %1916 = vmatpush.bf16.msra.mxu0 %v1856
    %1917 = vmatpush.bf16.msra.mxu0 %v1852
    %1918 = vmatpush.bf16.msra.mxu0 %v1848
    %1919 = vmatpush.bf16.msra.mxu0 %v1844
    %1920 = vmatpush.bf16.msra.mxu0 %v1840
    %1921 = vmatpush.bf16.msra.mxu0 %v1836
    %1922 = vmatpush.bf16.msra.mxu0 %v1832
    %1923 = vmatpush.bf16.msra.mxu0 %v1828
    %1924 = vmatmul.bf16.gmra.mxu0 %v1474
    %v1925 = vpop.f32.mrf.mxu0
    %v1926 = vadd.f32 0.0, %v1925
    %v1927 = vpop.f32.mrf.mxu0
    %1928 = vdwg.mxu0
    %1929 = vmatpush.bf16.msra.mxu0 %v1857
    %1930 = vmatpush.bf16.msra.mxu0 %v1853
    %1931 = vmatpush.bf16.msra.mxu0 %v1849
    %1932 = vmatpush.bf16.msra.mxu0 %v1845
    %1933 = vmatpush.bf16.msra.mxu0 %v1841
    %1934 = vmatpush.bf16.msra.mxu0 %v1837
    %1935 = vmatpush.bf16.msra.mxu0 %v1833
    %1936 = vmatpush.bf16.msra.mxu0 %v1829
    %1937 = vmatmul.bf16.gmra.mxu0 %v1474
    %v1938 = vpop.f32.mrf.mxu0
    %v1939 = vadd.f32 0.0, %v1938
    %v1940 = vpop.f32.mrf.mxu0
    %1941 = vdwg.mxu0
    %v1974 = vunpack.c.l.b16 %v1666
    %v1975 = vunpack.c.h.b16 %v1666
    %v1976 = vunpack.c.l.b16 %v1667
    %v1977 = vunpack.c.h.b16 %v1667
    %v1978 = vunpack.c.l.b16 %v1668
    %v1979 = vunpack.c.h.b16 %v1668
    %v1980 = vunpack.c.l.b16 %v1669
    %v1981 = vunpack.c.h.b16 %v1669
    %v1982 = vunpack.c.l.b16 %v1670
    %v1983 = vunpack.c.h.b16 %v1670
    %v1984 = vunpack.c.l.b16 %v1671
    %v1985 = vunpack.c.h.b16 %v1671
    %v1986 = vunpack.c.l.b16 %v1672
    %v1987 = vunpack.c.h.b16 %v1672
    %v1988 = vunpack.c.l.b16 %v1673
    %v1989 = vunpack.c.h.b16 %v1673
    %v1990 = vunpack.c.l.b16 %v1674
    %v1991 = vunpack.c.h.b16 %v1674
    %v1992 = vunpack.c.l.b16 %v1675
    %v1993 = vunpack.c.h.b16 %v1675
    %v1994 = vunpack.c.l.b16 %v1676
    %v1995 = vunpack.c.h.b16 %v1676
    %v1996 = vunpack.c.l.b16 %v1677
    %v1997 = vunpack.c.h.b16 %v1677
    %v1998 = vunpack.c.l.b16 %v1678
    %v1999 = vunpack.c.h.b16 %v1678
    %v2000 = vunpack.c.l.b16 %v1679
    %v2001 = vunpack.c.h.b16 %v1679
    %v2002 = vunpack.c.l.b16 %v1680
    %v2003 = vunpack.c.h.b16 %v1680
    %v2004 = vunpack.c.l.b16 %v1681
    %v2005 = vunpack.c.h.b16 %v1681
    %v2006 = vunpack.c.l.b16 %v1682
    %v2007 = vunpack.c.h.b16 %v1682
    %v2008 = vunpack.c.l.b16 %v1683
    %v2009 = vunpack.c.h.b16 %v1683
    %v2010 = vunpack.c.l.b16 %v1684
    %v2011 = vunpack.c.h.b16 %v1684
    %v2012 = vunpack.c.l.b16 %v1685
    %v2013 = vunpack.c.h.b16 %v1685
    %v2014 = vunpack.c.l.b16 %v1686
    %v2015 = vunpack.c.h.b16 %v1686
    %v2016 = vunpack.c.l.b16 %v1687
    %v2017 = vunpack.c.h.b16 %v1687
    %v2018 = vunpack.c.l.b16 %v1688
    %v2019 = vunpack.c.h.b16 %v1688
    %v2020 = vunpack.c.l.b16 %v1689
    %v2021 = vunpack.c.h.b16 %v1689
    %v2022 = vunpack.c.l.b16 %v1690
    %v2023 = vunpack.c.h.b16 %v1690
    %v2024 = vunpack.c.l.b16 %v1691
    %v2025 = vunpack.c.h.b16 %v1691
    %v2026 = vunpack.c.l.b16 %v1692
    %v2027 = vunpack.c.h.b16 %v1692
    %v2028 = vunpack.c.l.b16 %v1693
    %v2029 = vunpack.c.h.b16 %v1693
    %v2030 = vunpack.c.l.b16 %v1694
    %v2031 = vunpack.c.h.b16 %v1694
    %v2032 = vunpack.c.l.b16 %v1695
    %v2033 = vunpack.c.h.b16 %v1695
    %v2034 = vunpack.c.l.b16 %v1696
    %v2035 = vunpack.c.h.b16 %v1696
    %v2036 = vunpack.c.l.b16 %v1697
    %v2037 = vunpack.c.h.b16 %v1697
    %v2038 = vpack.c.b16 %v1978, %v1974
    %v2039 = vpack.c.b16 %v1979, %v1975
    %v2040 = vpack.c.b16 %v1980, %v1976
    %v2041 = vpack.c.b16 %v1981, %v1977
    %v2042 = vpack.c.b16 %v1986, %v1982
    %v2043 = vpack.c.b16 %v1987, %v1983
    %v2044 = vpack.c.b16 %v1988, %v1984
    %v2045 = vpack.c.b16 %v1989, %v1985
    %v2046 = vpack.c.b16 %v1994, %v1990
    %v2047 = vpack.c.b16 %v1995, %v1991
    %v2048 = vpack.c.b16 %v1996, %v1992
    %v2049 = vpack.c.b16 %v1997, %v1993
    %v2050 = vpack.c.b16 %v2002, %v1998
    %v2051 = vpack.c.b16 %v2003, %v1999
    %v2052 = vpack.c.b16 %v2004, %v2000
    %v2053 = vpack.c.b16 %v2005, %v2001
    %v2054 = vpack.c.b16 %v2010, %v2006
    %v2055 = vpack.c.b16 %v2011, %v2007
    %v2056 = vpack.c.b16 %v2012, %v2008
    %v2057 = vpack.c.b16 %v2013, %v2009
    %v2058 = vpack.c.b16 %v2018, %v2014
    %v2059 = vpack.c.b16 %v2019, %v2015
    %v2060 = vpack.c.b16 %v2020, %v2016
    %v2061 = vpack.c.b16 %v2021, %v2017
    %v2062 = vpack.c.b16 %v2026, %v2022
    %v2063 = vpack.c.b16 %v2027, %v2023
    %v2064 = vpack.c.b16 %v2028, %v2024
    %v2065 = vpack.c.b16 %v2029, %v2025
    %v2066 = vpack.c.b16 %v2034, %v2030
    %v2067 = vpack.c.b16 %v2035, %v2031
    %v2068 = vpack.c.b16 %v2036, %v2032
    %v2069 = vpack.c.b16 %v2037, %v2033
    %2102 = vmatpush.bf16.msra.mxu0 %v2066
    %2103 = vmatpush.bf16.msra.mxu0 %v2062
    %2104 = vmatpush.bf16.msra.mxu0 %v2058
    %2105 = vmatpush.bf16.msra.mxu0 %v2054
    %2106 = vmatpush.bf16.msra.mxu0 %v2050
    %2107 = vmatpush.bf16.msra.mxu0 %v2046
    %2108 = vmatpush.bf16.msra.mxu0 %v2042
    %2109 = vmatpush.bf16.msra.mxu0 %v2038
    %2110 = vmatmul.bf16.gmra.mxu0 %v1665
    %v2111 = vpop.f32.mrf.mxu0
    %v2112 = vadd.f32 %v1900, %v2111
    %v2113 = vpop.f32.mrf.mxu0
    %2114 = vdwg.mxu0
    %2115 = vmatpush.bf16.msra.mxu0 %v2067
    %2116 = vmatpush.bf16.msra.mxu0 %v2063
    %2117 = vmatpush.bf16.msra.mxu0 %v2059
    %2118 = vmatpush.bf16.msra.mxu0 %v2055
    %2119 = vmatpush.bf16.msra.mxu0 %v2051
    %2120 = vmatpush.bf16.msra.mxu0 %v2047
    %2121 = vmatpush.bf16.msra.mxu0 %v2043
    %2122 = vmatpush.bf16.msra.mxu0 %v2039
    %2123 = vmatmul.bf16.gmra.mxu0 %v1665
    %v2124 = vpop.f32.mrf.mxu0
    %v2125 = vadd.f32 %v1913, %v2124
    %v2126 = vpop.f32.mrf.mxu0
    %2127 = vdwg.mxu0
    %2128 = vmatpush.bf16.msra.mxu0 %v2068
    %2129 = vmatpush.bf16.msra.mxu0 %v2064
    %2130 = vmatpush.bf16.msra.mxu0 %v2060
    %2131 = vmatpush.bf16.msra.mxu0 %v2056
    %2132 = vmatpush.bf16.msra.mxu0 %v2052
    %2133 = vmatpush.bf16.msra.mxu0 %v2048
    %2134 = vmatpush.bf16.msra.mxu0 %v2044
    %2135 = vmatpush.bf16.msra.mxu0 %v2040
    %2136 = vmatmul.bf16.gmra.mxu0 %v1665
    %v2137 = vpop.f32.mrf.mxu0
    %v2138 = vadd.f32 %v1926, %v2137
    %v2139 = vpop.f32.mrf.mxu0
    %2140 = vdwg.mxu0
    %2141 = vmatpush.bf16.msra.mxu0 %v2069
    %2142 = vmatpush.bf16.msra.mxu0 %v2065
    %2143 = vmatpush.bf16.msra.mxu0 %v2061
    %2144 = vmatpush.bf16.msra.mxu0 %v2057
    %2145 = vmatpush.bf16.msra.mxu0 %v2053
    %2146 = vmatpush.bf16.msra.mxu0 %v2049
    %2147 = vmatpush.bf16.msra.mxu0 %v2045
    %2148 = vmatpush.bf16.msra.mxu0 %v2041
    %2149 = vmatmul.bf16.gmra.mxu0 %v1665
    %v2150 = vpop.f32.mrf.mxu0
    %v2151 = vadd.f32 %v1939, %v2150
    %v2152 = vpop.f32.mrf.mxu0
    %2153 = vdwg.mxu0
    %v2154 = vadd.f32 %v2112, %v67
    %v2155 = vadd.f32 %v2125, %v68
    %v2156 = vadd.f32 %v2138, %v69
    %v2157 = vadd.f32 %v2151, %v70
    %v2158 = vxor.u32 %v2154, 2147483648
    %v2159 = vmul.f32 %v2158, 1.442695
    %v2160 = vpow.pop %v2159
    %v2161 = vadd.f32 %v2160, 1.0
    %v2162 = vrcp.pop %v2161
    %v2163 = vmul.f32 %v2161, %v2162
    %v2164 = vsub.f32 1.0, %v2163
    %v2165 = vmul.f32 %v2162, %v2164
    %v2166 = vadd.f32 %v2162, %v2165
    %vm2167 = vweird.f32 %v2161
    %vm2168 = vweird.f32 %v2162
    %vm2169 = vmor %vm2167, %vm2168
    %v2170 = vsel %vm2169, %v2162, %v2166
    %v2171 = vand.u32 2147483647, %v2161
    %vm2172 = vcmp.eq.f32.partialorder %v2171, 8.507059e+37
    %v2173 = vand.u32 %v2161, 2147483648
    %v2174 = vor.u32 1.1754944e-38, %v2173
    %v2175 = vsel %vm2172, %v2174, %v2170
    %v2176 = vmul.f32 1.0, %v2175
    %v2177 = vxor.u32 %v2155, 2147483648
    %v2178 = vmul.f32 %v2177, 1.442695
    %v2179 = vpow.pop %v2178
    %v2180 = vadd.f32 %v2179, 1.0
    %v2181 = vrcp.pop %v2180
    %v2182 = vmul.f32 %v2180, %v2181
    %v2183 = vsub.f32 1.0, %v2182
    %v2184 = vmul.f32 %v2181, %v2183
    %v2185 = vadd.f32 %v2181, %v2184
    %vm2186 = vweird.f32 %v2180
    %vm2187 = vweird.f32 %v2181
    %vm2188 = vmor %vm2186, %vm2187
    %v2189 = vsel %vm2188, %v2181, %v2185
    %v2190 = vand.u32 2147483647, %v2180
    %vm2191 = vcmp.eq.f32.partialorder %v2190, 8.507059e+37
    %v2192 = vand.u32 %v2180, 2147483648
    %v2193 = vor.u32 1.1754944e-38, %v2192
    %v2194 = vsel %vm2191, %v2193, %v2189
    %v2195 = vmul.f32 1.0, %v2194
    %v2196 = vtanh.pop %v2156
    %v2197 = vxor.u32 %v2157, 2147483648
    %v2198 = vmul.f32 %v2197, 1.442695
    %v2199 = vpow.pop %v2198
    %v2200 = vadd.f32 %v2199, 1.0
    %v2201 = vrcp.pop %v2200
    %v2202 = vmul.f32 %v2200, %v2201
    %v2203 = vsub.f32 1.0, %v2202
    %v2204 = vmul.f32 %v2201, %v2203
    %v2205 = vadd.f32 %v2201, %v2204
    %vm2206 = vweird.f32 %v2200
    %vm2207 = vweird.f32 %v2201
    %vm2208 = vmor %vm2206, %vm2207
    %v2209 = vsel %vm2208, %v2201, %v2205
    %v2210 = vand.u32 2147483647, %v2200
    %vm2211 = vcmp.eq.f32.partialorder %v2210, 8.507059e+37
    %v2212 = vand.u32 %v2200, 2147483648
    %v2213 = vor.u32 1.1754944e-38, %v2212
    %v2214 = vsel %vm2211, %v2213, %v2209
    %v2215 = vmul.f32 1.0, %v2214
    %v2216 = vmul.f32 %v2195, %v1471
    %v2217 = vmul.f32 %v2176, %v2196
    %v2218 = vadd.f32 %v2216, %v2217
    %v2219 = vtanh.pop %v2218
    %v2220 = vmul.f32 %v2215, %v2219
    %v2221 = vpack.c.bf16 %v2220, %v2220
    %v2222 = vld [vmem:[%s8] sm:$0xf]
    %v2223 = vld [vmem:[%s8 + $0x4] sm:$0xf]
    %v2224 = vld [vmem:[%s8 + $0x8] sm:$0xf]
    %v2225 = vld [vmem:[%s8 + $0xc] sm:$0xf]
    %v2226 = vld [vmem:[%s8 + $0x10] sm:$0xf]
    %v2227 = vld [vmem:[%s8 + $0x14] sm:$0xf]
    %v2228 = vld [vmem:[%s8 + $0x18] sm:$0xf]
    %v2229 = vld [vmem:[%s8 + $0x1c] sm:$0xf]
    %v2230 = vld [vmem:[%s8 + $0x20] sm:$0xf]
    %v2231 = vld [vmem:[%s8 + $0x24] sm:$0xf]
    %v2232 = vld [vmem:[%s8 + $0x28] sm:$0xf]
    %v2233 = vld [vmem:[%s8 + $0x2c] sm:$0xf]
    %v2234 = vld [vmem:[%s8 + $0x30] sm:$0xf]
    %v2235 = vld [vmem:[%s8 + $0x34] sm:$0xf]
    %v2236 = vld [vmem:[%s8 + $0x38] sm:$0xf]
    %v2237 = vld [vmem:[%s8 + $0x3c] sm:$0xf]
    %v2254 = vunpack.c.l.b16 %v2222
    %v2255 = vunpack.c.l.b16 %v2223
    %v2256 = vunpack.c.l.b16 %v2224
    %v2257 = vunpack.c.l.b16 %v2225
    %v2258 = vunpack.c.l.b16 %v2226
    %v2259 = vunpack.c.l.b16 %v2227
    %v2260 = vunpack.c.l.b16 %v2228
    %v2261 = vunpack.c.l.b16 %v2229
    %v2262 = vunpack.c.l.b16 %v2230
    %v2263 = vunpack.c.l.b16 %v2231
    %v2264 = vunpack.c.l.b16 %v2232
    %v2265 = vunpack.c.l.b16 %v2233
    %v2266 = vunpack.c.l.b16 %v2234
    %v2267 = vunpack.c.l.b16 %v2235
    %v2268 = vunpack.c.l.b16 %v2236
    %v2269 = vunpack.c.l.b16 %v2237
    %v2270 = vpack.c.b16 %v2255, %v2254
    %v2271 = vpack.c.b16 %v2257, %v2256
    %v2272 = vpack.c.b16 %v2259, %v2258
    %v2273 = vpack.c.b16 %v2261, %v2260
    %v2274 = vpack.c.b16 %v2263, %v2262
    %v2275 = vpack.c.b16 %v2265, %v2264
    %v2276 = vpack.c.b16 %v2267, %v2266
    %v2277 = vpack.c.b16 %v2269, %v2268
    %2286 = vmatpush.bf16.msra.mxu0 %v2277
    %2287 = vmatpush.bf16.msra.mxu0 %v2276
    %2288 = vmatpush.bf16.msra.mxu0 %v2275
    %2289 = vmatpush.bf16.msra.mxu0 %v2274
    %2290 = vmatpush.bf16.msra.mxu0 %v2273
    %2291 = vmatpush.bf16.msra.mxu0 %v2272
    %2292 = vmatpush.bf16.msra.mxu0 %v2271
    %2293 = vmatpush.bf16.msra.mxu0 %v2270
    %2294 = vmatmul.bf16.gmra.mxu0 %v2221
    %v2295 = vpop.f32.mrf.mxu0
    %v2296 = vadd.f32 %v77, %v2295
    %v2297 = vpop.f32.mrf.mxu0
    %2298 = vdwg.mxu0
    %s2299 = scalar_lea.vmem %s10, 16
    %2300 = vst [vmem:[%s2299] sm:$0xff] %v2296
    %v2301 = vsel %vm81, %v2296, -inf
    %2302 = vmax.xlane.f32.xlu0 %v2301
    %v2303 = vpop.xlane.xlu0 %2302
    %vm2304 = vcmp.eq.f32.partialorder %v2301, %v2303
    %v2305 = vsel %vm2304, %v80, 128
    %v2306 = vand.u32 %v2305, 65535
    %v2307 = vshra.s32 %v2305, 16
    %v2308 = vcvt.s32.f32 %v2306
    %v2309 = vcvt.s32.f32 %v2307
    %2310 = vmin.xlane.f32.xlu0 %v2309
    %v2311 = vpop.xlane.xlu0 %2310
    %vm2312 = vcmp.eq.f32.partialorder %v2309, %v2311
    %v2313 = vsel %vm2312, %v2308, inf
    %2314 = vmin.xlane.f32.xlu0 %v2313
    %v2315 = vpop.xlane.xlu0 %2314
    %v2316 = vcvt.f32.s32 %v2315
    %v2317 = vcvt.f32.s32 %v2311
    %v2318 = vshll.u32 %v2317, 16
    %v2319 = vadd.s32 %v2318, %v2316
    %vm2320 = vcmp.eq.s32.totalorder %v80, %v2319
    %v2321 = vsel %vm2320, 1, 0
    %v2322 = vcvt.s32.f32 %v2321
    %v2323 = vpack.c.bf16 %v2322, %v2322
    %s2324 = scalar_lea.vmem %s1, 12
    %v2325 = vld [vmem:[%s2324] sm:$0xf]
    %s2326 = sld [smem:[#allocation2 + $0x3]]
    %p2327 = scmp.gt.s32.totalorder %s2326, 0
    // Predicated region
    $region74: #{forward.3} parent=1 // pred_check
      %p2328 = pneg %p2327
    $region75: #{forward.3} parent=1 // pred_check_branch
      %2330 = sbr.rel (%p2328) target = $region77
    $region76: #{forward.3} parent=1 // pred_region
      _
    $region77: #{forward.3} parent=1 // pred_fallthru
      _
    %p2331 = pneg %p2327
    // Predicated region
    $region78: #{forward.3} parent=1 // pred_check
      _
    $region79: #{forward.3} parent=1 // pred_check_branch
      %2333 = sbr.rel (%p2327) target = $region81
    $region80: #{forward.3} parent=1 // pred_region
      %v2334 = vld [vmem:[%s4] sm:$0xf]
      %v2335 = vld [vmem:[%s4 + $0x4] sm:$0xf]
      %v2336 = vld [vmem:[%s4 + $0x8] sm:$0xf]
      %v2337 = vld [vmem:[%s4 + $0xc] sm:$0xf]
      %v2338 = vld [vmem:[%s4 + $0x10] sm:$0xf]
      %v2339 = vld [vmem:[%s4 + $0x14] sm:$0xf]
      %v2340 = vld [vmem:[%s4 + $0x18] sm:$0xf]
      %v2341 = vld [vmem:[%s4 + $0x1c] sm:$0xf]
      %v2342 = vld [vmem:[%s4 + $0x20] sm:$0xf]
      %v2343 = vld [vmem:[%s4 + $0x24] sm:$0xf]
      %v2344 = vld [vmem:[%s4 + $0x28] sm:$0xf]
      %v2345 = vld [vmem:[%s4 + $0x2c] sm:$0xf]
      %v2346 = vld [vmem:[%s4 + $0x30] sm:$0xf]
      %v2347 = vld [vmem:[%s4 + $0x34] sm:$0xf]
      %v2348 = vld [vmem:[%s4 + $0x38] sm:$0xf]
      %v2349 = vld [vmem:[%s4 + $0x3c] sm:$0xf]
      %v2366 = vunpack.c.l.b16 %v2334
      %v2367 = vunpack.c.l.b16 %v2335
      %v2368 = vunpack.c.l.b16 %v2336
      %v2369 = vunpack.c.l.b16 %v2337
      %v2370 = vunpack.c.l.b16 %v2338
      %v2371 = vunpack.c.l.b16 %v2339
      %v2372 = vunpack.c.l.b16 %v2340
      %v2373 = vunpack.c.l.b16 %v2341
      %v2374 = vunpack.c.l.b16 %v2342
      %v2375 = vunpack.c.l.b16 %v2343
      %v2376 = vunpack.c.l.b16 %v2344
      %v2377 = vunpack.c.l.b16 %v2345
      %v2378 = vunpack.c.l.b16 %v2346
      %v2379 = vunpack.c.l.b16 %v2347
      %v2380 = vunpack.c.l.b16 %v2348
      %v2381 = vunpack.c.l.b16 %v2349
      %v2382 = vpack.c.b16 %v2367, %v2366
      %v2383 = vpack.c.b16 %v2369, %v2368
      %v2384 = vpack.c.b16 %v2371, %v2370
      %v2385 = vpack.c.b16 %v2373, %v2372
      %v2386 = vpack.c.b16 %v2375, %v2374
      %v2387 = vpack.c.b16 %v2377, %v2376
      %v2388 = vpack.c.b16 %v2379, %v2378
      %v2389 = vpack.c.b16 %v2381, %v2380
      %2398 = vmatpush.bf16.msra.mxu0 %v2389
      %2399 = vmatpush.bf16.msra.mxu0 %v2388
      %2400 = vmatpush.bf16.msra.mxu0 %v2387
      %2401 = vmatpush.bf16.msra.mxu0 %v2386
      %2402 = vmatpush.bf16.msra.mxu0 %v2385
      %2403 = vmatpush.bf16.msra.mxu0 %v2384
      %2404 = vmatpush.bf16.msra.mxu0 %v2383
      %2405 = vmatpush.bf16.msra.mxu0 %v2382
      %2406 = vmatmul.bf16.gmra.mxu0 %v2323
      %v2407 = vpop.f32.mrf.mxu0
      %v2408 = vadd.f32 0.0, %v2407
      %v2409 = vpop.f32.mrf.mxu0
      %2410 = vdwg.mxu0
      %v2411 = vpack.c.bf16 %v2408, %v2408
    $region81: #{forward.3} parent=1 // pred_fallthru
      %v2412 = vphi %v2325, %v2411
    %v2413 = vld [vmem:[#allocation5] sm:$0xff]
    %v2414 = vld [vmem:[#allocation5 + $0x8] sm:$0xff]
    %v2415 = vld [vmem:[#allocation5 + $0x10] sm:$0xff]
    %v2416 = vld [vmem:[#allocation5 + $0x18] sm:$0xff]
    %v2417 = vld [vmem:[#allocation5 + $0x20] sm:$0xff]
    %v2418 = vld [vmem:[#allocation5 + $0x28] sm:$0xff]
    %v2419 = vld [vmem:[#allocation5 + $0x30] sm:$0xff]
    %v2420 = vld [vmem:[#allocation5 + $0x38] sm:$0xff]
    %v2421 = vld [vmem:[#allocation5 + $0x40] sm:$0xff]
    %v2422 = vld [vmem:[#allocation5 + $0x48] sm:$0xff]
    %v2423 = vld [vmem:[#allocation5 + $0x50] sm:$0xff]
    %v2424 = vld [vmem:[#allocation5 + $0x58] sm:$0xff]
    %v2425 = vld [vmem:[#allocation5 + $0x60] sm:$0xff]
    %v2426 = vld [vmem:[#allocation5 + $0x68] sm:$0xff]
    %v2427 = vld [vmem:[#allocation5 + $0x70] sm:$0xff]
    %v2428 = vld [vmem:[#allocation5 + $0x78] sm:$0xff]
    %v2429 = vld [vmem:[#allocation5 + $0x80] sm:$0xff]
    %v2430 = vld [vmem:[#allocation5 + $0x88] sm:$0xff]
    %v2431 = vld [vmem:[#allocation5 + $0x90] sm:$0xff]
    %v2432 = vld [vmem:[#allocation5 + $0x98] sm:$0xff]
    %v2433 = vld [vmem:[#allocation5 + $0xa0] sm:$0xff]
    %v2434 = vld [vmem:[#allocation5 + $0xa8] sm:$0xff]
    %v2435 = vld [vmem:[#allocation5 + $0xb0] sm:$0xff]
    %v2436 = vld [vmem:[#allocation5 + $0xb8] sm:$0xff]
    %v2437 = vld [vmem:[#allocation5 + $0xc0] sm:$0xff]
    %v2438 = vld [vmem:[#allocation5 + $0xc8] sm:$0xff]
    %v2439 = vld [vmem:[#allocation5 + $0xd0] sm:$0xff]
    %v2440 = vld [vmem:[#allocation5 + $0xd8] sm:$0xff]
    %v2441 = vld [vmem:[#allocation5 + $0xe0] sm:$0xff]
    %v2442 = vld [vmem:[#allocation5 + $0xe8] sm:$0xff]
    %v2443 = vld [vmem:[#allocation5 + $0xf0] sm:$0xff]
    %v2444 = vld [vmem:[#allocation5 + $0xf8] sm:$0xff]
    %v2445 = vld [vmem:[%s6] sm:$0xff]
    %v2446 = vld [vmem:[%s6 + $0x8] sm:$0xff]
    %v2447 = vld [vmem:[%s6 + $0x10] sm:$0xff]
    %v2448 = vld [vmem:[%s6 + $0x18] sm:$0xff]
    %v2449 = vld [vmem:[%s6 + $0x20] sm:$0xff]
    %v2450 = vld [vmem:[%s6 + $0x28] sm:$0xff]
    %v2451 = vld [vmem:[%s6 + $0x30] sm:$0xff]
    %v2452 = vld [vmem:[%s6 + $0x38] sm:$0xff]
    %v2453 = vld [vmem:[%s6 + $0x40] sm:$0xff]
    %v2454 = vld [vmem:[%s6 + $0x48] sm:$0xff]
    %v2455 = vld [vmem:[%s6 + $0x50] sm:$0xff]
    %v2456 = vld [vmem:[%s6 + $0x58] sm:$0xff]
    %v2457 = vld [vmem:[%s6 + $0x60] sm:$0xff]
    %v2458 = vld [vmem:[%s6 + $0x68] sm:$0xff]
    %v2459 = vld [vmem:[%s6 + $0x70] sm:$0xff]
    %v2460 = vld [vmem:[%s6 + $0x78] sm:$0xff]
    %v2461 = vld [vmem:[%s6 + $0x80] sm:$0xff]
    %v2462 = vld [vmem:[%s6 + $0x88] sm:$0xff]
    %v2463 = vld [vmem:[%s6 + $0x90] sm:$0xff]
    %v2464 = vld [vmem:[%s6 + $0x98] sm:$0xff]
    %v2465 = vld [vmem:[%s6 + $0xa0] sm:$0xff]
    %v2466 = vld [vmem:[%s6 + $0xa8] sm:$0xff]
    %v2467 = vld [vmem:[%s6 + $0xb0] sm:$0xff]
    %v2468 = vld [vmem:[%s6 + $0xb8] sm:$0xff]
    %v2469 = vld [vmem:[%s6 + $0xc0] sm:$0xff]
    %v2470 = vld [vmem:[%s6 + $0xc8] sm:$0xff]
    %v2471 = vld [vmem:[%s6 + $0xd0] sm:$0xff]
    %v2472 = vld [vmem:[%s6 + $0xd8] sm:$0xff]
    %v2473 = vld [vmem:[%s6 + $0xe0] sm:$0xff]
    %v2474 = vld [vmem:[%s6 + $0xe8] sm:$0xff]
    %v2475 = vld [vmem:[%s6 + $0xf0] sm:$0xff]
    %v2476 = vld [vmem:[%s6 + $0xf8] sm:$0xff]
    %v2509 = vunpack.c.l.b16 %v2445
    %v2510 = vunpack.c.h.b16 %v2445
    %v2511 = vunpack.c.l.b16 %v2446
    %v2512 = vunpack.c.h.b16 %v2446
    %v2513 = vunpack.c.l.b16 %v2447
    %v2514 = vunpack.c.h.b16 %v2447
    %v2515 = vunpack.c.l.b16 %v2448
    %v2516 = vunpack.c.h.b16 %v2448
    %v2517 = vunpack.c.l.b16 %v2449
    %v2518 = vunpack.c.h.b16 %v2449
    %v2519 = vunpack.c.l.b16 %v2450
    %v2520 = vunpack.c.h.b16 %v2450
    %v2521 = vunpack.c.l.b16 %v2451
    %v2522 = vunpack.c.h.b16 %v2451
    %v2523 = vunpack.c.l.b16 %v2452
    %v2524 = vunpack.c.h.b16 %v2452
    %v2525 = vunpack.c.l.b16 %v2453
    %v2526 = vunpack.c.h.b16 %v2453
    %v2527 = vunpack.c.l.b16 %v2454
    %v2528 = vunpack.c.h.b16 %v2454
    %v2529 = vunpack.c.l.b16 %v2455
    %v2530 = vunpack.c.h.b16 %v2455
    %v2531 = vunpack.c.l.b16 %v2456
    %v2532 = vunpack.c.h.b16 %v2456
    %v2533 = vunpack.c.l.b16 %v2457
    %v2534 = vunpack.c.h.b16 %v2457
    %v2535 = vunpack.c.l.b16 %v2458
    %v2536 = vunpack.c.h.b16 %v2458
    %v2537 = vunpack.c.l.b16 %v2459
    %v2538 = vunpack.c.h.b16 %v2459
    %v2539 = vunpack.c.l.b16 %v2460
    %v2540 = vunpack.c.h.b16 %v2460
    %v2541 = vunpack.c.l.b16 %v2461
    %v2542 = vunpack.c.h.b16 %v2461
    %v2543 = vunpack.c.l.b16 %v2462
    %v2544 = vunpack.c.h.b16 %v2462
    %v2545 = vunpack.c.l.b16 %v2463
    %v2546 = vunpack.c.h.b16 %v2463
    %v2547 = vunpack.c.l.b16 %v2464
    %v2548 = vunpack.c.h.b16 %v2464
    %v2549 = vunpack.c.l.b16 %v2465
    %v2550 = vunpack.c.h.b16 %v2465
    %v2551 = vunpack.c.l.b16 %v2466
    %v2552 = vunpack.c.h.b16 %v2466
    %v2553 = vunpack.c.l.b16 %v2467
    %v2554 = vunpack.c.h.b16 %v2467
    %v2555 = vunpack.c.l.b16 %v2468
    %v2556 = vunpack.c.h.b16 %v2468
    %v2557 = vunpack.c.l.b16 %v2469
    %v2558 = vunpack.c.h.b16 %v2469
    %v2559 = vunpack.c.l.b16 %v2470
    %v2560 = vunpack.c.h.b16 %v2470
    %v2561 = vunpack.c.l.b16 %v2471
    %v2562 = vunpack.c.h.b16 %v2471
    %v2563 = vunpack.c.l.b16 %v2472
    %v2564 = vunpack.c.h.b16 %v2472
    %v2565 = vunpack.c.l.b16 %v2473
    %v2566 = vunpack.c.h.b16 %v2473
    %v2567 = vunpack.c.l.b16 %v2474
    %v2568 = vunpack.c.h.b16 %v2474
    %v2569 = vunpack.c.l.b16 %v2475
    %v2570 = vunpack.c.h.b16 %v2475
    %v2571 = vunpack.c.l.b16 %v2476
    %v2572 = vunpack.c.h.b16 %v2476
    %v2573 = vpack.c.b16 %v2513, %v2509
    %v2574 = vpack.c.b16 %v2514, %v2510
    %v2575 = vpack.c.b16 %v2515, %v2511
    %v2576 = vpack.c.b16 %v2516, %v2512
    %v2577 = vpack.c.b16 %v2521, %v2517
    %v2578 = vpack.c.b16 %v2522, %v2518
    %v2579 = vpack.c.b16 %v2523, %v2519
    %v2580 = vpack.c.b16 %v2524, %v2520
    %v2581 = vpack.c.b16 %v2529, %v2525
    %v2582 = vpack.c.b16 %v2530, %v2526
    %v2583 = vpack.c.b16 %v2531, %v2527
    %v2584 = vpack.c.b16 %v2532, %v2528
    %v2585 = vpack.c.b16 %v2537, %v2533
    %v2586 = vpack.c.b16 %v2538, %v2534
    %v2587 = vpack.c.b16 %v2539, %v2535
    %v2588 = vpack.c.b16 %v2540, %v2536
    %v2589 = vpack.c.b16 %v2545, %v2541
    %v2590 = vpack.c.b16 %v2546, %v2542
    %v2591 = vpack.c.b16 %v2547, %v2543
    %v2592 = vpack.c.b16 %v2548, %v2544
    %v2593 = vpack.c.b16 %v2553, %v2549
    %v2594 = vpack.c.b16 %v2554, %v2550
    %v2595 = vpack.c.b16 %v2555, %v2551
    %v2596 = vpack.c.b16 %v2556, %v2552
    %v2597 = vpack.c.b16 %v2561, %v2557
    %v2598 = vpack.c.b16 %v2562, %v2558
    %v2599 = vpack.c.b16 %v2563, %v2559
    %v2600 = vpack.c.b16 %v2564, %v2560
    %v2601 = vpack.c.b16 %v2569, %v2565
    %v2602 = vpack.c.b16 %v2570, %v2566
    %v2603 = vpack.c.b16 %v2571, %v2567
    %v2604 = vpack.c.b16 %v2572, %v2568
    %2637 = vmatpush.bf16.msra.mxu0 %v2601
    %2638 = vmatpush.bf16.msra.mxu0 %v2597
    %2639 = vmatpush.bf16.msra.mxu0 %v2593
    %2640 = vmatpush.bf16.msra.mxu0 %v2589
    %2641 = vmatpush.bf16.msra.mxu0 %v2585
    %2642 = vmatpush.bf16.msra.mxu0 %v2581
    %2643 = vmatpush.bf16.msra.mxu0 %v2577
    %2644 = vmatpush.bf16.msra.mxu0 %v2573
    %2645 = vmatmul.bf16.gmra.mxu0 %v2221
    %v2646 = vpop.f32.mrf.mxu0
    %v2647 = vadd.f32 0.0, %v2646
    %v2648 = vpop.f32.mrf.mxu0
    %2649 = vdwg.mxu0
    %2650 = vmatpush.bf16.msra.mxu0 %v2602
    %2651 = vmatpush.bf16.msra.mxu0 %v2598
    %2652 = vmatpush.bf16.msra.mxu0 %v2594
    %2653 = vmatpush.bf16.msra.mxu0 %v2590
    %2654 = vmatpush.bf16.msra.mxu0 %v2586
    %2655 = vmatpush.bf16.msra.mxu0 %v2582
    %2656 = vmatpush.bf16.msra.mxu0 %v2578
    %2657 = vmatpush.bf16.msra.mxu0 %v2574
    %2658 = vmatmul.bf16.gmra.mxu0 %v2221
    %v2659 = vpop.f32.mrf.mxu0
    %v2660 = vadd.f32 0.0, %v2659
    %v2661 = vpop.f32.mrf.mxu0
    %2662 = vdwg.mxu0
    %2663 = vmatpush.bf16.msra.mxu0 %v2603
    %2664 = vmatpush.bf16.msra.mxu0 %v2599
    %2665 = vmatpush.bf16.msra.mxu0 %v2595
    %2666 = vmatpush.bf16.msra.mxu0 %v2591
    %2667 = vmatpush.bf16.msra.mxu0 %v2587
    %2668 = vmatpush.bf16.msra.mxu0 %v2583
    %2669 = vmatpush.bf16.msra.mxu0 %v2579
    %2670 = vmatpush.bf16.msra.mxu0 %v2575
    %2671 = vmatmul.bf16.gmra.mxu0 %v2221
    %v2672 = vpop.f32.mrf.mxu0
    %v2673 = vadd.f32 0.0, %v2672
    %v2674 = vpop.f32.mrf.mxu0
    %2675 = vdwg.mxu0
    %2676 = vmatpush.bf16.msra.mxu0 %v2604
    %2677 = vmatpush.bf16.msra.mxu0 %v2600
    %2678 = vmatpush.bf16.msra.mxu0 %v2596
    %2679 = vmatpush.bf16.msra.mxu0 %v2592
    %2680 = vmatpush.bf16.msra.mxu0 %v2588
    %2681 = vmatpush.bf16.msra.mxu0 %v2584
    %2682 = vmatpush.bf16.msra.mxu0 %v2580
    %2683 = vmatpush.bf16.msra.mxu0 %v2576
    %2684 = vmatmul.bf16.gmra.mxu0 %v2221
    %v2685 = vpop.f32.mrf.mxu0
    %v2686 = vadd.f32 0.0, %v2685
    %v2687 = vpop.f32.mrf.mxu0
    %2688 = vdwg.mxu0
    %v2721 = vunpack.c.l.b16 %v2413
    %v2722 = vunpack.c.h.b16 %v2413
    %v2723 = vunpack.c.l.b16 %v2414
    %v2724 = vunpack.c.h.b16 %v2414
    %v2725 = vunpack.c.l.b16 %v2415
    %v2726 = vunpack.c.h.b16 %v2415
    %v2727 = vunpack.c.l.b16 %v2416
    %v2728 = vunpack.c.h.b16 %v2416
    %v2729 = vunpack.c.l.b16 %v2417
    %v2730 = vunpack.c.h.b16 %v2417
    %v2731 = vunpack.c.l.b16 %v2418
    %v2732 = vunpack.c.h.b16 %v2418
    %v2733 = vunpack.c.l.b16 %v2419
    %v2734 = vunpack.c.h.b16 %v2419
    %v2735 = vunpack.c.l.b16 %v2420
    %v2736 = vunpack.c.h.b16 %v2420
    %v2737 = vunpack.c.l.b16 %v2421
    %v2738 = vunpack.c.h.b16 %v2421
    %v2739 = vunpack.c.l.b16 %v2422
    %v2740 = vunpack.c.h.b16 %v2422
    %v2741 = vunpack.c.l.b16 %v2423
    %v2742 = vunpack.c.h.b16 %v2423
    %v2743 = vunpack.c.l.b16 %v2424
    %v2744 = vunpack.c.h.b16 %v2424
    %v2745 = vunpack.c.l.b16 %v2425
    %v2746 = vunpack.c.h.b16 %v2425
    %v2747 = vunpack.c.l.b16 %v2426
    %v2748 = vunpack.c.h.b16 %v2426
    %v2749 = vunpack.c.l.b16 %v2427
    %v2750 = vunpack.c.h.b16 %v2427
    %v2751 = vunpack.c.l.b16 %v2428
    %v2752 = vunpack.c.h.b16 %v2428
    %v2753 = vunpack.c.l.b16 %v2429
    %v2754 = vunpack.c.h.b16 %v2429
    %v2755 = vunpack.c.l.b16 %v2430
    %v2756 = vunpack.c.h.b16 %v2430
    %v2757 = vunpack.c.l.b16 %v2431
    %v2758 = vunpack.c.h.b16 %v2431
    %v2759 = vunpack.c.l.b16 %v2432
    %v2760 = vunpack.c.h.b16 %v2432
    %v2761 = vunpack.c.l.b16 %v2433
    %v2762 = vunpack.c.h.b16 %v2433
    %v2763 = vunpack.c.l.b16 %v2434
    %v2764 = vunpack.c.h.b16 %v2434
    %v2765 = vunpack.c.l.b16 %v2435
    %v2766 = vunpack.c.h.b16 %v2435
    %v2767 = vunpack.c.l.b16 %v2436
    %v2768 = vunpack.c.h.b16 %v2436
    %v2769 = vunpack.c.l.b16 %v2437
    %v2770 = vunpack.c.h.b16 %v2437
    %v2771 = vunpack.c.l.b16 %v2438
    %v2772 = vunpack.c.h.b16 %v2438
    %v2773 = vunpack.c.l.b16 %v2439
    %v2774 = vunpack.c.h.b16 %v2439
    %v2775 = vunpack.c.l.b16 %v2440
    %v2776 = vunpack.c.h.b16 %v2440
    %v2777 = vunpack.c.l.b16 %v2441
    %v2778 = vunpack.c.h.b16 %v2441
    %v2779 = vunpack.c.l.b16 %v2442
    %v2780 = vunpack.c.h.b16 %v2442
    %v2781 = vunpack.c.l.b16 %v2443
    %v2782 = vunpack.c.h.b16 %v2443
    %v2783 = vunpack.c.l.b16 %v2444
    %v2784 = vunpack.c.h.b16 %v2444
    %v2785 = vpack.c.b16 %v2725, %v2721
    %v2786 = vpack.c.b16 %v2726, %v2722
    %v2787 = vpack.c.b16 %v2727, %v2723
    %v2788 = vpack.c.b16 %v2728, %v2724
    %v2789 = vpack.c.b16 %v2733, %v2729
    %v2790 = vpack.c.b16 %v2734, %v2730
    %v2791 = vpack.c.b16 %v2735, %v2731
    %v2792 = vpack.c.b16 %v2736, %v2732
    %v2793 = vpack.c.b16 %v2741, %v2737
    %v2794 = vpack.c.b16 %v2742, %v2738
    %v2795 = vpack.c.b16 %v2743, %v2739
    %v2796 = vpack.c.b16 %v2744, %v2740
    %v2797 = vpack.c.b16 %v2749, %v2745
    %v2798 = vpack.c.b16 %v2750, %v2746
    %v2799 = vpack.c.b16 %v2751, %v2747
    %v2800 = vpack.c.b16 %v2752, %v2748
    %v2801 = vpack.c.b16 %v2757, %v2753
    %v2802 = vpack.c.b16 %v2758, %v2754
    %v2803 = vpack.c.b16 %v2759, %v2755
    %v2804 = vpack.c.b16 %v2760, %v2756
    %v2805 = vpack.c.b16 %v2765, %v2761
    %v2806 = vpack.c.b16 %v2766, %v2762
    %v2807 = vpack.c.b16 %v2767, %v2763
    %v2808 = vpack.c.b16 %v2768, %v2764
    %v2809 = vpack.c.b16 %v2773, %v2769
    %v2810 = vpack.c.b16 %v2774, %v2770
    %v2811 = vpack.c.b16 %v2775, %v2771
    %v2812 = vpack.c.b16 %v2776, %v2772
    %v2813 = vpack.c.b16 %v2781, %v2777
    %v2814 = vpack.c.b16 %v2782, %v2778
    %v2815 = vpack.c.b16 %v2783, %v2779
    %v2816 = vpack.c.b16 %v2784, %v2780
    %2849 = vmatpush.bf16.msra.mxu0 %v2813
    %2850 = vmatpush.bf16.msra.mxu0 %v2809
    %2851 = vmatpush.bf16.msra.mxu0 %v2805
    %2852 = vmatpush.bf16.msra.mxu0 %v2801
    %2853 = vmatpush.bf16.msra.mxu0 %v2797
    %2854 = vmatpush.bf16.msra.mxu0 %v2793
    %2855 = vmatpush.bf16.msra.mxu0 %v2789
    %2856 = vmatpush.bf16.msra.mxu0 %v2785
    %2857 = vmatmul.bf16.gmra.mxu0 %v2412
    %v2858 = vpop.f32.mrf.mxu0
    %v2859 = vadd.f32 %v2647, %v2858
    %v2860 = vpop.f32.mrf.mxu0
    %2861 = vdwg.mxu0
    %2862 = vmatpush.bf16.msra.mxu0 %v2814
    %2863 = vmatpush.bf16.msra.mxu0 %v2810
    %2864 = vmatpush.bf16.msra.mxu0 %v2806
    %2865 = vmatpush.bf16.msra.mxu0 %v2802
    %2866 = vmatpush.bf16.msra.mxu0 %v2798
    %2867 = vmatpush.bf16.msra.mxu0 %v2794
    %2868 = vmatpush.bf16.msra.mxu0 %v2790
    %2869 = vmatpush.bf16.msra.mxu0 %v2786
    %2870 = vmatmul.bf16.gmra.mxu0 %v2412
    %v2871 = vpop.f32.mrf.mxu0
    %v2872 = vadd.f32 %v2660, %v2871
    %v2873 = vpop.f32.mrf.mxu0
    %2874 = vdwg.mxu0
    %2875 = vmatpush.bf16.msra.mxu0 %v2815
    %2876 = vmatpush.bf16.msra.mxu0 %v2811
    %2877 = vmatpush.bf16.msra.mxu0 %v2807
    %2878 = vmatpush.bf16.msra.mxu0 %v2803
    %2879 = vmatpush.bf16.msra.mxu0 %v2799
    %2880 = vmatpush.bf16.msra.mxu0 %v2795
    %2881 = vmatpush.bf16.msra.mxu0 %v2791
    %2882 = vmatpush.bf16.msra.mxu0 %v2787
    %2883 = vmatmul.bf16.gmra.mxu0 %v2412
    %v2884 = vpop.f32.mrf.mxu0
    %v2885 = vadd.f32 %v2673, %v2884
    %v2886 = vpop.f32.mrf.mxu0
    %2887 = vdwg.mxu0
    %2888 = vmatpush.bf16.msra.mxu0 %v2816
    %2889 = vmatpush.bf16.msra.mxu0 %v2812
    %2890 = vmatpush.bf16.msra.mxu0 %v2808
    %2891 = vmatpush.bf16.msra.mxu0 %v2804
    %2892 = vmatpush.bf16.msra.mxu0 %v2800
    %2893 = vmatpush.bf16.msra.mxu0 %v2796
    %2894 = vmatpush.bf16.msra.mxu0 %v2792
    %2895 = vmatpush.bf16.msra.mxu0 %v2788
    %2896 = vmatmul.bf16.gmra.mxu0 %v2412
    %v2897 = vpop.f32.mrf.mxu0
    %v2898 = vadd.f32 %v2686, %v2897
    %v2899 = vpop.f32.mrf.mxu0
    %2900 = vdwg.mxu0
    %v2901 = vadd.f32 %v2859, %v67
    %v2902 = vadd.f32 %v2872, %v68
    %v2903 = vadd.f32 %v2885, %v69
    %v2904 = vadd.f32 %v2898, %v70
    %v2905 = vxor.u32 %v2901, 2147483648
    %v2906 = vmul.f32 %v2905, 1.442695
    %v2907 = vpow.pop %v2906
    %v2908 = vadd.f32 %v2907, 1.0
    %v2909 = vrcp.pop %v2908
    %v2910 = vmul.f32 %v2908, %v2909
    %v2911 = vsub.f32 1.0, %v2910
    %v2912 = vmul.f32 %v2909, %v2911
    %v2913 = vadd.f32 %v2909, %v2912
    %vm2914 = vweird.f32 %v2908
    %vm2915 = vweird.f32 %v2909
    %vm2916 = vmor %vm2914, %vm2915
    %v2917 = vsel %vm2916, %v2909, %v2913
    %v2918 = vand.u32 2147483647, %v2908
    %vm2919 = vcmp.eq.f32.partialorder %v2918, 8.507059e+37
    %v2920 = vand.u32 %v2908, 2147483648
    %v2921 = vor.u32 1.1754944e-38, %v2920
    %v2922 = vsel %vm2919, %v2921, %v2917
    %v2923 = vmul.f32 1.0, %v2922
    %v2924 = vxor.u32 %v2902, 2147483648
    %v2925 = vmul.f32 %v2924, 1.442695
    %v2926 = vpow.pop %v2925
    %v2927 = vadd.f32 %v2926, 1.0
    %v2928 = vrcp.pop %v2927
    %v2929 = vmul.f32 %v2927, %v2928
    %v2930 = vsub.f32 1.0, %v2929
    %v2931 = vmul.f32 %v2928, %v2930
    %v2932 = vadd.f32 %v2928, %v2931
    %vm2933 = vweird.f32 %v2927
    %vm2934 = vweird.f32 %v2928
    %vm2935 = vmor %vm2933, %vm2934
    %v2936 = vsel %vm2935, %v2928, %v2932
    %v2937 = vand.u32 2147483647, %v2927
    %vm2938 = vcmp.eq.f32.partialorder %v2937, 8.507059e+37
    %v2939 = vand.u32 %v2927, 2147483648
    %v2940 = vor.u32 1.1754944e-38, %v2939
    %v2941 = vsel %vm2938, %v2940, %v2936
    %v2942 = vmul.f32 1.0, %v2941
    %v2943 = vtanh.pop %v2903
    %v2944 = vxor.u32 %v2904, 2147483648
    %v2945 = vmul.f32 %v2944, 1.442695
    %v2946 = vpow.pop %v2945
    %v2947 = vadd.f32 %v2946, 1.0
    %v2948 = vrcp.pop %v2947
    %v2949 = vmul.f32 %v2947, %v2948
    %v2950 = vsub.f32 1.0, %v2949
    %v2951 = vmul.f32 %v2948, %v2950
    %v2952 = vadd.f32 %v2948, %v2951
    %vm2953 = vweird.f32 %v2947
    %vm2954 = vweird.f32 %v2948
    %vm2955 = vmor %vm2953, %vm2954
    %v2956 = vsel %vm2955, %v2948, %v2952
    %v2957 = vand.u32 2147483647, %v2947
    %vm2958 = vcmp.eq.f32.partialorder %v2957, 8.507059e+37
    %v2959 = vand.u32 %v2947, 2147483648
    %v2960 = vor.u32 1.1754944e-38, %v2959
    %v2961 = vsel %vm2958, %v2960, %v2956
    %v2962 = vmul.f32 1.0, %v2961
    %v2963 = vmul.f32 %v2942, %v2218
    %v2964 = vmul.f32 %v2923, %v2943
    %v2965 = vadd.f32 %v2963, %v2964
    %v2966 = vtanh.pop %v2965
    %v2967 = vmul.f32 %v2962, %v2966
    %v2968 = vpack.c.bf16 %v2967, %v2967
    %v2969 = vld [vmem:[%s8] sm:$0xf]
    %v2970 = vld [vmem:[%s8 + $0x4] sm:$0xf]
    %v2971 = vld [vmem:[%s8 + $0x8] sm:$0xf]
    %v2972 = vld [vmem:[%s8 + $0xc] sm:$0xf]
    %v2973 = vld [vmem:[%s8 + $0x10] sm:$0xf]
    %v2974 = vld [vmem:[%s8 + $0x14] sm:$0xf]
    %v2975 = vld [vmem:[%s8 + $0x18] sm:$0xf]
    %v2976 = vld [vmem:[%s8 + $0x1c] sm:$0xf]
    %v2977 = vld [vmem:[%s8 + $0x20] sm:$0xf]
    %v2978 = vld [vmem:[%s8 + $0x24] sm:$0xf]
    %v2979 = vld [vmem:[%s8 + $0x28] sm:$0xf]
    %v2980 = vld [vmem:[%s8 + $0x2c] sm:$0xf]
    %v2981 = vld [vmem:[%s8 + $0x30] sm:$0xf]
    %v2982 = vld [vmem:[%s8 + $0x34] sm:$0xf]
    %v2983 = vld [vmem:[%s8 + $0x38] sm:$0xf]
    %v2984 = vld [vmem:[%s8 + $0x3c] sm:$0xf]
    %v3001 = vunpack.c.l.b16 %v2969
    %v3002 = vunpack.c.l.b16 %v2970
    %v3003 = vunpack.c.l.b16 %v2971
    %v3004 = vunpack.c.l.b16 %v2972
    %v3005 = vunpack.c.l.b16 %v2973
    %v3006 = vunpack.c.l.b16 %v2974
    %v3007 = vunpack.c.l.b16 %v2975
    %v3008 = vunpack.c.l.b16 %v2976
    %v3009 = vunpack.c.l.b16 %v2977
    %v3010 = vunpack.c.l.b16 %v2978
    %v3011 = vunpack.c.l.b16 %v2979
    %v3012 = vunpack.c.l.b16 %v2980
    %v3013 = vunpack.c.l.b16 %v2981
    %v3014 = vunpack.c.l.b16 %v2982
    %v3015 = vunpack.c.l.b16 %v2983
    %v3016 = vunpack.c.l.b16 %v2984
    %v3017 = vpack.c.b16 %v3002, %v3001
    %v3018 = vpack.c.b16 %v3004, %v3003
    %v3019 = vpack.c.b16 %v3006, %v3005
    %v3020 = vpack.c.b16 %v3008, %v3007
    %v3021 = vpack.c.b16 %v3010, %v3009
    %v3022 = vpack.c.b16 %v3012, %v3011
    %v3023 = vpack.c.b16 %v3014, %v3013
    %v3024 = vpack.c.b16 %v3016, %v3015
    %3033 = vmatpush.bf16.msra.mxu0 %v3024
    %3034 = vmatpush.bf16.msra.mxu0 %v3023
    %3035 = vmatpush.bf16.msra.mxu0 %v3022
    %3036 = vmatpush.bf16.msra.mxu0 %v3021
    %3037 = vmatpush.bf16.msra.mxu0 %v3020
    %3038 = vmatpush.bf16.msra.mxu0 %v3019
    %3039 = vmatpush.bf16.msra.mxu0 %v3018
    %3040 = vmatpush.bf16.msra.mxu0 %v3017
    %3041 = vmatmul.bf16.gmra.mxu0 %v2968
    %v3042 = vpop.f32.mrf.mxu0
    %v3043 = vadd.f32 %v77, %v3042
    %v3044 = vpop.f32.mrf.mxu0
    %3045 = vdwg.mxu0
    %s3046 = scalar_lea.vmem %s10, 24
    %3047 = vst [vmem:[%s3046] sm:$0xff] %v3043
    %v3048 = vsel %vm81, %v3043, -inf
    %3049 = vmax.xlane.f32.xlu0 %v3048
    %v3050 = vpop.xlane.xlu0 %3049
    %vm3051 = vcmp.eq.f32.partialorder %v3048, %v3050
    %v3052 = vsel %vm3051, %v80, 128
    %v3053 = vand.u32 %v3052, 65535
    %v3054 = vshra.s32 %v3052, 16
    %v3055 = vcvt.s32.f32 %v3053
    %v3056 = vcvt.s32.f32 %v3054
    %3057 = vmin.xlane.f32.xlu0 %v3056
    %v3058 = vpop.xlane.xlu0 %3057
    %vm3059 = vcmp.eq.f32.partialorder %v3056, %v3058
    %v3060 = vsel %vm3059, %v3055, inf
    %3061 = vmin.xlane.f32.xlu0 %v3060
    %v3062 = vpop.xlane.xlu0 %3061
    %v3063 = vcvt.f32.s32 %v3062
    %v3064 = vcvt.f32.s32 %v3058
    %v3065 = vshll.u32 %v3064, 16
    %v3066 = vadd.s32 %v3065, %v3063
    %vm3067 = vcmp.eq.s32.totalorder %v80, %v3066
    %v3068 = vsel %vm3067, 1, 0
    %v3069 = vcvt.s32.f32 %v3068
    %v3070 = vpack.c.bf16 %v3069, %v3069
    %s3071 = scalar_lea.vmem %s1, 16
    %v3072 = vld [vmem:[%s3071] sm:$0xf]
    %s3073 = sld [smem:[#allocation2 + $0x4]]
    %p3074 = scmp.gt.s32.totalorder %s3073, 0
    // Predicated region
    $region82: #{forward.3} parent=1 // pred_check
      %p3075 = pneg %p3074
    $region83: #{forward.3} parent=1 // pred_check_branch
      %3077 = sbr.rel (%p3075) target = $region85
    $region84: #{forward.3} parent=1 // pred_region
      _
    $region85: #{forward.3} parent=1 // pred_fallthru
      _
    %p3078 = pneg %p3074
    // Predicated region
    $region86: #{forward.3} parent=1 // pred_check
      _
    $region87: #{forward.3} parent=1 // pred_check_branch
      %3080 = sbr.rel (%p3074) target = $region89
    $region88: #{forward.3} parent=1 // pred_region
      %v3081 = vld [vmem:[%s4] sm:$0xf]
      %v3082 = vld [vmem:[%s4 + $0x4] sm:$0xf]
      %v3083 = vld [vmem:[%s4 + $0x8] sm:$0xf]
      %v3084 = vld [vmem:[%s4 + $0xc] sm:$0xf]
      %v3085 = vld [vmem:[%s4 + $0x10] sm:$0xf]
      %v3086 = vld [vmem:[%s4 + $0x14] sm:$0xf]
      %v3087 = vld [vmem:[%s4 + $0x18] sm:$0xf]
      %v3088 = vld [vmem:[%s4 + $0x1c] sm:$0xf]
      %v3089 = vld [vmem:[%s4 + $0x20] sm:$0xf]
      %v3090 = vld [vmem:[%s4 + $0x24] sm:$0xf]
      %v3091 = vld [vmem:[%s4 + $0x28] sm:$0xf]
      %v3092 = vld [vmem:[%s4 + $0x2c] sm:$0xf]
      %v3093 = vld [vmem:[%s4 + $0x30] sm:$0xf]
      %v3094 = vld [vmem:[%s4 + $0x34] sm:$0xf]
      %v3095 = vld [vmem:[%s4 + $0x38] sm:$0xf]
      %v3096 = vld [vmem:[%s4 + $0x3c] sm:$0xf]
      %v3113 = vunpack.c.l.b16 %v3081
      %v3114 = vunpack.c.l.b16 %v3082
      %v3115 = vunpack.c.l.b16 %v3083
      %v3116 = vunpack.c.l.b16 %v3084
      %v3117 = vunpack.c.l.b16 %v3085
      %v3118 = vunpack.c.l.b16 %v3086
      %v3119 = vunpack.c.l.b16 %v3087
      %v3120 = vunpack.c.l.b16 %v3088
      %v3121 = vunpack.c.l.b16 %v3089
      %v3122 = vunpack.c.l.b16 %v3090
      %v3123 = vunpack.c.l.b16 %v3091
      %v3124 = vunpack.c.l.b16 %v3092
      %v3125 = vunpack.c.l.b16 %v3093
      %v3126 = vunpack.c.l.b16 %v3094
      %v3127 = vunpack.c.l.b16 %v3095
      %v3128 = vunpack.c.l.b16 %v3096
      %v3129 = vpack.c.b16 %v3114, %v3113
      %v3130 = vpack.c.b16 %v3116, %v3115
      %v3131 = vpack.c.b16 %v3118, %v3117
      %v3132 = vpack.c.b16 %v3120, %v3119
      %v3133 = vpack.c.b16 %v3122, %v3121
      %v3134 = vpack.c.b16 %v3124, %v3123
      %v3135 = vpack.c.b16 %v3126, %v3125
      %v3136 = vpack.c.b16 %v3128, %v3127
      %3145 = vmatpush.bf16.msra.mxu0 %v3136
      %3146 = vmatpush.bf16.msra.mxu0 %v3135
      %3147 = vmatpush.bf16.msra.mxu0 %v3134
      %3148 = vmatpush.bf16.msra.mxu0 %v3133
      %3149 = vmatpush.bf16.msra.mxu0 %v3132
      %3150 = vmatpush.bf16.msra.mxu0 %v3131
      %3151 = vmatpush.bf16.msra.mxu0 %v3130
      %3152 = vmatpush.bf16.msra.mxu0 %v3129
      %3153 = vmatmul.bf16.gmra.mxu0 %v3070
      %v3154 = vpop.f32.mrf.mxu0
      %v3155 = vadd.f32 0.0, %v3154
      %v3156 = vpop.f32.mrf.mxu0
      %3157 = vdwg.mxu0
      %v3158 = vpack.c.bf16 %v3155, %v3155
    $region89: #{forward.3} parent=1 // pred_fallthru
      %v3159 = vphi %v3072, %v3158
    %v3160 = vld [vmem:[#allocation5] sm:$0xff]
    %v3161 = vld [vmem:[#allocation5 + $0x8] sm:$0xff]
    %v3162 = vld [vmem:[#allocation5 + $0x10] sm:$0xff]
    %v3163 = vld [vmem:[#allocation5 + $0x18] sm:$0xff]
    %v3164 = vld [vmem:[#allocation5 + $0x20] sm:$0xff]
    %v3165 = vld [vmem:[#allocation5 + $0x28] sm:$0xff]
    %v3166 = vld [vmem:[#allocation5 + $0x30] sm:$0xff]
    %v3167 = vld [vmem:[#allocation5 + $0x38] sm:$0xff]
    %v3168 = vld [vmem:[#allocation5 + $0x40] sm:$0xff]
    %v3169 = vld [vmem:[#allocation5 + $0x48] sm:$0xff]
    %v3170 = vld [vmem:[#allocation5 + $0x50] sm:$0xff]
    %v3171 = vld [vmem:[#allocation5 + $0x58] sm:$0xff]
    %v3172 = vld [vmem:[#allocation5 + $0x60] sm:$0xff]
    %v3173 = vld [vmem:[#allocation5 + $0x68] sm:$0xff]
    %v3174 = vld [vmem:[#allocation5 + $0x70] sm:$0xff]
    %v3175 = vld [vmem:[#allocation5 + $0x78] sm:$0xff]
    %v3176 = vld [vmem:[#allocation5 + $0x80] sm:$0xff]
    %v3177 = vld [vmem:[#allocation5 + $0x88] sm:$0xff]
    %v3178 = vld [vmem:[#allocation5 + $0x90] sm:$0xff]
    %v3179 = vld [vmem:[#allocation5 + $0x98] sm:$0xff]
    %v3180 = vld [vmem:[#allocation5 + $0xa0] sm:$0xff]
    %v3181 = vld [vmem:[#allocation5 + $0xa8] sm:$0xff]
    %v3182 = vld [vmem:[#allocation5 + $0xb0] sm:$0xff]
    %v3183 = vld [vmem:[#allocation5 + $0xb8] sm:$0xff]
    %v3184 = vld [vmem:[#allocation5 + $0xc0] sm:$0xff]
    %v3185 = vld [vmem:[#allocation5 + $0xc8] sm:$0xff]
    %v3186 = vld [vmem:[#allocation5 + $0xd0] sm:$0xff]
    %v3187 = vld [vmem:[#allocation5 + $0xd8] sm:$0xff]
    %v3188 = vld [vmem:[#allocation5 + $0xe0] sm:$0xff]
    %v3189 = vld [vmem:[#allocation5 + $0xe8] sm:$0xff]
    %v3190 = vld [vmem:[#allocation5 + $0xf0] sm:$0xff]
    %v3191 = vld [vmem:[#allocation5 + $0xf8] sm:$0xff]
    %v3192 = vld [vmem:[%s6] sm:$0xff]
    %v3193 = vld [vmem:[%s6 + $0x8] sm:$0xff]
    %v3194 = vld [vmem:[%s6 + $0x10] sm:$0xff]
    %v3195 = vld [vmem:[%s6 + $0x18] sm:$0xff]
    %v3196 = vld [vmem:[%s6 + $0x20] sm:$0xff]
    %v3197 = vld [vmem:[%s6 + $0x28] sm:$0xff]
    %v3198 = vld [vmem:[%s6 + $0x30] sm:$0xff]
    %v3199 = vld [vmem:[%s6 + $0x38] sm:$0xff]
    %v3200 = vld [vmem:[%s6 + $0x40] sm:$0xff]
    %v3201 = vld [vmem:[%s6 + $0x48] sm:$0xff]
    %v3202 = vld [vmem:[%s6 + $0x50] sm:$0xff]
    %v3203 = vld [vmem:[%s6 + $0x58] sm:$0xff]
    %v3204 = vld [vmem:[%s6 + $0x60] sm:$0xff]
    %v3205 = vld [vmem:[%s6 + $0x68] sm:$0xff]
    %v3206 = vld [vmem:[%s6 + $0x70] sm:$0xff]
    %v3207 = vld [vmem:[%s6 + $0x78] sm:$0xff]
    %v3208 = vld [vmem:[%s6 + $0x80] sm:$0xff]
    %v3209 = vld [vmem:[%s6 + $0x88] sm:$0xff]
    %v3210 = vld [vmem:[%s6 + $0x90] sm:$0xff]
    %v3211 = vld [vmem:[%s6 + $0x98] sm:$0xff]
    %v3212 = vld [vmem:[%s6 + $0xa0] sm:$0xff]
    %v3213 = vld [vmem:[%s6 + $0xa8] sm:$0xff]
    %v3214 = vld [vmem:[%s6 + $0xb0] sm:$0xff]
    %v3215 = vld [vmem:[%s6 + $0xb8] sm:$0xff]
    %v3216 = vld [vmem:[%s6 + $0xc0] sm:$0xff]
    %v3217 = vld [vmem:[%s6 + $0xc8] sm:$0xff]
    %v3218 = vld [vmem:[%s6 + $0xd0] sm:$0xff]
    %v3219 = vld [vmem:[%s6 + $0xd8] sm:$0xff]
    %v3220 = vld [vmem:[%s6 + $0xe0] sm:$0xff]
    %v3221 = vld [vmem:[%s6 + $0xe8] sm:$0xff]
    %v3222 = vld [vmem:[%s6 + $0xf0] sm:$0xff]
    %v3223 = vld [vmem:[%s6 + $0xf8] sm:$0xff]
    %v3256 = vunpack.c.l.b16 %v3192
    %v3257 = vunpack.c.h.b16 %v3192
    %v3258 = vunpack.c.l.b16 %v3193
    %v3259 = vunpack.c.h.b16 %v3193
    %v3260 = vunpack.c.l.b16 %v3194
    %v3261 = vunpack.c.h.b16 %v3194
    %v3262 = vunpack.c.l.b16 %v3195
    %v3263 = vunpack.c.h.b16 %v3195
    %v3264 = vunpack.c.l.b16 %v3196
    %v3265 = vunpack.c.h.b16 %v3196
    %v3266 = vunpack.c.l.b16 %v3197
    %v3267 = vunpack.c.h.b16 %v3197
    %v3268 = vunpack.c.l.b16 %v3198
    %v3269 = vunpack.c.h.b16 %v3198
    %v3270 = vunpack.c.l.b16 %v3199
    %v3271 = vunpack.c.h.b16 %v3199
    %v3272 = vunpack.c.l.b16 %v3200
    %v3273 = vunpack.c.h.b16 %v3200
    %v3274 = vunpack.c.l.b16 %v3201
    %v3275 = vunpack.c.h.b16 %v3201
    %v3276 = vunpack.c.l.b16 %v3202
    %v3277 = vunpack.c.h.b16 %v3202
    %v3278 = vunpack.c.l.b16 %v3203
    %v3279 = vunpack.c.h.b16 %v3203
    %v3280 = vunpack.c.l.b16 %v3204
    %v3281 = vunpack.c.h.b16 %v3204
    %v3282 = vunpack.c.l.b16 %v3205
    %v3283 = vunpack.c.h.b16 %v3205
    %v3284 = vunpack.c.l.b16 %v3206
    %v3285 = vunpack.c.h.b16 %v3206
    %v3286 = vunpack.c.l.b16 %v3207
    %v3287 = vunpack.c.h.b16 %v3207
    %v3288 = vunpack.c.l.b16 %v3208
    %v3289 = vunpack.c.h.b16 %v3208
    %v3290 = vunpack.c.l.b16 %v3209
    %v3291 = vunpack.c.h.b16 %v3209
    %v3292 = vunpack.c.l.b16 %v3210
    %v3293 = vunpack.c.h.b16 %v3210
    %v3294 = vunpack.c.l.b16 %v3211
    %v3295 = vunpack.c.h.b16 %v3211
    %v3296 = vunpack.c.l.b16 %v3212
    %v3297 = vunpack.c.h.b16 %v3212
    %v3298 = vunpack.c.l.b16 %v3213
    %v3299 = vunpack.c.h.b16 %v3213
    %v3300 = vunpack.c.l.b16 %v3214
    %v3301 = vunpack.c.h.b16 %v3214
    %v3302 = vunpack.c.l.b16 %v3215
    %v3303 = vunpack.c.h.b16 %v3215
    %v3304 = vunpack.c.l.b16 %v3216
    %v3305 = vunpack.c.h.b16 %v3216
    %v3306 = vunpack.c.l.b16 %v3217
    %v3307 = vunpack.c.h.b16 %v3217
    %v3308 = vunpack.c.l.b16 %v3218
    %v3309 = vunpack.c.h.b16 %v3218
    %v3310 = vunpack.c.l.b16 %v3219
    %v3311 = vunpack.c.h.b16 %v3219
    %v3312 = vunpack.c.l.b16 %v3220
    %v3313 = vunpack.c.h.b16 %v3220
    %v3314 = vunpack.c.l.b16 %v3221
    %v3315 = vunpack.c.h.b16 %v3221
    %v3316 = vunpack.c.l.b16 %v3222
    %v3317 = vunpack.c.h.b16 %v3222
    %v3318 = vunpack.c.l.b16 %v3223
    %v3319 = vunpack.c.h.b16 %v3223
    %v3320 = vpack.c.b16 %v3260, %v3256
    %v3321 = vpack.c.b16 %v3261, %v3257
    %v3322 = vpack.c.b16 %v3262, %v3258
    %v3323 = vpack.c.b16 %v3263, %v3259
    %v3324 = vpack.c.b16 %v3268, %v3264
    %v3325 = vpack.c.b16 %v3269, %v3265
    %v3326 = vpack.c.b16 %v3270, %v3266
    %v3327 = vpack.c.b16 %v3271, %v3267
    %v3328 = vpack.c.b16 %v3276, %v3272
    %v3329 = vpack.c.b16 %v3277, %v3273
    %v3330 = vpack.c.b16 %v3278, %v3274
    %v3331 = vpack.c.b16 %v3279, %v3275
    %v3332 = vpack.c.b16 %v3284, %v3280
    %v3333 = vpack.c.b16 %v3285, %v3281
    %v3334 = vpack.c.b16 %v3286, %v3282
    %v3335 = vpack.c.b16 %v3287, %v3283
    %v3336 = vpack.c.b16 %v3292, %v3288
    %v3337 = vpack.c.b16 %v3293, %v3289
    %v3338 = vpack.c.b16 %v3294, %v3290
    %v3339 = vpack.c.b16 %v3295, %v3291
    %v3340 = vpack.c.b16 %v3300, %v3296
    %v3341 = vpack.c.b16 %v3301, %v3297
    %v3342 = vpack.c.b16 %v3302, %v3298
    %v3343 = vpack.c.b16 %v3303, %v3299
    %v3344 = vpack.c.b16 %v3308, %v3304
    %v3345 = vpack.c.b16 %v3309, %v3305
    %v3346 = vpack.c.b16 %v3310, %v3306
    %v3347 = vpack.c.b16 %v3311, %v3307
    %v3348 = vpack.c.b16 %v3316, %v3312
    %v3349 = vpack.c.b16 %v3317, %v3313
    %v3350 = vpack.c.b16 %v3318, %v3314
    %v3351 = vpack.c.b16 %v3319, %v3315
    %3384 = vmatpush.bf16.msra.mxu0 %v3348
    %3385 = vmatpush.bf16.msra.mxu0 %v3344
    %3386 = vmatpush.bf16.msra.mxu0 %v3340
    %3387 = vmatpush.bf16.msra.mxu0 %v3336
    %3388 = vmatpush.bf16.msra.mxu0 %v3332
    %3389 = vmatpush.bf16.msra.mxu0 %v3328
    %3390 = vmatpush.bf16.msra.mxu0 %v3324
    %3391 = vmatpush.bf16.msra.mxu0 %v3320
    %3392 = vmatmul.bf16.gmra.mxu0 %v2968
    %v3393 = vpop.f32.mrf.mxu0
    %v3394 = vadd.f32 0.0, %v3393
    %v3395 = vpop.f32.mrf.mxu0
    %3396 = vdwg.mxu0
    %3397 = vmatpush.bf16.msra.mxu0 %v3349
    %3398 = vmatpush.bf16.msra.mxu0 %v3345
    %3399 = vmatpush.bf16.msra.mxu0 %v3341
    %3400 = vmatpush.bf16.msra.mxu0 %v3337
    %3401 = vmatpush.bf16.msra.mxu0 %v3333
    %3402 = vmatpush.bf16.msra.mxu0 %v3329
    %3403 = vmatpush.bf16.msra.mxu0 %v3325
    %3404 = vmatpush.bf16.msra.mxu0 %v3321
    %3405 = vmatmul.bf16.gmra.mxu0 %v2968
    %v3406 = vpop.f32.mrf.mxu0
    %v3407 = vadd.f32 0.0, %v3406
    %v3408 = vpop.f32.mrf.mxu0
    %3409 = vdwg.mxu0
    %3410 = vmatpush.bf16.msra.mxu0 %v3350
    %3411 = vmatpush.bf16.msra.mxu0 %v3346
    %3412 = vmatpush.bf16.msra.mxu0 %v3342
    %3413 = vmatpush.bf16.msra.mxu0 %v3338
    %3414 = vmatpush.bf16.msra.mxu0 %v3334
    %3415 = vmatpush.bf16.msra.mxu0 %v3330
    %3416 = vmatpush.bf16.msra.mxu0 %v3326
    %3417 = vmatpush.bf16.msra.mxu0 %v3322
    %3418 = vmatmul.bf16.gmra.mxu0 %v2968
    %v3419 = vpop.f32.mrf.mxu0
    %v3420 = vadd.f32 0.0, %v3419
    %v3421 = vpop.f32.mrf.mxu0
    %3422 = vdwg.mxu0
    %3423 = vmatpush.bf16.msra.mxu0 %v3351
    %3424 = vmatpush.bf16.msra.mxu0 %v3347
    %3425 = vmatpush.bf16.msra.mxu0 %v3343
    %3426 = vmatpush.bf16.msra.mxu0 %v3339
    %3427 = vmatpush.bf16.msra.mxu0 %v3335
    %3428 = vmatpush.bf16.msra.mxu0 %v3331
    %3429 = vmatpush.bf16.msra.mxu0 %v3327
    %3430 = vmatpush.bf16.msra.mxu0 %v3323
    %3431 = vmatmul.bf16.gmra.mxu0 %v2968
    %v3432 = vpop.f32.mrf.mxu0
    %v3433 = vadd.f32 0.0, %v3432
    %v3434 = vpop.f32.mrf.mxu0
    %3435 = vdwg.mxu0
    %v3468 = vunpack.c.l.b16 %v3160
    %v3469 = vunpack.c.h.b16 %v3160
    %v3470 = vunpack.c.l.b16 %v3161
    %v3471 = vunpack.c.h.b16 %v3161
    %v3472 = vunpack.c.l.b16 %v3162
    %v3473 = vunpack.c.h.b16 %v3162
    %v3474 = vunpack.c.l.b16 %v3163
    %v3475 = vunpack.c.h.b16 %v3163
    %v3476 = vunpack.c.l.b16 %v3164
    %v3477 = vunpack.c.h.b16 %v3164
    %v3478 = vunpack.c.l.b16 %v3165
    %v3479 = vunpack.c.h.b16 %v3165
    %v3480 = vunpack.c.l.b16 %v3166
    %v3481 = vunpack.c.h.b16 %v3166
    %v3482 = vunpack.c.l.b16 %v3167
    %v3483 = vunpack.c.h.b16 %v3167
    %v3484 = vunpack.c.l.b16 %v3168
    %v3485 = vunpack.c.h.b16 %v3168
    %v3486 = vunpack.c.l.b16 %v3169
    %v3487 = vunpack.c.h.b16 %v3169
    %v3488 = vunpack.c.l.b16 %v3170
    %v3489 = vunpack.c.h.b16 %v3170
    %v3490 = vunpack.c.l.b16 %v3171
    %v3491 = vunpack.c.h.b16 %v3171
    %v3492 = vunpack.c.l.b16 %v3172
    %v3493 = vunpack.c.h.b16 %v3172
    %v3494 = vunpack.c.l.b16 %v3173
    %v3495 = vunpack.c.h.b16 %v3173
    %v3496 = vunpack.c.l.b16 %v3174
    %v3497 = vunpack.c.h.b16 %v3174
    %v3498 = vunpack.c.l.b16 %v3175
    %v3499 = vunpack.c.h.b16 %v3175
    %v3500 = vunpack.c.l.b16 %v3176
    %v3501 = vunpack.c.h.b16 %v3176
    %v3502 = vunpack.c.l.b16 %v3177
    %v3503 = vunpack.c.h.b16 %v3177
    %v3504 = vunpack.c.l.b16 %v3178
    %v3505 = vunpack.c.h.b16 %v3178
    %v3506 = vunpack.c.l.b16 %v3179
    %v3507 = vunpack.c.h.b16 %v3179
    %v3508 = vunpack.c.l.b16 %v3180
    %v3509 = vunpack.c.h.b16 %v3180
    %v3510 = vunpack.c.l.b16 %v3181
    %v3511 = vunpack.c.h.b16 %v3181
    %v3512 = vunpack.c.l.b16 %v3182
    %v3513 = vunpack.c.h.b16 %v3182
    %v3514 = vunpack.c.l.b16 %v3183
    %v3515 = vunpack.c.h.b16 %v3183
    %v3516 = vunpack.c.l.b16 %v3184
    %v3517 = vunpack.c.h.b16 %v3184
    %v3518 = vunpack.c.l.b16 %v3185
    %v3519 = vunpack.c.h.b16 %v3185
    %v3520 = vunpack.c.l.b16 %v3186
    %v3521 = vunpack.c.h.b16 %v3186
    %v3522 = vunpack.c.l.b16 %v3187
    %v3523 = vunpack.c.h.b16 %v3187
    %v3524 = vunpack.c.l.b16 %v3188
    %v3525 = vunpack.c.h.b16 %v3188
    %v3526 = vunpack.c.l.b16 %v3189
    %v3527 = vunpack.c.h.b16 %v3189
    %v3528 = vunpack.c.l.b16 %v3190
    %v3529 = vunpack.c.h.b16 %v3190
    %v3530 = vunpack.c.l.b16 %v3191
    %v3531 = vunpack.c.h.b16 %v3191
    %v3532 = vpack.c.b16 %v3472, %v3468
    %v3533 = vpack.c.b16 %v3473, %v3469
    %v3534 = vpack.c.b16 %v3474, %v3470
    %v3535 = vpack.c.b16 %v3475, %v3471
    %v3536 = vpack.c.b16 %v3480, %v3476
    %v3537 = vpack.c.b16 %v3481, %v3477
    %v3538 = vpack.c.b16 %v3482, %v3478
    %v3539 = vpack.c.b16 %v3483, %v3479
    %v3540 = vpack.c.b16 %v3488, %v3484
    %v3541 = vpack.c.b16 %v3489, %v3485
    %v3542 = vpack.c.b16 %v3490, %v3486
    %v3543 = vpack.c.b16 %v3491, %v3487
    %v3544 = vpack.c.b16 %v3496, %v3492
    %v3545 = vpack.c.b16 %v3497, %v3493
    %v3546 = vpack.c.b16 %v3498, %v3494
    %v3547 = vpack.c.b16 %v3499, %v3495
    %v3548 = vpack.c.b16 %v3504, %v3500
    %v3549 = vpack.c.b16 %v3505, %v3501
    %v3550 = vpack.c.b16 %v3506, %v3502
    %v3551 = vpack.c.b16 %v3507, %v3503
    %v3552 = vpack.c.b16 %v3512, %v3508
    %v3553 = vpack.c.b16 %v3513, %v3509
    %v3554 = vpack.c.b16 %v3514, %v3510
    %v3555 = vpack.c.b16 %v3515, %v3511
    %v3556 = vpack.c.b16 %v3520, %v3516
    %v3557 = vpack.c.b16 %v3521, %v3517
    %v3558 = vpack.c.b16 %v3522, %v3518
    %v3559 = vpack.c.b16 %v3523, %v3519
    %v3560 = vpack.c.b16 %v3528, %v3524
    %v3561 = vpack.c.b16 %v3529, %v3525
    %v3562 = vpack.c.b16 %v3530, %v3526
    %v3563 = vpack.c.b16 %v3531, %v3527
    %3596 = vmatpush.bf16.msra.mxu0 %v3560
    %3597 = vmatpush.bf16.msra.mxu0 %v3556
    %3598 = vmatpush.bf16.msra.mxu0 %v3552
    %3599 = vmatpush.bf16.msra.mxu0 %v3548
    %3600 = vmatpush.bf16.msra.mxu0 %v3544
    %3601 = vmatpush.bf16.msra.mxu0 %v3540
    %3602 = vmatpush.bf16.msra.mxu0 %v3536
    %3603 = vmatpush.bf16.msra.mxu0 %v3532
    %3604 = vmatmul.bf16.gmra.mxu0 %v3159
    %v3605 = vpop.f32.mrf.mxu0
    %v3606 = vadd.f32 %v3394, %v3605
    %v3607 = vpop.f32.mrf.mxu0
    %3608 = vdwg.mxu0
    %3609 = vmatpush.bf16.msra.mxu0 %v3561
    %3610 = vmatpush.bf16.msra.mxu0 %v3557
    %3611 = vmatpush.bf16.msra.mxu0 %v3553
    %3612 = vmatpush.bf16.msra.mxu0 %v3549
    %3613 = vmatpush.bf16.msra.mxu0 %v3545
    %3614 = vmatpush.bf16.msra.mxu0 %v3541
    %3615 = vmatpush.bf16.msra.mxu0 %v3537
    %3616 = vmatpush.bf16.msra.mxu0 %v3533
    %3617 = vmatmul.bf16.gmra.mxu0 %v3159
    %v3618 = vpop.f32.mrf.mxu0
    %v3619 = vadd.f32 %v3407, %v3618
    %v3620 = vpop.f32.mrf.mxu0
    %3621 = vdwg.mxu0
    %3622 = vmatpush.bf16.msra.mxu0 %v3562
    %3623 = vmatpush.bf16.msra.mxu0 %v3558
    %3624 = vmatpush.bf16.msra.mxu0 %v3554
    %3625 = vmatpush.bf16.msra.mxu0 %v3550
    %3626 = vmatpush.bf16.msra.mxu0 %v3546
    %3627 = vmatpush.bf16.msra.mxu0 %v3542
    %3628 = vmatpush.bf16.msra.mxu0 %v3538
    %3629 = vmatpush.bf16.msra.mxu0 %v3534
    %3630 = vmatmul.bf16.gmra.mxu0 %v3159
    %v3631 = vpop.f32.mrf.mxu0
    %v3632 = vadd.f32 %v3420, %v3631
    %v3633 = vpop.f32.mrf.mxu0
    %3634 = vdwg.mxu0
    %3635 = vmatpush.bf16.msra.mxu0 %v3563
    %3636 = vmatpush.bf16.msra.mxu0 %v3559
    %3637 = vmatpush.bf16.msra.mxu0 %v3555
    %3638 = vmatpush.bf16.msra.mxu0 %v3551
    %3639 = vmatpush.bf16.msra.mxu0 %v3547
    %3640 = vmatpush.bf16.msra.mxu0 %v3543
    %3641 = vmatpush.bf16.msra.mxu0 %v3539
    %3642 = vmatpush.bf16.msra.mxu0 %v3535
    %3643 = vmatmul.bf16.gmra.mxu0 %v3159
    %v3644 = vpop.f32.mrf.mxu0
    %v3645 = vadd.f32 %v3433, %v3644
    %v3646 = vpop.f32.mrf.mxu0
    %3647 = vdwg.mxu0
    %v3648 = vadd.f32 %v3606, %v67
    %v3649 = vadd.f32 %v3619, %v68
    %v3650 = vadd.f32 %v3632, %v69
    %v3651 = vadd.f32 %v3645, %v70
    %v3652 = vxor.u32 %v3648, 2147483648
    %v3653 = vmul.f32 %v3652, 1.442695
    %v3654 = vpow.pop %v3653
    %v3655 = vadd.f32 %v3654, 1.0
    %v3656 = vrcp.pop %v3655
    %v3657 = vmul.f32 %v3655, %v3656
    %v3658 = vsub.f32 1.0, %v3657
    %v3659 = vmul.f32 %v3656, %v3658
    %v3660 = vadd.f32 %v3656, %v3659
    %vm3661 = vweird.f32 %v3655
    %vm3662 = vweird.f32 %v3656
    %vm3663 = vmor %vm3661, %vm3662
    %v3664 = vsel %vm3663, %v3656, %v3660
    %v3665 = vand.u32 2147483647, %v3655
    %vm3666 = vcmp.eq.f32.partialorder %v3665, 8.507059e+37
    %v3667 = vand.u32 %v3655, 2147483648
    %v3668 = vor.u32 1.1754944e-38, %v3667
    %v3669 = vsel %vm3666, %v3668, %v3664
    %v3670 = vmul.f32 1.0, %v3669
    %v3671 = vxor.u32 %v3649, 2147483648
    %v3672 = vmul.f32 %v3671, 1.442695
    %v3673 = vpow.pop %v3672
    %v3674 = vadd.f32 %v3673, 1.0
    %v3675 = vrcp.pop %v3674
    %v3676 = vmul.f32 %v3674, %v3675
    %v3677 = vsub.f32 1.0, %v3676
    %v3678 = vmul.f32 %v3675, %v3677
    %v3679 = vadd.f32 %v3675, %v3678
    %vm3680 = vweird.f32 %v3674
    %vm3681 = vweird.f32 %v3675
    %vm3682 = vmor %vm3680, %vm3681
    %v3683 = vsel %vm3682, %v3675, %v3679
    %v3684 = vand.u32 2147483647, %v3674
    %vm3685 = vcmp.eq.f32.partialorder %v3684, 8.507059e+37
    %v3686 = vand.u32 %v3674, 2147483648
    %v3687 = vor.u32 1.1754944e-38, %v3686
    %v3688 = vsel %vm3685, %v3687, %v3683
    %v3689 = vmul.f32 1.0, %v3688
    %v3690 = vtanh.pop %v3650
    %v3691 = vxor.u32 %v3651, 2147483648
    %v3692 = vmul.f32 %v3691, 1.442695
    %v3693 = vpow.pop %v3692
    %v3694 = vadd.f32 %v3693, 1.0
    %v3695 = vrcp.pop %v3694
    %v3696 = vmul.f32 %v3694, %v3695
    %v3697 = vsub.f32 1.0, %v3696
    %v3698 = vmul.f32 %v3695, %v3697
    %v3699 = vadd.f32 %v3695, %v3698
    %vm3700 = vweird.f32 %v3694
    %vm3701 = vweird.f32 %v3695
    %vm3702 = vmor %vm3700, %vm3701
    %v3703 = vsel %vm3702, %v3695, %v3699
    %v3704 = vand.u32 2147483647, %v3694
    %vm3705 = vcmp.eq.f32.partialorder %v3704, 8.507059e+37
    %v3706 = vand.u32 %v3694, 2147483648
    %v3707 = vor.u32 1.1754944e-38, %v3706
    %v3708 = vsel %vm3705, %v3707, %v3703
    %v3709 = vmul.f32 1.0, %v3708
    %v3710 = vmul.f32 %v3689, %v2965
    %v3711 = vmul.f32 %v3670, %v3690
    %v3712 = vadd.f32 %v3710, %v3711
    %v3713 = vtanh.pop %v3712
    %v3714 = vmul.f32 %v3709, %v3713
    %v3715 = vpack.c.bf16 %v3714, %v3714
    %v3716 = vld [vmem:[%s8] sm:$0xf]
    %v3717 = vld [vmem:[%s8 + $0x4] sm:$0xf]
    %v3718 = vld [vmem:[%s8 + $0x8] sm:$0xf]
    %v3719 = vld [vmem:[%s8 + $0xc] sm:$0xf]
    %v3720 = vld [vmem:[%s8 + $0x10] sm:$0xf]
    %v3721 = vld [vmem:[%s8 + $0x14] sm:$0xf]
    %v3722 = vld [vmem:[%s8 + $0x18] sm:$0xf]
    %v3723 = vld [vmem:[%s8 + $0x1c] sm:$0xf]
    %v3724 = vld [vmem:[%s8 + $0x20] sm:$0xf]
    %v3725 = vld [vmem:[%s8 + $0x24] sm:$0xf]
    %v3726 = vld [vmem:[%s8 + $0x28] sm:$0xf]
    %v3727 = vld [vmem:[%s8 + $0x2c] sm:$0xf]
    %v3728 = vld [vmem:[%s8 + $0x30] sm:$0xf]
    %v3729 = vld [vmem:[%s8 + $0x34] sm:$0xf]
    %v3730 = vld [vmem:[%s8 + $0x38] sm:$0xf]
    %v3731 = vld [vmem:[%s8 + $0x3c] sm:$0xf]
    %v3748 = vunpack.c.l.b16 %v3716
    %v3749 = vunpack.c.l.b16 %v3717
    %v3750 = vunpack.c.l.b16 %v3718
    %v3751 = vunpack.c.l.b16 %v3719
    %v3752 = vunpack.c.l.b16 %v3720
    %v3753 = vunpack.c.l.b16 %v3721
    %v3754 = vunpack.c.l.b16 %v3722
    %v3755 = vunpack.c.l.b16 %v3723
    %v3756 = vunpack.c.l.b16 %v3724
    %v3757 = vunpack.c.l.b16 %v3725
    %v3758 = vunpack.c.l.b16 %v3726
    %v3759 = vunpack.c.l.b16 %v3727
    %v3760 = vunpack.c.l.b16 %v3728
    %v3761 = vunpack.c.l.b16 %v3729
    %v3762 = vunpack.c.l.b16 %v3730
    %v3763 = vunpack.c.l.b16 %v3731
    %v3764 = vpack.c.b16 %v3749, %v3748
    %v3765 = vpack.c.b16 %v3751, %v3750
    %v3766 = vpack.c.b16 %v3753, %v3752
    %v3767 = vpack.c.b16 %v3755, %v3754
    %v3768 = vpack.c.b16 %v3757, %v3756
    %v3769 = vpack.c.b16 %v3759, %v3758
    %v3770 = vpack.c.b16 %v3761, %v3760
    %v3771 = vpack.c.b16 %v3763, %v3762
    %3780 = vmatpush.bf16.msra.mxu0 %v3771
    %3781 = vmatpush.bf16.msra.mxu0 %v3770
    %3782 = vmatpush.bf16.msra.mxu0 %v3769
    %3783 = vmatpush.bf16.msra.mxu0 %v3768
    %3784 = vmatpush.bf16.msra.mxu0 %v3767
    %3785 = vmatpush.bf16.msra.mxu0 %v3766
    %3786 = vmatpush.bf16.msra.mxu0 %v3765
    %3787 = vmatpush.bf16.msra.mxu0 %v3764
    %3788 = vmatmul.bf16.gmra.mxu0 %v3715
    %v3789 = vpop.f32.mrf.mxu0
    %v3790 = vadd.f32 %v77, %v3789
    %v3791 = vpop.f32.mrf.mxu0
    %3792 = vdwg.mxu0
    %s3793 = scalar_lea.vmem %s10, 32
    %3794 = vst [vmem:[%s3793] sm:$0xff] %v3790
    %v3795 = vsel %vm81, %v3790, -inf
    %3796 = vmax.xlane.f32.xlu0 %v3795
    %v3797 = vpop.xlane.xlu0 %3796
    %vm3798 = vcmp.eq.f32.partialorder %v3795, %v3797
    %v3799 = vsel %vm3798, %v80, 128
    %v3800 = vand.u32 %v3799, 65535
    %v3801 = vshra.s32 %v3799, 16
    %v3802 = vcvt.s32.f32 %v3800
    %v3803 = vcvt.s32.f32 %v3801
    %3804 = vmin.xlane.f32.xlu0 %v3803
    %v3805 = vpop.xlane.xlu0 %3804
    %vm3806 = vcmp.eq.f32.partialorder %v3803, %v3805
    %v3807 = vsel %vm3806, %v3802, inf
    %3808 = vmin.xlane.f32.xlu0 %v3807
    %v3809 = vpop.xlane.xlu0 %3808
    %v3810 = vcvt.f32.s32 %v3809
    %v3811 = vcvt.f32.s32 %v3805
    %v3812 = vshll.u32 %v3811, 16
    %v3813 = vadd.s32 %v3812, %v3810
    %vm3814 = vcmp.eq.s32.totalorder %v80, %v3813
    %v3815 = vsel %vm3814, 1, 0
    %v3816 = vcvt.s32.f32 %v3815
    %v3817 = vpack.c.bf16 %v3816, %v3816
    %s3818 = scalar_lea.vmem %s1, 20
    %v3819 = vld [vmem:[%s3818] sm:$0xf]
    %s3820 = sld [smem:[#allocation2 + $0x5]]
    %p3821 = scmp.gt.s32.totalorder %s3820, 0
    // Predicated region
    $region90: #{forward.3} parent=1 // pred_check
      %p3822 = pneg %p3821
    $region91: #{forward.3} parent=1 // pred_check_branch
      %3824 = sbr.rel (%p3822) target = $region93
    $region92: #{forward.3} parent=1 // pred_region
      _
    $region93: #{forward.3} parent=1 // pred_fallthru
      _
    %p3825 = pneg %p3821
    // Predicated region
    $region94: #{forward.3} parent=1 // pred_check
      _
    $region95: #{forward.3} parent=1 // pred_check_branch
      %3827 = sbr.rel (%p3821) target = $region97
    $region96: #{forward.3} parent=1 // pred_region
      %v3828 = vld [vmem:[%s4] sm:$0xf]
      %v3829 = vld [vmem:[%s4 + $0x4] sm:$0xf]
      %v3830 = vld [vmem:[%s4 + $0x8] sm:$0xf]
      %v3831 = vld [vmem:[%s4 + $0xc] sm:$0xf]
      %v3832 = vld [vmem:[%s4 + $0x10] sm:$0xf]
      %v3833 = vld [vmem:[%s4 + $0x14] sm:$0xf]
      %v3834 = vld [vmem:[%s4 + $0x18] sm:$0xf]
      %v3835 = vld [vmem:[%s4 + $0x1c] sm:$0xf]
      %v3836 = vld [vmem:[%s4 + $0x20] sm:$0xf]
      %v3837 = vld [vmem:[%s4 + $0x24] sm:$0xf]
      %v3838 = vld [vmem:[%s4 + $0x28] sm:$0xf]
      %v3839 = vld [vmem:[%s4 + $0x2c] sm:$0xf]
      %v3840 = vld [vmem:[%s4 + $0x30] sm:$0xf]
      %v3841 = vld [vmem:[%s4 + $0x34] sm:$0xf]
      %v3842 = vld [vmem:[%s4 + $0x38] sm:$0xf]
      %v3843 = vld [vmem:[%s4 + $0x3c] sm:$0xf]
      %v3860 = vunpack.c.l.b16 %v3828
      %v3861 = vunpack.c.l.b16 %v3829
      %v3862 = vunpack.c.l.b16 %v3830
      %v3863 = vunpack.c.l.b16 %v3831
      %v3864 = vunpack.c.l.b16 %v3832
      %v3865 = vunpack.c.l.b16 %v3833
      %v3866 = vunpack.c.l.b16 %v3834
      %v3867 = vunpack.c.l.b16 %v3835
      %v3868 = vunpack.c.l.b16 %v3836
      %v3869 = vunpack.c.l.b16 %v3837
      %v3870 = vunpack.c.l.b16 %v3838
      %v3871 = vunpack.c.l.b16 %v3839
      %v3872 = vunpack.c.l.b16 %v3840
      %v3873 = vunpack.c.l.b16 %v3841
      %v3874 = vunpack.c.l.b16 %v3842
      %v3875 = vunpack.c.l.b16 %v3843
      %v3876 = vpack.c.b16 %v3861, %v3860
      %v3877 = vpack.c.b16 %v3863, %v3862
      %v3878 = vpack.c.b16 %v3865, %v3864
      %v3879 = vpack.c.b16 %v3867, %v3866
      %v3880 = vpack.c.b16 %v3869, %v3868
      %v3881 = vpack.c.b16 %v3871, %v3870
      %v3882 = vpack.c.b16 %v3873, %v3872
      %v3883 = vpack.c.b16 %v3875, %v3874
      %3892 = vmatpush.bf16.msra.mxu0 %v3883
      %3893 = vmatpush.bf16.msra.mxu0 %v3882
      %3894 = vmatpush.bf16.msra.mxu0 %v3881
      %3895 = vmatpush.bf16.msra.mxu0 %v3880
      %3896 = vmatpush.bf16.msra.mxu0 %v3879
      %3897 = vmatpush.bf16.msra.mxu0 %v3878
      %3898 = vmatpush.bf16.msra.mxu0 %v3877
      %3899 = vmatpush.bf16.msra.mxu0 %v3876
      %3900 = vmatmul.bf16.gmra.mxu0 %v3817
      %v3901 = vpop.f32.mrf.mxu0
      %v3902 = vadd.f32 0.0, %v3901
      %v3903 = vpop.f32.mrf.mxu0
      %3904 = vdwg.mxu0
      %v3905 = vpack.c.bf16 %v3902, %v3902
    $region97: #{forward.3} parent=1 // pred_fallthru
      %v3906 = vphi %v3819, %v3905
    %v3907 = vld [vmem:[#allocation5] sm:$0xff]
    %v3908 = vld [vmem:[#allocation5 + $0x8] sm:$0xff]
    %v3909 = vld [vmem:[#allocation5 + $0x10] sm:$0xff]
    %v3910 = vld [vmem:[#allocation5 + $0x18] sm:$0xff]
    %v3911 = vld [vmem:[#allocation5 + $0x20] sm:$0xff]
    %v3912 = vld [vmem:[#allocation5 + $0x28] sm:$0xff]
    %v3913 = vld [vmem:[#allocation5 + $0x30] sm:$0xff]
    %v3914 = vld [vmem:[#allocation5 + $0x38] sm:$0xff]
    %v3915 = vld [vmem:[#allocation5 + $0x40] sm:$0xff]
    %v3916 = vld [vmem:[#allocation5 + $0x48] sm:$0xff]
    %v3917 = vld [vmem:[#allocation5 + $0x50] sm:$0xff]
    %v3918 = vld [vmem:[#allocation5 + $0x58] sm:$0xff]
    %v3919 = vld [vmem:[#allocation5 + $0x60] sm:$0xff]
    %v3920 = vld [vmem:[#allocation5 + $0x68] sm:$0xff]
    %v3921 = vld [vmem:[#allocation5 + $0x70] sm:$0xff]
    %v3922 = vld [vmem:[#allocation5 + $0x78] sm:$0xff]
    %v3923 = vld [vmem:[#allocation5 + $0x80] sm:$0xff]
    %v3924 = vld [vmem:[#allocation5 + $0x88] sm:$0xff]
    %v3925 = vld [vmem:[#allocation5 + $0x90] sm:$0xff]
    %v3926 = vld [vmem:[#allocation5 + $0x98] sm:$0xff]
    %v3927 = vld [vmem:[#allocation5 + $0xa0] sm:$0xff]
    %v3928 = vld [vmem:[#allocation5 + $0xa8] sm:$0xff]
    %v3929 = vld [vmem:[#allocation5 + $0xb0] sm:$0xff]
    %v3930 = vld [vmem:[#allocation5 + $0xb8] sm:$0xff]
    %v3931 = vld [vmem:[#allocation5 + $0xc0] sm:$0xff]
    %v3932 = vld [vmem:[#allocation5 + $0xc8] sm:$0xff]
    %v3933 = vld [vmem:[#allocation5 + $0xd0] sm:$0xff]
    %v3934 = vld [vmem:[#allocation5 + $0xd8] sm:$0xff]
    %v3935 = vld [vmem:[#allocation5 + $0xe0] sm:$0xff]
    %v3936 = vld [vmem:[#allocation5 + $0xe8] sm:$0xff]
    %v3937 = vld [vmem:[#allocation5 + $0xf0] sm:$0xff]
    %v3938 = vld [vmem:[#allocation5 + $0xf8] sm:$0xff]
    %v3939 = vld [vmem:[%s6] sm:$0xff]
    %v3940 = vld [vmem:[%s6 + $0x8] sm:$0xff]
    %v3941 = vld [vmem:[%s6 + $0x10] sm:$0xff]
    %v3942 = vld [vmem:[%s6 + $0x18] sm:$0xff]
    %v3943 = vld [vmem:[%s6 + $0x20] sm:$0xff]
    %v3944 = vld [vmem:[%s6 + $0x28] sm:$0xff]
    %v3945 = vld [vmem:[%s6 + $0x30] sm:$0xff]
    %v3946 = vld [vmem:[%s6 + $0x38] sm:$0xff]
    %v3947 = vld [vmem:[%s6 + $0x40] sm:$0xff]
    %v3948 = vld [vmem:[%s6 + $0x48] sm:$0xff]
    %v3949 = vld [vmem:[%s6 + $0x50] sm:$0xff]
    %v3950 = vld [vmem:[%s6 + $0x58] sm:$0xff]
    %v3951 = vld [vmem:[%s6 + $0x60] sm:$0xff]
    %v3952 = vld [vmem:[%s6 + $0x68] sm:$0xff]
    %v3953 = vld [vmem:[%s6 + $0x70] sm:$0xff]
    %v3954 = vld [vmem:[%s6 + $0x78] sm:$0xff]
    %v3955 = vld [vmem:[%s6 + $0x80] sm:$0xff]
    %v3956 = vld [vmem:[%s6 + $0x88] sm:$0xff]
    %v3957 = vld [vmem:[%s6 + $0x90] sm:$0xff]
    %v3958 = vld [vmem:[%s6 + $0x98] sm:$0xff]
    %v3959 = vld [vmem:[%s6 + $0xa0] sm:$0xff]
    %v3960 = vld [vmem:[%s6 + $0xa8] sm:$0xff]
    %v3961 = vld [vmem:[%s6 + $0xb0] sm:$0xff]
    %v3962 = vld [vmem:[%s6 + $0xb8] sm:$0xff]
    %v3963 = vld [vmem:[%s6 + $0xc0] sm:$0xff]
    %v3964 = vld [vmem:[%s6 + $0xc8] sm:$0xff]
    %v3965 = vld [vmem:[%s6 + $0xd0] sm:$0xff]
    %v3966 = vld [vmem:[%s6 + $0xd8] sm:$0xff]
    %v3967 = vld [vmem:[%s6 + $0xe0] sm:$0xff]
    %v3968 = vld [vmem:[%s6 + $0xe8] sm:$0xff]
    %v3969 = vld [vmem:[%s6 + $0xf0] sm:$0xff]
    %v3970 = vld [vmem:[%s6 + $0xf8] sm:$0xff]
    %v4003 = vunpack.c.l.b16 %v3939
    %v4004 = vunpack.c.h.b16 %v3939
    %v4005 = vunpack.c.l.b16 %v3940
    %v4006 = vunpack.c.h.b16 %v3940
    %v4007 = vunpack.c.l.b16 %v3941
    %v4008 = vunpack.c.h.b16 %v3941
    %v4009 = vunpack.c.l.b16 %v3942
    %v4010 = vunpack.c.h.b16 %v3942
    %v4011 = vunpack.c.l.b16 %v3943
    %v4012 = vunpack.c.h.b16 %v3943
    %v4013 = vunpack.c.l.b16 %v3944
    %v4014 = vunpack.c.h.b16 %v3944
    %v4015 = vunpack.c.l.b16 %v3945
    %v4016 = vunpack.c.h.b16 %v3945
    %v4017 = vunpack.c.l.b16 %v3946
    %v4018 = vunpack.c.h.b16 %v3946
    %v4019 = vunpack.c.l.b16 %v3947
    %v4020 = vunpack.c.h.b16 %v3947
    %v4021 = vunpack.c.l.b16 %v3948
    %v4022 = vunpack.c.h.b16 %v3948
    %v4023 = vunpack.c.l.b16 %v3949
    %v4024 = vunpack.c.h.b16 %v3949
    %v4025 = vunpack.c.l.b16 %v3950
    %v4026 = vunpack.c.h.b16 %v3950
    %v4027 = vunpack.c.l.b16 %v3951
    %v4028 = vunpack.c.h.b16 %v3951
    %v4029 = vunpack.c.l.b16 %v3952
    %v4030 = vunpack.c.h.b16 %v3952
    %v4031 = vunpack.c.l.b16 %v3953
    %v4032 = vunpack.c.h.b16 %v3953
    %v4033 = vunpack.c.l.b16 %v3954
    %v4034 = vunpack.c.h.b16 %v3954
    %v4035 = vunpack.c.l.b16 %v3955
    %v4036 = vunpack.c.h.b16 %v3955
    %v4037 = vunpack.c.l.b16 %v3956
    %v4038 = vunpack.c.h.b16 %v3956
    %v4039 = vunpack.c.l.b16 %v3957
    %v4040 = vunpack.c.h.b16 %v3957
    %v4041 = vunpack.c.l.b16 %v3958
    %v4042 = vunpack.c.h.b16 %v3958
    %v4043 = vunpack.c.l.b16 %v3959
    %v4044 = vunpack.c.h.b16 %v3959
    %v4045 = vunpack.c.l.b16 %v3960
    %v4046 = vunpack.c.h.b16 %v3960
    %v4047 = vunpack.c.l.b16 %v3961
    %v4048 = vunpack.c.h.b16 %v3961
    %v4049 = vunpack.c.l.b16 %v3962
    %v4050 = vunpack.c.h.b16 %v3962
    %v4051 = vunpack.c.l.b16 %v3963
    %v4052 = vunpack.c.h.b16 %v3963
    %v4053 = vunpack.c.l.b16 %v3964
    %v4054 = vunpack.c.h.b16 %v3964
    %v4055 = vunpack.c.l.b16 %v3965
    %v4056 = vunpack.c.h.b16 %v3965
    %v4057 = vunpack.c.l.b16 %v3966
    %v4058 = vunpack.c.h.b16 %v3966
    %v4059 = vunpack.c.l.b16 %v3967
    %v4060 = vunpack.c.h.b16 %v3967
    %v4061 = vunpack.c.l.b16 %v3968
    %v4062 = vunpack.c.h.b16 %v3968
    %v4063 = vunpack.c.l.b16 %v3969
    %v4064 = vunpack.c.h.b16 %v3969
    %v4065 = vunpack.c.l.b16 %v3970
    %v4066 = vunpack.c.h.b16 %v3970
    %v4067 = vpack.c.b16 %v4007, %v4003
    %v4068 = vpack.c.b16 %v4008, %v4004
    %v4069 = vpack.c.b16 %v4009, %v4005
    %v4070 = vpack.c.b16 %v4010, %v4006
    %v4071 = vpack.c.b16 %v4015, %v4011
    %v4072 = vpack.c.b16 %v4016, %v4012
    %v4073 = vpack.c.b16 %v4017, %v4013
    %v4074 = vpack.c.b16 %v4018, %v4014
    %v4075 = vpack.c.b16 %v4023, %v4019
    %v4076 = vpack.c.b16 %v4024, %v4020
    %v4077 = vpack.c.b16 %v4025, %v4021
    %v4078 = vpack.c.b16 %v4026, %v4022
    %v4079 = vpack.c.b16 %v4031, %v4027
    %v4080 = vpack.c.b16 %v4032, %v4028
    %v4081 = vpack.c.b16 %v4033, %v4029
    %v4082 = vpack.c.b16 %v4034, %v4030
    %v4083 = vpack.c.b16 %v4039, %v4035
    %v4084 = vpack.c.b16 %v4040, %v4036
    %v4085 = vpack.c.b16 %v4041, %v4037
    %v4086 = vpack.c.b16 %v4042, %v4038
    %v4087 = vpack.c.b16 %v4047, %v4043
    %v4088 = vpack.c.b16 %v4048, %v4044
    %v4089 = vpack.c.b16 %v4049, %v4045
    %v4090 = vpack.c.b16 %v4050, %v4046
    %v4091 = vpack.c.b16 %v4055, %v4051
    %v4092 = vpack.c.b16 %v4056, %v4052
    %v4093 = vpack.c.b16 %v4057, %v4053
    %v4094 = vpack.c.b16 %v4058, %v4054
    %v4095 = vpack.c.b16 %v4063, %v4059
    %v4096 = vpack.c.b16 %v4064, %v4060
    %v4097 = vpack.c.b16 %v4065, %v4061
    %v4098 = vpack.c.b16 %v4066, %v4062
    %4131 = vmatpush.bf16.msra.mxu0 %v4095
    %4132 = vmatpush.bf16.msra.mxu0 %v4091
    %4133 = vmatpush.bf16.msra.mxu0 %v4087
    %4134 = vmatpush.bf16.msra.mxu0 %v4083
    %4135 = vmatpush.bf16.msra.mxu0 %v4079
    %4136 = vmatpush.bf16.msra.mxu0 %v4075
    %4137 = vmatpush.bf16.msra.mxu0 %v4071
    %4138 = vmatpush.bf16.msra.mxu0 %v4067
    %4139 = vmatmul.bf16.gmra.mxu0 %v3715
    %v4140 = vpop.f32.mrf.mxu0
    %v4141 = vadd.f32 0.0, %v4140
    %v4142 = vpop.f32.mrf.mxu0
    %4143 = vdwg.mxu0
    %4144 = vmatpush.bf16.msra.mxu0 %v4096
    %4145 = vmatpush.bf16.msra.mxu0 %v4092
    %4146 = vmatpush.bf16.msra.mxu0 %v4088
    %4147 = vmatpush.bf16.msra.mxu0 %v4084
    %4148 = vmatpush.bf16.msra.mxu0 %v4080
    %4149 = vmatpush.bf16.msra.mxu0 %v4076
    %4150 = vmatpush.bf16.msra.mxu0 %v4072
    %4151 = vmatpush.bf16.msra.mxu0 %v4068
    %4152 = vmatmul.bf16.gmra.mxu0 %v3715
    %v4153 = vpop.f32.mrf.mxu0
    %v4154 = vadd.f32 0.0, %v4153
    %v4155 = vpop.f32.mrf.mxu0
    %4156 = vdwg.mxu0
    %4157 = vmatpush.bf16.msra.mxu0 %v4097
    %4158 = vmatpush.bf16.msra.mxu0 %v4093
    %4159 = vmatpush.bf16.msra.mxu0 %v4089
    %4160 = vmatpush.bf16.msra.mxu0 %v4085
    %4161 = vmatpush.bf16.msra.mxu0 %v4081
    %4162 = vmatpush.bf16.msra.mxu0 %v4077
    %4163 = vmatpush.bf16.msra.mxu0 %v4073
    %4164 = vmatpush.bf16.msra.mxu0 %v4069
    %4165 = vmatmul.bf16.gmra.mxu0 %v3715
    %v4166 = vpop.f32.mrf.mxu0
    %v4167 = vadd.f32 0.0, %v4166
    %v4168 = vpop.f32.mrf.mxu0
    %4169 = vdwg.mxu0
    %4170 = vmatpush.bf16.msra.mxu0 %v4098
    %4171 = vmatpush.bf16.msra.mxu0 %v4094
    %4172 = vmatpush.bf16.msra.mxu0 %v4090
    %4173 = vmatpush.bf16.msra.mxu0 %v4086
    %4174 = vmatpush.bf16.msra.mxu0 %v4082
    %4175 = vmatpush.bf16.msra.mxu0 %v4078
    %4176 = vmatpush.bf16.msra.mxu0 %v4074
    %4177 = vmatpush.bf16.msra.mxu0 %v4070
    %4178 = vmatmul.bf16.gmra.mxu0 %v3715
    %v4179 = vpop.f32.mrf.mxu0
    %v4180 = vadd.f32 0.0, %v4179
    %v4181 = vpop.f32.mrf.mxu0
    %4182 = vdwg.mxu0
    %v4215 = vunpack.c.l.b16 %v3907
    %v4216 = vunpack.c.h.b16 %v3907
    %v4217 = vunpack.c.l.b16 %v3908
    %v4218 = vunpack.c.h.b16 %v3908
    %v4219 = vunpack.c.l.b16 %v3909
    %v4220 = vunpack.c.h.b16 %v3909
    %v4221 = vunpack.c.l.b16 %v3910
    %v4222 = vunpack.c.h.b16 %v3910
    %v4223 = vunpack.c.l.b16 %v3911
    %v4224 = vunpack.c.h.b16 %v3911
    %v4225 = vunpack.c.l.b16 %v3912
    %v4226 = vunpack.c.h.b16 %v3912
    %v4227 = vunpack.c.l.b16 %v3913
    %v4228 = vunpack.c.h.b16 %v3913
    %v4229 = vunpack.c.l.b16 %v3914
    %v4230 = vunpack.c.h.b16 %v3914
    %v4231 = vunpack.c.l.b16 %v3915
    %v4232 = vunpack.c.h.b16 %v3915
    %v4233 = vunpack.c.l.b16 %v3916
    %v4234 = vunpack.c.h.b16 %v3916
    %v4235 = vunpack.c.l.b16 %v3917
    %v4236 = vunpack.c.h.b16 %v3917
    %v4237 = vunpack.c.l.b16 %v3918
    %v4238 = vunpack.c.h.b16 %v3918
    %v4239 = vunpack.c.l.b16 %v3919
    %v4240 = vunpack.c.h.b16 %v3919
    %v4241 = vunpack.c.l.b16 %v3920
    %v4242 = vunpack.c.h.b16 %v3920
    %v4243 = vunpack.c.l.b16 %v3921
    %v4244 = vunpack.c.h.b16 %v3921
    %v4245 = vunpack.c.l.b16 %v3922
    %v4246 = vunpack.c.h.b16 %v3922
    %v4247 = vunpack.c.l.b16 %v3923
    %v4248 = vunpack.c.h.b16 %v3923
    %v4249 = vunpack.c.l.b16 %v3924
    %v4250 = vunpack.c.h.b16 %v3924
    %v4251 = vunpack.c.l.b16 %v3925
    %v4252 = vunpack.c.h.b16 %v3925
    %v4253 = vunpack.c.l.b16 %v3926
    %v4254 = vunpack.c.h.b16 %v3926
    %v4255 = vunpack.c.l.b16 %v3927
    %v4256 = vunpack.c.h.b16 %v3927
    %v4257 = vunpack.c.l.b16 %v3928
    %v4258 = vunpack.c.h.b16 %v3928
    %v4259 = vunpack.c.l.b16 %v3929
    %v4260 = vunpack.c.h.b16 %v3929
    %v4261 = vunpack.c.l.b16 %v3930
    %v4262 = vunpack.c.h.b16 %v3930
    %v4263 = vunpack.c.l.b16 %v3931
    %v4264 = vunpack.c.h.b16 %v3931
    %v4265 = vunpack.c.l.b16 %v3932
    %v4266 = vunpack.c.h.b16 %v3932
    %v4267 = vunpack.c.l.b16 %v3933
    %v4268 = vunpack.c.h.b16 %v3933
    %v4269 = vunpack.c.l.b16 %v3934
    %v4270 = vunpack.c.h.b16 %v3934
    %v4271 = vunpack.c.l.b16 %v3935
    %v4272 = vunpack.c.h.b16 %v3935
    %v4273 = vunpack.c.l.b16 %v3936
    %v4274 = vunpack.c.h.b16 %v3936
    %v4275 = vunpack.c.l.b16 %v3937
    %v4276 = vunpack.c.h.b16 %v3937
    %v4277 = vunpack.c.l.b16 %v3938
    %v4278 = vunpack.c.h.b16 %v3938
    %v4279 = vpack.c.b16 %v4219, %v4215
    %v4280 = vpack.c.b16 %v4220, %v4216
    %v4281 = vpack.c.b16 %v4221, %v4217
    %v4282 = vpack.c.b16 %v4222, %v4218
    %v4283 = vpack.c.b16 %v4227, %v4223
    %v4284 = vpack.c.b16 %v4228, %v4224
    %v4285 = vpack.c.b16 %v4229, %v4225
    %v4286 = vpack.c.b16 %v4230, %v4226
    %v4287 = vpack.c.b16 %v4235, %v4231
    %v4288 = vpack.c.b16 %v4236, %v4232
    %v4289 = vpack.c.b16 %v4237, %v4233
    %v4290 = vpack.c.b16 %v4238, %v4234
    %v4291 = vpack.c.b16 %v4243, %v4239
    %v4292 = vpack.c.b16 %v4244, %v4240
    %v4293 = vpack.c.b16 %v4245, %v4241
    %v4294 = vpack.c.b16 %v4246, %v4242
    %v4295 = vpack.c.b16 %v4251, %v4247
    %v4296 = vpack.c.b16 %v4252, %v4248
    %v4297 = vpack.c.b16 %v4253, %v4249
    %v4298 = vpack.c.b16 %v4254, %v4250
    %v4299 = vpack.c.b16 %v4259, %v4255
    %v4300 = vpack.c.b16 %v4260, %v4256
    %v4301 = vpack.c.b16 %v4261, %v4257
    %v4302 = vpack.c.b16 %v4262, %v4258
    %v4303 = vpack.c.b16 %v4267, %v4263
    %v4304 = vpack.c.b16 %v4268, %v4264
    %v4305 = vpack.c.b16 %v4269, %v4265
    %v4306 = vpack.c.b16 %v4270, %v4266
    %v4307 = vpack.c.b16 %v4275, %v4271
    %v4308 = vpack.c.b16 %v4276, %v4272
    %v4309 = vpack.c.b16 %v4277, %v4273
    %v4310 = vpack.c.b16 %v4278, %v4274
    %4343 = vmatpush.bf16.msra.mxu0 %v4307
    %4344 = vmatpush.bf16.msra.mxu0 %v4303
    %4345 = vmatpush.bf16.msra.mxu0 %v4299
    %4346 = vmatpush.bf16.msra.mxu0 %v4295
    %4347 = vmatpush.bf16.msra.mxu0 %v4291
    %4348 = vmatpush.bf16.msra.mxu0 %v4287
    %4349 = vmatpush.bf16.msra.mxu0 %v4283
    %4350 = vmatpush.bf16.msra.mxu0 %v4279
    %4351 = vmatmul.bf16.gmra.mxu0 %v3906
    %v4352 = vpop.f32.mrf.mxu0
    %v4353 = vadd.f32 %v4141, %v4352
    %v4354 = vpop.f32.mrf.mxu0
    %4355 = vdwg.mxu0
    %4356 = vmatpush.bf16.msra.mxu0 %v4308
    %4357 = vmatpush.bf16.msra.mxu0 %v4304
    %4358 = vmatpush.bf16.msra.mxu0 %v4300
    %4359 = vmatpush.bf16.msra.mxu0 %v4296
    %4360 = vmatpush.bf16.msra.mxu0 %v4292
    %4361 = vmatpush.bf16.msra.mxu0 %v4288
    %4362 = vmatpush.bf16.msra.mxu0 %v4284
    %4363 = vmatpush.bf16.msra.mxu0 %v4280
    %4364 = vmatmul.bf16.gmra.mxu0 %v3906
    %v4365 = vpop.f32.mrf.mxu0
    %v4366 = vadd.f32 %v4154, %v4365
    %v4367 = vpop.f32.mrf.mxu0
    %4368 = vdwg.mxu0
    %4369 = vmatpush.bf16.msra.mxu0 %v4309
    %4370 = vmatpush.bf16.msra.mxu0 %v4305
    %4371 = vmatpush.bf16.msra.mxu0 %v4301
    %4372 = vmatpush.bf16.msra.mxu0 %v4297
    %4373 = vmatpush.bf16.msra.mxu0 %v4293
    %4374 = vmatpush.bf16.msra.mxu0 %v4289
    %4375 = vmatpush.bf16.msra.mxu0 %v4285
    %4376 = vmatpush.bf16.msra.mxu0 %v4281
    %4377 = vmatmul.bf16.gmra.mxu0 %v3906
    %v4378 = vpop.f32.mrf.mxu0
    %v4379 = vadd.f32 %v4167, %v4378
    %v4380 = vpop.f32.mrf.mxu0
    %4381 = vdwg.mxu0
    %4382 = vmatpush.bf16.msra.mxu0 %v4310
    %4383 = vmatpush.bf16.msra.mxu0 %v4306
    %4384 = vmatpush.bf16.msra.mxu0 %v4302
    %4385 = vmatpush.bf16.msra.mxu0 %v4298
    %4386 = vmatpush.bf16.msra.mxu0 %v4294
    %4387 = vmatpush.bf16.msra.mxu0 %v4290
    %4388 = vmatpush.bf16.msra.mxu0 %v4286
    %4389 = vmatpush.bf16.msra.mxu0 %v4282
    %4390 = vmatmul.bf16.gmra.mxu0 %v3906
    %v4391 = vpop.f32.mrf.mxu0
    %v4392 = vadd.f32 %v4180, %v4391
    %v4393 = vpop.f32.mrf.mxu0
    %4394 = vdwg.mxu0
    %v4395 = vadd.f32 %v4353, %v67
    %v4396 = vadd.f32 %v4366, %v68
    %v4397 = vadd.f32 %v4379, %v69
    %v4398 = vadd.f32 %v4392, %v70
    %v4399 = vxor.u32 %v4395, 2147483648
    %v4400 = vmul.f32 %v4399, 1.442695
    %v4401 = vpow.pop %v4400
    %v4402 = vadd.f32 %v4401, 1.0
    %v4403 = vrcp.pop %v4402
    %v4404 = vmul.f32 %v4402, %v4403
    %v4405 = vsub.f32 1.0, %v4404
    %v4406 = vmul.f32 %v4403, %v4405
    %v4407 = vadd.f32 %v4403, %v4406
    %vm4408 = vweird.f32 %v4402
    %vm4409 = vweird.f32 %v4403
    %vm4410 = vmor %vm4408, %vm4409
    %v4411 = vsel %vm4410, %v4403, %v4407
    %v4412 = vand.u32 2147483647, %v4402
    %vm4413 = vcmp.eq.f32.partialorder %v4412, 8.507059e+37
    %v4414 = vand.u32 %v4402, 2147483648
    %v4415 = vor.u32 1.1754944e-38, %v4414
    %v4416 = vsel %vm4413, %v4415, %v4411
    %v4417 = vmul.f32 1.0, %v4416
    %v4418 = vxor.u32 %v4396, 2147483648
    %v4419 = vmul.f32 %v4418, 1.442695
    %v4420 = vpow.pop %v4419
    %v4421 = vadd.f32 %v4420, 1.0
    %v4422 = vrcp.pop %v4421
    %v4423 = vmul.f32 %v4421, %v4422
    %v4424 = vsub.f32 1.0, %v4423
    %v4425 = vmul.f32 %v4422, %v4424
    %v4426 = vadd.f32 %v4422, %v4425
    %vm4427 = vweird.f32 %v4421
    %vm4428 = vweird.f32 %v4422
    %vm4429 = vmor %vm4427, %vm4428
    %v4430 = vsel %vm4429, %v4422, %v4426
    %v4431 = vand.u32 2147483647, %v4421
    %vm4432 = vcmp.eq.f32.partialorder %v4431, 8.507059e+37
    %v4433 = vand.u32 %v4421, 2147483648
    %v4434 = vor.u32 1.1754944e-38, %v4433
    %v4435 = vsel %vm4432, %v4434, %v4430
    %v4436 = vmul.f32 1.0, %v4435
    %v4437 = vtanh.pop %v4397
    %v4438 = vxor.u32 %v4398, 2147483648
    %v4439 = vmul.f32 %v4438, 1.442695
    %v4440 = vpow.pop %v4439
    %v4441 = vadd.f32 %v4440, 1.0
    %v4442 = vrcp.pop %v4441
    %v4443 = vmul.f32 %v4441, %v4442
    %v4444 = vsub.f32 1.0, %v4443
    %v4445 = vmul.f32 %v4442, %v4444
    %v4446 = vadd.f32 %v4442, %v4445
    %vm4447 = vweird.f32 %v4441
    %vm4448 = vweird.f32 %v4442
    %vm4449 = vmor %vm4447, %vm4448
    %v4450 = vsel %vm4449, %v4442, %v4446
    %v4451 = vand.u32 2147483647, %v4441
    %vm4452 = vcmp.eq.f32.partialorder %v4451, 8.507059e+37
    %v4453 = vand.u32 %v4441, 2147483648
    %v4454 = vor.u32 1.1754944e-38, %v4453
    %v4455 = vsel %vm4452, %v4454, %v4450
    %v4456 = vmul.f32 1.0, %v4455
    %v4457 = vmul.f32 %v4436, %v3712
    %v4458 = vmul.f32 %v4417, %v4437
    %v4459 = vadd.f32 %v4457, %v4458
    %v4460 = vtanh.pop %v4459
    %v4461 = vmul.f32 %v4456, %v4460
    %v4462 = vpack.c.bf16 %v4461, %v4461
    %v4463 = vld [vmem:[%s8] sm:$0xf]
    %v4464 = vld [vmem:[%s8 + $0x4] sm:$0xf]
    %v4465 = vld [vmem:[%s8 + $0x8] sm:$0xf]
    %v4466 = vld [vmem:[%s8 + $0xc] sm:$0xf]
    %v4467 = vld [vmem:[%s8 + $0x10] sm:$0xf]
    %v4468 = vld [vmem:[%s8 + $0x14] sm:$0xf]
    %v4469 = vld [vmem:[%s8 + $0x18] sm:$0xf]
    %v4470 = vld [vmem:[%s8 + $0x1c] sm:$0xf]
    %v4471 = vld [vmem:[%s8 + $0x20] sm:$0xf]
    %v4472 = vld [vmem:[%s8 + $0x24] sm:$0xf]
    %v4473 = vld [vmem:[%s8 + $0x28] sm:$0xf]
    %v4474 = vld [vmem:[%s8 + $0x2c] sm:$0xf]
    %v4475 = vld [vmem:[%s8 + $0x30] sm:$0xf]
    %v4476 = vld [vmem:[%s8 + $0x34] sm:$0xf]
    %v4477 = vld [vmem:[%s8 + $0x38] sm:$0xf]
    %v4478 = vld [vmem:[%s8 + $0x3c] sm:$0xf]
    %v4495 = vunpack.c.l.b16 %v4463
    %v4496 = vunpack.c.l.b16 %v4464
    %v4497 = vunpack.c.l.b16 %v4465
    %v4498 = vunpack.c.l.b16 %v4466
    %v4499 = vunpack.c.l.b16 %v4467
    %v4500 = vunpack.c.l.b16 %v4468
    %v4501 = vunpack.c.l.b16 %v4469
    %v4502 = vunpack.c.l.b16 %v4470
    %v4503 = vunpack.c.l.b16 %v4471
    %v4504 = vunpack.c.l.b16 %v4472
    %v4505 = vunpack.c.l.b16 %v4473
    %v4506 = vunpack.c.l.b16 %v4474
    %v4507 = vunpack.c.l.b16 %v4475
    %v4508 = vunpack.c.l.b16 %v4476
    %v4509 = vunpack.c.l.b16 %v4477
    %v4510 = vunpack.c.l.b16 %v4478
    %v4511 = vpack.c.b16 %v4496, %v4495
    %v4512 = vpack.c.b16 %v4498, %v4497
    %v4513 = vpack.c.b16 %v4500, %v4499
    %v4514 = vpack.c.b16 %v4502, %v4501
    %v4515 = vpack.c.b16 %v4504, %v4503
    %v4516 = vpack.c.b16 %v4506, %v4505
    %v4517 = vpack.c.b16 %v4508, %v4507
    %v4518 = vpack.c.b16 %v4510, %v4509
    %4527 = vmatpush.bf16.msra.mxu0 %v4518
    %4528 = vmatpush.bf16.msra.mxu0 %v4517
    %4529 = vmatpush.bf16.msra.mxu0 %v4516
    %4530 = vmatpush.bf16.msra.mxu0 %v4515
    %4531 = vmatpush.bf16.msra.mxu0 %v4514
    %4532 = vmatpush.bf16.msra.mxu0 %v4513
    %4533 = vmatpush.bf16.msra.mxu0 %v4512
    %4534 = vmatpush.bf16.msra.mxu0 %v4511
    %4535 = vmatmul.bf16.gmra.mxu0 %v4462
    %v4536 = vpop.f32.mrf.mxu0
    %v4537 = vadd.f32 %v77, %v4536
    %v4538 = vpop.f32.mrf.mxu0
    %4539 = vdwg.mxu0
    %s4540 = scalar_lea.vmem %s10, 40
    %4541 = vst [vmem:[%s4540] sm:$0xff] %v4537
    %v4542 = vsel %vm81, %v4537, -inf
    %4543 = vmax.xlane.f32.xlu0 %v4542
    %v4544 = vpop.xlane.xlu0 %4543
    %vm4545 = vcmp.eq.f32.partialorder %v4542, %v4544
    %v4546 = vsel %vm4545, %v80, 128
    %v4547 = vand.u32 %v4546, 65535
    %v4548 = vshra.s32 %v4546, 16
    %v4549 = vcvt.s32.f32 %v4547
    %v4550 = vcvt.s32.f32 %v4548
    %4551 = vmin.xlane.f32.xlu0 %v4550
    %v4552 = vpop.xlane.xlu0 %4551
    %vm4553 = vcmp.eq.f32.partialorder %v4550, %v4552
    %v4554 = vsel %vm4553, %v4549, inf
    %4555 = vmin.xlane.f32.xlu0 %v4554
    %v4556 = vpop.xlane.xlu0 %4555
    %v4557 = vcvt.f32.s32 %v4556
    %v4558 = vcvt.f32.s32 %v4552
    %v4559 = vshll.u32 %v4558, 16
    %v4560 = vadd.s32 %v4559, %v4557
    %vm4561 = vcmp.eq.s32.totalorder %v80, %v4560
    %v4562 = vsel %vm4561, 1, 0
    %v4563 = vcvt.s32.f32 %v4562
    %v4564 = vpack.c.bf16 %v4563, %v4563
    %s4565 = scalar_lea.vmem %s1, 24
    %v4566 = vld [vmem:[%s4565] sm:$0xf]
    %s4567 = sld [smem:[#allocation2 + $0x6]]
    %p4568 = scmp.gt.s32.totalorder %s4567, 0
    // Predicated region
    $region98: #{forward.3} parent=1 // pred_check
      %p4569 = pneg %p4568
    $region99: #{forward.3} parent=1 // pred_check_branch
      %4571 = sbr.rel (%p4569) target = $region101
    $region100: #{forward.3} parent=1 // pred_region
      _
    $region101: #{forward.3} parent=1 // pred_fallthru
      _
    %p4572 = pneg %p4568
    // Predicated region
    $region102: #{forward.3} parent=1 // pred_check
      _
    $region103: #{forward.3} parent=1 // pred_check_branch
      %4574 = sbr.rel (%p4568) target = $region105
    $region104: #{forward.3} parent=1 // pred_region
      %v4575 = vld [vmem:[%s4] sm:$0xf]
      %v4576 = vld [vmem:[%s4 + $0x4] sm:$0xf]
      %v4577 = vld [vmem:[%s4 + $0x8] sm:$0xf]
      %v4578 = vld [vmem:[%s4 + $0xc] sm:$0xf]
      %v4579 = vld [vmem:[%s4 + $0x10] sm:$0xf]
      %v4580 = vld [vmem:[%s4 + $0x14] sm:$0xf]
      %v4581 = vld [vmem:[%s4 + $0x18] sm:$0xf]
      %v4582 = vld [vmem:[%s4 + $0x1c] sm:$0xf]
      %v4583 = vld [vmem:[%s4 + $0x20] sm:$0xf]
      %v4584 = vld [vmem:[%s4 + $0x24] sm:$0xf]
      %v4585 = vld [vmem:[%s4 + $0x28] sm:$0xf]
      %v4586 = vld [vmem:[%s4 + $0x2c] sm:$0xf]
      %v4587 = vld [vmem:[%s4 + $0x30] sm:$0xf]
      %v4588 = vld [vmem:[%s4 + $0x34] sm:$0xf]
      %v4589 = vld [vmem:[%s4 + $0x38] sm:$0xf]
      %v4590 = vld [vmem:[%s4 + $0x3c] sm:$0xf]
      %v4607 = vunpack.c.l.b16 %v4575
      %v4608 = vunpack.c.l.b16 %v4576
      %v4609 = vunpack.c.l.b16 %v4577
      %v4610 = vunpack.c.l.b16 %v4578
      %v4611 = vunpack.c.l.b16 %v4579
      %v4612 = vunpack.c.l.b16 %v4580
      %v4613 = vunpack.c.l.b16 %v4581
      %v4614 = vunpack.c.l.b16 %v4582
      %v4615 = vunpack.c.l.b16 %v4583
      %v4616 = vunpack.c.l.b16 %v4584
      %v4617 = vunpack.c.l.b16 %v4585
      %v4618 = vunpack.c.l.b16 %v4586
      %v4619 = vunpack.c.l.b16 %v4587
      %v4620 = vunpack.c.l.b16 %v4588
      %v4621 = vunpack.c.l.b16 %v4589
      %v4622 = vunpack.c.l.b16 %v4590
      %v4623 = vpack.c.b16 %v4608, %v4607
      %v4624 = vpack.c.b16 %v4610, %v4609
      %v4625 = vpack.c.b16 %v4612, %v4611
      %v4626 = vpack.c.b16 %v4614, %v4613
      %v4627 = vpack.c.b16 %v4616, %v4615
      %v4628 = vpack.c.b16 %v4618, %v4617
      %v4629 = vpack.c.b16 %v4620, %v4619
      %v4630 = vpack.c.b16 %v4622, %v4621
      %4639 = vmatpush.bf16.msra.mxu0 %v4630
      %4640 = vmatpush.bf16.msra.mxu0 %v4629
      %4641 = vmatpush.bf16.msra.mxu0 %v4628
      %4642 = vmatpush.bf16.msra.mxu0 %v4627
      %4643 = vmatpush.bf16.msra.mxu0 %v4626
      %4644 = vmatpush.bf16.msra.mxu0 %v4625
      %4645 = vmatpush.bf16.msra.mxu0 %v4624
      %4646 = vmatpush.bf16.msra.mxu0 %v4623
      %4647 = vmatmul.bf16.gmra.mxu0 %v4564
      %v4648 = vpop.f32.mrf.mxu0
      %v4649 = vadd.f32 0.0, %v4648
      %v4650 = vpop.f32.mrf.mxu0
      %4651 = vdwg.mxu0
      %v4652 = vpack.c.bf16 %v4649, %v4649
    $region105: #{forward.3} parent=1 // pred_fallthru
      %v4653 = vphi %v4566, %v4652
    %v4654 = vld [vmem:[#allocation5] sm:$0xff]
    %v4655 = vld [vmem:[#allocation5 + $0x8] sm:$0xff]
    %v4656 = vld [vmem:[#allocation5 + $0x10] sm:$0xff]
    %v4657 = vld [vmem:[#allocation5 + $0x18] sm:$0xff]
    %v4658 = vld [vmem:[#allocation5 + $0x20] sm:$0xff]
    %v4659 = vld [vmem:[#allocation5 + $0x28] sm:$0xff]
    %v4660 = vld [vmem:[#allocation5 + $0x30] sm:$0xff]
    %v4661 = vld [vmem:[#allocation5 + $0x38] sm:$0xff]
    %v4662 = vld [vmem:[#allocation5 + $0x40] sm:$0xff]
    %v4663 = vld [vmem:[#allocation5 + $0x48] sm:$0xff]
    %v4664 = vld [vmem:[#allocation5 + $0x50] sm:$0xff]
    %v4665 = vld [vmem:[#allocation5 + $0x58] sm:$0xff]
    %v4666 = vld [vmem:[#allocation5 + $0x60] sm:$0xff]
    %v4667 = vld [vmem:[#allocation5 + $0x68] sm:$0xff]
    %v4668 = vld [vmem:[#allocation5 + $0x70] sm:$0xff]
    %v4669 = vld [vmem:[#allocation5 + $0x78] sm:$0xff]
    %v4670 = vld [vmem:[#allocation5 + $0x80] sm:$0xff]
    %v4671 = vld [vmem:[#allocation5 + $0x88] sm:$0xff]
    %v4672 = vld [vmem:[#allocation5 + $0x90] sm:$0xff]
    %v4673 = vld [vmem:[#allocation5 + $0x98] sm:$0xff]
    %v4674 = vld [vmem:[#allocation5 + $0xa0] sm:$0xff]
    %v4675 = vld [vmem:[#allocation5 + $0xa8] sm:$0xff]
    %v4676 = vld [vmem:[#allocation5 + $0xb0] sm:$0xff]
    %v4677 = vld [vmem:[#allocation5 + $0xb8] sm:$0xff]
    %v4678 = vld [vmem:[#allocation5 + $0xc0] sm:$0xff]
    %v4679 = vld [vmem:[#allocation5 + $0xc8] sm:$0xff]
    %v4680 = vld [vmem:[#allocation5 + $0xd0] sm:$0xff]
    %v4681 = vld [vmem:[#allocation5 + $0xd8] sm:$0xff]
    %v4682 = vld [vmem:[#allocation5 + $0xe0] sm:$0xff]
    %v4683 = vld [vmem:[#allocation5 + $0xe8] sm:$0xff]
    %v4684 = vld [vmem:[#allocation5 + $0xf0] sm:$0xff]
    %v4685 = vld [vmem:[#allocation5 + $0xf8] sm:$0xff]
    %v4686 = vld [vmem:[%s6] sm:$0xff]
    %v4687 = vld [vmem:[%s6 + $0x8] sm:$0xff]
    %v4688 = vld [vmem:[%s6 + $0x10] sm:$0xff]
    %v4689 = vld [vmem:[%s6 + $0x18] sm:$0xff]
    %v4690 = vld [vmem:[%s6 + $0x20] sm:$0xff]
    %v4691 = vld [vmem:[%s6 + $0x28] sm:$0xff]
    %v4692 = vld [vmem:[%s6 + $0x30] sm:$0xff]
    %v4693 = vld [vmem:[%s6 + $0x38] sm:$0xff]
    %v4694 = vld [vmem:[%s6 + $0x40] sm:$0xff]
    %v4695 = vld [vmem:[%s6 + $0x48] sm:$0xff]
    %v4696 = vld [vmem:[%s6 + $0x50] sm:$0xff]
    %v4697 = vld [vmem:[%s6 + $0x58] sm:$0xff]
    %v4698 = vld [vmem:[%s6 + $0x60] sm:$0xff]
    %v4699 = vld [vmem:[%s6 + $0x68] sm:$0xff]
    %v4700 = vld [vmem:[%s6 + $0x70] sm:$0xff]
    %v4701 = vld [vmem:[%s6 + $0x78] sm:$0xff]
    %v4702 = vld [vmem:[%s6 + $0x80] sm:$0xff]
    %v4703 = vld [vmem:[%s6 + $0x88] sm:$0xff]
    %v4704 = vld [vmem:[%s6 + $0x90] sm:$0xff]
    %v4705 = vld [vmem:[%s6 + $0x98] sm:$0xff]
    %v4706 = vld [vmem:[%s6 + $0xa0] sm:$0xff]
    %v4707 = vld [vmem:[%s6 + $0xa8] sm:$0xff]
    %v4708 = vld [vmem:[%s6 + $0xb0] sm:$0xff]
    %v4709 = vld [vmem:[%s6 + $0xb8] sm:$0xff]
    %v4710 = vld [vmem:[%s6 + $0xc0] sm:$0xff]
    %v4711 = vld [vmem:[%s6 + $0xc8] sm:$0xff]
    %v4712 = vld [vmem:[%s6 + $0xd0] sm:$0xff]
    %v4713 = vld [vmem:[%s6 + $0xd8] sm:$0xff]
    %v4714 = vld [vmem:[%s6 + $0xe0] sm:$0xff]
    %v4715 = vld [vmem:[%s6 + $0xe8] sm:$0xff]
    %v4716 = vld [vmem:[%s6 + $0xf0] sm:$0xff]
    %v4717 = vld [vmem:[%s6 + $0xf8] sm:$0xff]
    %v4750 = vunpack.c.l.b16 %v4686
    %v4751 = vunpack.c.h.b16 %v4686
    %v4752 = vunpack.c.l.b16 %v4687
    %v4753 = vunpack.c.h.b16 %v4687
    %v4754 = vunpack.c.l.b16 %v4688
    %v4755 = vunpack.c.h.b16 %v4688
    %v4756 = vunpack.c.l.b16 %v4689
    %v4757 = vunpack.c.h.b16 %v4689
    %v4758 = vunpack.c.l.b16 %v4690
    %v4759 = vunpack.c.h.b16 %v4690
    %v4760 = vunpack.c.l.b16 %v4691
    %v4761 = vunpack.c.h.b16 %v4691
    %v4762 = vunpack.c.l.b16 %v4692
    %v4763 = vunpack.c.h.b16 %v4692
    %v4764 = vunpack.c.l.b16 %v4693
    %v4765 = vunpack.c.h.b16 %v4693
    %v4766 = vunpack.c.l.b16 %v4694
    %v4767 = vunpack.c.h.b16 %v4694
    %v4768 = vunpack.c.l.b16 %v4695
    %v4769 = vunpack.c.h.b16 %v4695
    %v4770 = vunpack.c.l.b16 %v4696
    %v4771 = vunpack.c.h.b16 %v4696
    %v4772 = vunpack.c.l.b16 %v4697
    %v4773 = vunpack.c.h.b16 %v4697
    %v4774 = vunpack.c.l.b16 %v4698
    %v4775 = vunpack.c.h.b16 %v4698
    %v4776 = vunpack.c.l.b16 %v4699
    %v4777 = vunpack.c.h.b16 %v4699
    %v4778 = vunpack.c.l.b16 %v4700
    %v4779 = vunpack.c.h.b16 %v4700
    %v4780 = vunpack.c.l.b16 %v4701
    %v4781 = vunpack.c.h.b16 %v4701
    %v4782 = vunpack.c.l.b16 %v4702
    %v4783 = vunpack.c.h.b16 %v4702
    %v4784 = vunpack.c.l.b16 %v4703
    %v4785 = vunpack.c.h.b16 %v4703
    %v4786 = vunpack.c.l.b16 %v4704
    %v4787 = vunpack.c.h.b16 %v4704
    %v4788 = vunpack.c.l.b16 %v4705
    %v4789 = vunpack.c.h.b16 %v4705
    %v4790 = vunpack.c.l.b16 %v4706
    %v4791 = vunpack.c.h.b16 %v4706
    %v4792 = vunpack.c.l.b16 %v4707
    %v4793 = vunpack.c.h.b16 %v4707
    %v4794 = vunpack.c.l.b16 %v4708
    %v4795 = vunpack.c.h.b16 %v4708
    %v4796 = vunpack.c.l.b16 %v4709
    %v4797 = vunpack.c.h.b16 %v4709
    %v4798 = vunpack.c.l.b16 %v4710
    %v4799 = vunpack.c.h.b16 %v4710
    %v4800 = vunpack.c.l.b16 %v4711
    %v4801 = vunpack.c.h.b16 %v4711
    %v4802 = vunpack.c.l.b16 %v4712
    %v4803 = vunpack.c.h.b16 %v4712
    %v4804 = vunpack.c.l.b16 %v4713
    %v4805 = vunpack.c.h.b16 %v4713
    %v4806 = vunpack.c.l.b16 %v4714
    %v4807 = vunpack.c.h.b16 %v4714
    %v4808 = vunpack.c.l.b16 %v4715
    %v4809 = vunpack.c.h.b16 %v4715
    %v4810 = vunpack.c.l.b16 %v4716
    %v4811 = vunpack.c.h.b16 %v4716
    %v4812 = vunpack.c.l.b16 %v4717
    %v4813 = vunpack.c.h.b16 %v4717
    %v4814 = vpack.c.b16 %v4754, %v4750
    %v4815 = vpack.c.b16 %v4755, %v4751
    %v4816 = vpack.c.b16 %v4756, %v4752
    %v4817 = vpack.c.b16 %v4757, %v4753
    %v4818 = vpack.c.b16 %v4762, %v4758
    %v4819 = vpack.c.b16 %v4763, %v4759
    %v4820 = vpack.c.b16 %v4764, %v4760
    %v4821 = vpack.c.b16 %v4765, %v4761
    %v4822 = vpack.c.b16 %v4770, %v4766
    %v4823 = vpack.c.b16 %v4771, %v4767
    %v4824 = vpack.c.b16 %v4772, %v4768
    %v4825 = vpack.c.b16 %v4773, %v4769
    %v4826 = vpack.c.b16 %v4778, %v4774
    %v4827 = vpack.c.b16 %v4779, %v4775
    %v4828 = vpack.c.b16 %v4780, %v4776
    %v4829 = vpack.c.b16 %v4781, %v4777
    %v4830 = vpack.c.b16 %v4786, %v4782
    %v4831 = vpack.c.b16 %v4787, %v4783
    %v4832 = vpack.c.b16 %v4788, %v4784
    %v4833 = vpack.c.b16 %v4789, %v4785
    %v4834 = vpack.c.b16 %v4794, %v4790
    %v4835 = vpack.c.b16 %v4795, %v4791
    %v4836 = vpack.c.b16 %v4796, %v4792
    %v4837 = vpack.c.b16 %v4797, %v4793
    %v4838 = vpack.c.b16 %v4802, %v4798
    %v4839 = vpack.c.b16 %v4803, %v4799
    %v4840 = vpack.c.b16 %v4804, %v4800
    %v4841 = vpack.c.b16 %v4805, %v4801
    %v4842 = vpack.c.b16 %v4810, %v4806
    %v4843 = vpack.c.b16 %v4811, %v4807
    %v4844 = vpack.c.b16 %v4812, %v4808
    %v4845 = vpack.c.b16 %v4813, %v4809
    %4878 = vmatpush.bf16.msra.mxu0 %v4842
    %4879 = vmatpush.bf16.msra.mxu0 %v4838
    %4880 = vmatpush.bf16.msra.mxu0 %v4834
    %4881 = vmatpush.bf16.msra.mxu0 %v4830
    %4882 = vmatpush.bf16.msra.mxu0 %v4826
    %4883 = vmatpush.bf16.msra.mxu0 %v4822
    %4884 = vmatpush.bf16.msra.mxu0 %v4818
    %4885 = vmatpush.bf16.msra.mxu0 %v4814
    %4886 = vmatmul.bf16.gmra.mxu0 %v4462
    %v4887 = vpop.f32.mrf.mxu0
    %v4888 = vadd.f32 0.0, %v4887
    %v4889 = vpop.f32.mrf.mxu0
    %4890 = vdwg.mxu0
    %4891 = vmatpush.bf16.msra.mxu0 %v4843
    %4892 = vmatpush.bf16.msra.mxu0 %v4839
    %4893 = vmatpush.bf16.msra.mxu0 %v4835
    %4894 = vmatpush.bf16.msra.mxu0 %v4831
    %4895 = vmatpush.bf16.msra.mxu0 %v4827
    %4896 = vmatpush.bf16.msra.mxu0 %v4823
    %4897 = vmatpush.bf16.msra.mxu0 %v4819
    %4898 = vmatpush.bf16.msra.mxu0 %v4815
    %4899 = vmatmul.bf16.gmra.mxu0 %v4462
    %v4900 = vpop.f32.mrf.mxu0
    %v4901 = vadd.f32 0.0, %v4900
    %v4902 = vpop.f32.mrf.mxu0
    %4903 = vdwg.mxu0
    %4904 = vmatpush.bf16.msra.mxu0 %v4844
    %4905 = vmatpush.bf16.msra.mxu0 %v4840
    %4906 = vmatpush.bf16.msra.mxu0 %v4836
    %4907 = vmatpush.bf16.msra.mxu0 %v4832
    %4908 = vmatpush.bf16.msra.mxu0 %v4828
    %4909 = vmatpush.bf16.msra.mxu0 %v4824
    %4910 = vmatpush.bf16.msra.mxu0 %v4820
    %4911 = vmatpush.bf16.msra.mxu0 %v4816
    %4912 = vmatmul.bf16.gmra.mxu0 %v4462
    %v4913 = vpop.f32.mrf.mxu0
    %v4914 = vadd.f32 0.0, %v4913
    %v4915 = vpop.f32.mrf.mxu0
    %4916 = vdwg.mxu0
    %4917 = vmatpush.bf16.msra.mxu0 %v4845
    %4918 = vmatpush.bf16.msra.mxu0 %v4841
    %4919 = vmatpush.bf16.msra.mxu0 %v4837
    %4920 = vmatpush.bf16.msra.mxu0 %v4833
    %4921 = vmatpush.bf16.msra.mxu0 %v4829
    %4922 = vmatpush.bf16.msra.mxu0 %v4825
    %4923 = vmatpush.bf16.msra.mxu0 %v4821
    %4924 = vmatpush.bf16.msra.mxu0 %v4817
    %4925 = vmatmul.bf16.gmra.mxu0 %v4462
    %v4926 = vpop.f32.mrf.mxu0
    %v4927 = vadd.f32 0.0, %v4926
    %v4928 = vpop.f32.mrf.mxu0
    %4929 = vdwg.mxu0
    %v4962 = vunpack.c.l.b16 %v4654
    %v4963 = vunpack.c.h.b16 %v4654
    %v4964 = vunpack.c.l.b16 %v4655
    %v4965 = vunpack.c.h.b16 %v4655
    %v4966 = vunpack.c.l.b16 %v4656
    %v4967 = vunpack.c.h.b16 %v4656
    %v4968 = vunpack.c.l.b16 %v4657
    %v4969 = vunpack.c.h.b16 %v4657
    %v4970 = vunpack.c.l.b16 %v4658
    %v4971 = vunpack.c.h.b16 %v4658
    %v4972 = vunpack.c.l.b16 %v4659
    %v4973 = vunpack.c.h.b16 %v4659
    %v4974 = vunpack.c.l.b16 %v4660
    %v4975 = vunpack.c.h.b16 %v4660
    %v4976 = vunpack.c.l.b16 %v4661
    %v4977 = vunpack.c.h.b16 %v4661
    %v4978 = vunpack.c.l.b16 %v4662
    %v4979 = vunpack.c.h.b16 %v4662
    %v4980 = vunpack.c.l.b16 %v4663
    %v4981 = vunpack.c.h.b16 %v4663
    %v4982 = vunpack.c.l.b16 %v4664
    %v4983 = vunpack.c.h.b16 %v4664
    %v4984 = vunpack.c.l.b16 %v4665
    %v4985 = vunpack.c.h.b16 %v4665
    %v4986 = vunpack.c.l.b16 %v4666
    %v4987 = vunpack.c.h.b16 %v4666
    %v4988 = vunpack.c.l.b16 %v4667
    %v4989 = vunpack.c.h.b16 %v4667
    %v4990 = vunpack.c.l.b16 %v4668
    %v4991 = vunpack.c.h.b16 %v4668
    %v4992 = vunpack.c.l.b16 %v4669
    %v4993 = vunpack.c.h.b16 %v4669
    %v4994 = vunpack.c.l.b16 %v4670
    %v4995 = vunpack.c.h.b16 %v4670
    %v4996 = vunpack.c.l.b16 %v4671
    %v4997 = vunpack.c.h.b16 %v4671
    %v4998 = vunpack.c.l.b16 %v4672
    %v4999 = vunpack.c.h.b16 %v4672
    %v5000 = vunpack.c.l.b16 %v4673
    %v5001 = vunpack.c.h.b16 %v4673
    %v5002 = vunpack.c.l.b16 %v4674
    %v5003 = vunpack.c.h.b16 %v4674
    %v5004 = vunpack.c.l.b16 %v4675
    %v5005 = vunpack.c.h.b16 %v4675
    %v5006 = vunpack.c.l.b16 %v4676
    %v5007 = vunpack.c.h.b16 %v4676
    %v5008 = vunpack.c.l.b16 %v4677
    %v5009 = vunpack.c.h.b16 %v4677
    %v5010 = vunpack.c.l.b16 %v4678
    %v5011 = vunpack.c.h.b16 %v4678
    %v5012 = vunpack.c.l.b16 %v4679
    %v5013 = vunpack.c.h.b16 %v4679
    %v5014 = vunpack.c.l.b16 %v4680
    %v5015 = vunpack.c.h.b16 %v4680
    %v5016 = vunpack.c.l.b16 %v4681
    %v5017 = vunpack.c.h.b16 %v4681
    %v5018 = vunpack.c.l.b16 %v4682
    %v5019 = vunpack.c.h.b16 %v4682
    %v5020 = vunpack.c.l.b16 %v4683
    %v5021 = vunpack.c.h.b16 %v4683
    %v5022 = vunpack.c.l.b16 %v4684
    %v5023 = vunpack.c.h.b16 %v4684
    %v5024 = vunpack.c.l.b16 %v4685
    %v5025 = vunpack.c.h.b16 %v4685
    %v5026 = vpack.c.b16 %v4966, %v4962
    %v5027 = vpack.c.b16 %v4967, %v4963
    %v5028 = vpack.c.b16 %v4968, %v4964
    %v5029 = vpack.c.b16 %v4969, %v4965
    %v5030 = vpack.c.b16 %v4974, %v4970
    %v5031 = vpack.c.b16 %v4975, %v4971
    %v5032 = vpack.c.b16 %v4976, %v4972
    %v5033 = vpack.c.b16 %v4977, %v4973
    %v5034 = vpack.c.b16 %v4982, %v4978
    %v5035 = vpack.c.b16 %v4983, %v4979
    %v5036 = vpack.c.b16 %v4984, %v4980
    %v5037 = vpack.c.b16 %v4985, %v4981
    %v5038 = vpack.c.b16 %v4990, %v4986
    %v5039 = vpack.c.b16 %v4991, %v4987
    %v5040 = vpack.c.b16 %v4992, %v4988
    %v5041 = vpack.c.b16 %v4993, %v4989
    %v5042 = vpack.c.b16 %v4998, %v4994
    %v5043 = vpack.c.b16 %v4999, %v4995
    %v5044 = vpack.c.b16 %v5000, %v4996
    %v5045 = vpack.c.b16 %v5001, %v4997
    %v5046 = vpack.c.b16 %v5006, %v5002
    %v5047 = vpack.c.b16 %v5007, %v5003
    %v5048 = vpack.c.b16 %v5008, %v5004
    %v5049 = vpack.c.b16 %v5009, %v5005
    %v5050 = vpack.c.b16 %v5014, %v5010
    %v5051 = vpack.c.b16 %v5015, %v5011
    %v5052 = vpack.c.b16 %v5016, %v5012
    %v5053 = vpack.c.b16 %v5017, %v5013
    %v5054 = vpack.c.b16 %v5022, %v5018
    %v5055 = vpack.c.b16 %v5023, %v5019
    %v5056 = vpack.c.b16 %v5024, %v5020
    %v5057 = vpack.c.b16 %v5025, %v5021
    %5090 = vmatpush.bf16.msra.mxu0 %v5054
    %5091 = vmatpush.bf16.msra.mxu0 %v5050
    %5092 = vmatpush.bf16.msra.mxu0 %v5046
    %5093 = vmatpush.bf16.msra.mxu0 %v5042
    %5094 = vmatpush.bf16.msra.mxu0 %v5038
    %5095 = vmatpush.bf16.msra.mxu0 %v5034
    %5096 = vmatpush.bf16.msra.mxu0 %v5030
    %5097 = vmatpush.bf16.msra.mxu0 %v5026
    %5098 = vmatmul.bf16.gmra.mxu0 %v4653
    %v5099 = vpop.f32.mrf.mxu0
    %v5100 = vadd.f32 %v4888, %v5099
    %v5101 = vpop.f32.mrf.mxu0
    %5102 = vdwg.mxu0
    %5103 = vmatpush.bf16.msra.mxu0 %v5055
    %5104 = vmatpush.bf16.msra.mxu0 %v5051
    %5105 = vmatpush.bf16.msra.mxu0 %v5047
    %5106 = vmatpush.bf16.msra.mxu0 %v5043
    %5107 = vmatpush.bf16.msra.mxu0 %v5039
    %5108 = vmatpush.bf16.msra.mxu0 %v5035
    %5109 = vmatpush.bf16.msra.mxu0 %v5031
    %5110 = vmatpush.bf16.msra.mxu0 %v5027
    %5111 = vmatmul.bf16.gmra.mxu0 %v4653
    %v5112 = vpop.f32.mrf.mxu0
    %v5113 = vadd.f32 %v4901, %v5112
    %v5114 = vpop.f32.mrf.mxu0
    %5115 = vdwg.mxu0
    %5116 = vmatpush.bf16.msra.mxu0 %v5056
    %5117 = vmatpush.bf16.msra.mxu0 %v5052
    %5118 = vmatpush.bf16.msra.mxu0 %v5048
    %5119 = vmatpush.bf16.msra.mxu0 %v5044
    %5120 = vmatpush.bf16.msra.mxu0 %v5040
    %5121 = vmatpush.bf16.msra.mxu0 %v5036
    %5122 = vmatpush.bf16.msra.mxu0 %v5032
    %5123 = vmatpush.bf16.msra.mxu0 %v5028
    %5124 = vmatmul.bf16.gmra.mxu0 %v4653
    %v5125 = vpop.f32.mrf.mxu0
    %v5126 = vadd.f32 %v4914, %v5125
    %v5127 = vpop.f32.mrf.mxu0
    %5128 = vdwg.mxu0
    %5129 = vmatpush.bf16.msra.mxu0 %v5057
    %5130 = vmatpush.bf16.msra.mxu0 %v5053
    %5131 = vmatpush.bf16.msra.mxu0 %v5049
    %5132 = vmatpush.bf16.msra.mxu0 %v5045
    %5133 = vmatpush.bf16.msra.mxu0 %v5041
    %5134 = vmatpush.bf16.msra.mxu0 %v5037
    %5135 = vmatpush.bf16.msra.mxu0 %v5033
    %5136 = vmatpush.bf16.msra.mxu0 %v5029
    %5137 = vmatmul.bf16.gmra.mxu0 %v4653
    %v5138 = vpop.f32.mrf.mxu0
    %v5139 = vadd.f32 %v4927, %v5138
    %v5140 = vpop.f32.mrf.mxu0
    %5141 = vdwg.mxu0
    %v5142 = vadd.f32 %v5100, %v67
    %v5143 = vadd.f32 %v5113, %v68
    %v5144 = vadd.f32 %v5126, %v69
    %v5145 = vadd.f32 %v5139, %v70
    %v5146 = vxor.u32 %v5142, 2147483648
    %v5147 = vmul.f32 %v5146, 1.442695
    %v5148 = vpow.pop %v5147
    %v5149 = vadd.f32 %v5148, 1.0
    %v5150 = vrcp.pop %v5149
    %v5151 = vmul.f32 %v5149, %v5150
    %v5152 = vsub.f32 1.0, %v5151
    %v5153 = vmul.f32 %v5150, %v5152
    %v5154 = vadd.f32 %v5150, %v5153
    %vm5155 = vweird.f32 %v5149
    %vm5156 = vweird.f32 %v5150
    %vm5157 = vmor %vm5155, %vm5156
    %v5158 = vsel %vm5157, %v5150, %v5154
    %v5159 = vand.u32 2147483647, %v5149
    %vm5160 = vcmp.eq.f32.partialorder %v5159, 8.507059e+37
    %v5161 = vand.u32 %v5149, 2147483648
    %v5162 = vor.u32 1.1754944e-38, %v5161
    %v5163 = vsel %vm5160, %v5162, %v5158
    %v5164 = vmul.f32 1.0, %v5163
    %v5165 = vxor.u32 %v5143, 2147483648
    %v5166 = vmul.f32 %v5165, 1.442695
    %v5167 = vpow.pop %v5166
    %v5168 = vadd.f32 %v5167, 1.0
    %v5169 = vrcp.pop %v5168
    %v5170 = vmul.f32 %v5168, %v5169
    %v5171 = vsub.f32 1.0, %v5170
    %v5172 = vmul.f32 %v5169, %v5171
    %v5173 = vadd.f32 %v5169, %v5172
    %vm5174 = vweird.f32 %v5168
    %vm5175 = vweird.f32 %v5169
    %vm5176 = vmor %vm5174, %vm5175
    %v5177 = vsel %vm5176, %v5169, %v5173
    %v5178 = vand.u32 2147483647, %v5168
    %vm5179 = vcmp.eq.f32.partialorder %v5178, 8.507059e+37
    %v5180 = vand.u32 %v5168, 2147483648
    %v5181 = vor.u32 1.1754944e-38, %v5180
    %v5182 = vsel %vm5179, %v5181, %v5177
    %v5183 = vmul.f32 1.0, %v5182
    %v5184 = vtanh.pop %v5144
    %v5185 = vxor.u32 %v5145, 2147483648
    %v5186 = vmul.f32 %v5185, 1.442695
    %v5187 = vpow.pop %v5186
    %v5188 = vadd.f32 %v5187, 1.0
    %v5189 = vrcp.pop %v5188
    %v5190 = vmul.f32 %v5188, %v5189
    %v5191 = vsub.f32 1.0, %v5190
    %v5192 = vmul.f32 %v5189, %v5191
    %v5193 = vadd.f32 %v5189, %v5192
    %vm5194 = vweird.f32 %v5188
    %vm5195 = vweird.f32 %v5189
    %vm5196 = vmor %vm5194, %vm5195
    %v5197 = vsel %vm5196, %v5189, %v5193
    %v5198 = vand.u32 2147483647, %v5188
    %vm5199 = vcmp.eq.f32.partialorder %v5198, 8.507059e+37
    %v5200 = vand.u32 %v5188, 2147483648
    %v5201 = vor.u32 1.1754944e-38, %v5200
    %v5202 = vsel %vm5199, %v5201, %v5197
    %v5203 = vmul.f32 1.0, %v5202
    %v5204 = vmul.f32 %v5183, %v4459
    %v5205 = vmul.f32 %v5164, %v5184
    %v5206 = vadd.f32 %v5204, %v5205
    %v5207 = vtanh.pop %v5206
    %v5208 = vmul.f32 %v5203, %v5207
    %v5209 = vpack.c.bf16 %v5208, %v5208
    %v5210 = vld [vmem:[%s8] sm:$0xf]
    %v5211 = vld [vmem:[%s8 + $0x4] sm:$0xf]
    %v5212 = vld [vmem:[%s8 + $0x8] sm:$0xf]
    %v5213 = vld [vmem:[%s8 + $0xc] sm:$0xf]
    %v5214 = vld [vmem:[%s8 + $0x10] sm:$0xf]
    %v5215 = vld [vmem:[%s8 + $0x14] sm:$0xf]
    %v5216 = vld [vmem:[%s8 + $0x18] sm:$0xf]
    %v5217 = vld [vmem:[%s8 + $0x1c] sm:$0xf]
    %v5218 = vld [vmem:[%s8 + $0x20] sm:$0xf]
    %v5219 = vld [vmem:[%s8 + $0x24] sm:$0xf]
    %v5220 = vld [vmem:[%s8 + $0x28] sm:$0xf]
    %v5221 = vld [vmem:[%s8 + $0x2c] sm:$0xf]
    %v5222 = vld [vmem:[%s8 + $0x30] sm:$0xf]
    %v5223 = vld [vmem:[%s8 + $0x34] sm:$0xf]
    %v5224 = vld [vmem:[%s8 + $0x38] sm:$0xf]
    %v5225 = vld [vmem:[%s8 + $0x3c] sm:$0xf]
    %v5242 = vunpack.c.l.b16 %v5210
    %v5243 = vunpack.c.l.b16 %v5211
    %v5244 = vunpack.c.l.b16 %v5212
    %v5245 = vunpack.c.l.b16 %v5213
    %v5246 = vunpack.c.l.b16 %v5214
    %v5247 = vunpack.c.l.b16 %v5215
    %v5248 = vunpack.c.l.b16 %v5216
    %v5249 = vunpack.c.l.b16 %v5217
    %v5250 = vunpack.c.l.b16 %v5218
    %v5251 = vunpack.c.l.b16 %v5219
    %v5252 = vunpack.c.l.b16 %v5220
    %v5253 = vunpack.c.l.b16 %v5221
    %v5254 = vunpack.c.l.b16 %v5222
    %v5255 = vunpack.c.l.b16 %v5223
    %v5256 = vunpack.c.l.b16 %v5224
    %v5257 = vunpack.c.l.b16 %v5225
    %v5258 = vpack.c.b16 %v5243, %v5242
    %v5259 = vpack.c.b16 %v5245, %v5244
    %v5260 = vpack.c.b16 %v5247, %v5246
    %v5261 = vpack.c.b16 %v5249, %v5248
    %v5262 = vpack.c.b16 %v5251, %v5250
    %v5263 = vpack.c.b16 %v5253, %v5252
    %v5264 = vpack.c.b16 %v5255, %v5254
    %v5265 = vpack.c.b16 %v5257, %v5256
    %5274 = vmatpush.bf16.msra.mxu0 %v5265
    %5275 = vmatpush.bf16.msra.mxu0 %v5264
    %5276 = vmatpush.bf16.msra.mxu0 %v5263
    %5277 = vmatpush.bf16.msra.mxu0 %v5262
    %5278 = vmatpush.bf16.msra.mxu0 %v5261
    %5279 = vmatpush.bf16.msra.mxu0 %v5260
    %5280 = vmatpush.bf16.msra.mxu0 %v5259
    %5281 = vmatpush.bf16.msra.mxu0 %v5258
    %5282 = vmatmul.bf16.gmra.mxu0 %v5209
    %v5283 = vpop.f32.mrf.mxu0
    %v5284 = vadd.f32 %v77, %v5283
    %v5285 = vpop.f32.mrf.mxu0
    %5286 = vdwg.mxu0
    %s5287 = scalar_lea.vmem %s10, 48
    %5288 = vst [vmem:[%s5287] sm:$0xff] %v5284
    // Predicated region
    $region106: #{forward.3} parent=1 // pred_check
      _
    $region107: #{forward.3} parent=1 // pred_check_branch
      %5290 = sbr.rel (0) target = $region109
    $region108: #{forward.3} parent=1 // pred_region
      _
    $region109: #{forward.3} parent=1 // pred_fallthru
      _
    // Predicated region
    $region110: #{forward.3} parent=1 // pred_check
      _
    $region111: #{forward.3} parent=1 // pred_check_branch
      %5292 = sbr.rel (0) target = $region113
    $region112: #{forward.3} parent=1 // pred_region
      _
    $region113: #{forward.3} parent=1 // pred_fallthru
      _
    %5293 = vsyncpa [#allocation3], 1
    %5294 = vsyncpa [#allocation4], 1

</llo_original>
